<compile_context>
chip_gen: v7x
topology: tpu7x:2x2x1
jax: 0.10.0
libtpu: 0.0.40
codegen_flags: <defaults>
</compile_context>

<pallas_src>
import jax
import jax.numpy as jnp
from jax.experimental import pallas as pl
from jax.experimental.pallas import tpu as pltpu

IN_DIM = 1024
HID_DIM = 1024
OUT_DIM = 1024


def mlp_kernel(x_ref, w1_ref, b1_ref, w2_ref, b2_ref, o_ref):
    # ---- layer 1: bf16 MXU matmul, fp32 accumulate; elementwise kept in fp32 ----
    x = x_ref[...].astype(jnp.bfloat16)                  # cast only at the dot boundary
    h = jnp.dot(x, w1_ref[...], preferred_element_type=jnp.float32)
    h = h + b1_ref[...]                                  # (1, HID_DIM) broadcasts over rows
    h = jnp.maximum(h, 0.0)
    h = h * h                                            # relu(.) ** 2 in fp32
    # ---- layer 2 ----
    y = jnp.dot(h.astype(jnp.bfloat16), w2_ref[...],
                preferred_element_type=jnp.float32)
    y = y + b2_ref[...]
    y = jnp.maximum(y, 0.0)
    o_ref[...] = (y * y).astype(o_ref.dtype)
    # TODO(synk): if a v6e bundle dump shows ld/st-slot saturation at bm=256, K-tile the
    # second dot over HID_DIM in 256-chunks.


def prepare_params(w1_pt, b1, w2_pt, b2):
    """One-time conversion from PyTorch layout (out, in) fp32 to kernel layout.

    Call at parameter-init time so no transpose/cast happens per forward call.
    """
    w1 = jnp.asarray(w1_pt.T, dtype=jnp.bfloat16)        # (IN_DIM, HID_DIM)
    w2 = jnp.asarray(w2_pt.T, dtype=jnp.bfloat16)        # (HID_DIM, OUT_DIM)
    b1_2d = jnp.asarray(b1, dtype=jnp.float32).reshape(1, HID_DIM)
    b2_2d = jnp.asarray(b2, dtype=jnp.float32).reshape(1, OUT_DIM)
    return w1, b1_2d, w2, b2_2d


def mlp_forward(x, w1, b1_2d, w2, b2_2d, *, bm=256):
    """x: (B, 1024) fp32. w1/w2: (in, out) bf16. b*_2d: (1, out) fp32.

    bm: row tile. 256 fills the v6e/v7x 256x256 MXU; use 128 on v5e. On v7x, keep
    B large enough that B // bm >= 2 so both TensorCores are engaged.
    """
    B, K = x.shape
    assert K == IN_DIM
    bm = min(bm, B)                       # small batch: tile == full batch (no padding)
    pad = (-B) % bm
    if pad:
        x = jnp.pad(x, ((0, pad), (0, 0)))
    Bp = B + pad
    grid = (Bp // bm,)

    resident = dict(pipeline_mode=pl.Buffered(1))        # constant index -> single buffer

    out = pl.pallas_call(
        mlp_kernel,
        out_shape=jax.ShapeDtypeStruct((Bp, OUT_DIM), jnp.float32),
        grid_spec=pltpu.PrefetchScalarGridSpec(
            num_scalar_prefetch=0,
            grid=grid,
            in_specs=[
                pl.BlockSpec((bm, IN_DIM), lambda i: (i, 0)),                    # x tile
                pl.BlockSpec((IN_DIM, HID_DIM), lambda i: (0, 0), **resident),   # W1
                pl.BlockSpec((1, HID_DIM), lambda i: (0, 0), **resident),        # b1
                pl.BlockSpec((HID_DIM, OUT_DIM), lambda i: (0, 0), **resident),  # W2
                pl.BlockSpec((1, OUT_DIM), lambda i: (0, 0), **resident),        # b2
            ],
            out_specs=pl.BlockSpec((bm, OUT_DIM), lambda i: (i, 0)),
        ),
        compiler_params=pltpu.CompilerParams(
            dimension_semantics=("parallel",),
            vmem_limit_bytes=32 * 1024 * 1024,
        ),
    )(x, w1, b1_2d, w2, b2_2d)

    return out[:B] if pad else out


def reference_forward(x, w1_pt, b1, w2_pt, b2):
    h = x @ w1_pt.T + b1
    h = jnp.maximum(h, 0.0) ** 2
    y = h @ w2_pt.T + b2
    return jnp.maximum(y, 0.0) ** 2


if __name__ == "__main__":
    key = jax.random.PRNGKey(0)
    kx, kw1, kb1, kw2, kb2 = jax.random.split(key, 5)

    B = 8  # small batch; feature dims fixed at 1024 by the module definition
    x = jax.random.normal(kx, (B, IN_DIM), dtype=jnp.float32)

    # PyTorch nn.Linear shapes: weight (out, in), bias (out,)
    scale = 1.0 / jnp.sqrt(jnp.float32(IN_DIM))
    w1_pt = jax.random.uniform(kw1, (HID_DIM, IN_DIM), minval=-scale, maxval=scale, dtype=jnp.float32)
    b1 = jax.random.uniform(kb1, (HID_DIM,), minval=-scale, maxval=scale, dtype=jnp.float32)
    w2_pt = jax.random.uniform(kw2, (OUT_DIM, HID_DIM), minval=-scale, maxval=scale, dtype=jnp.float32)
    b2 = jax.random.uniform(kb2, (OUT_DIM,), minval=-scale, maxval=scale, dtype=jnp.float32)

    # One-time layout/dtype prep (fold the transpose + bf16 cast at init time).
    w1, b1_2d, w2, b2_2d = prepare_params(w1_pt, b1, w2_pt, b2)

    out = mlp_forward(x, w1, b1_2d, w2, b2_2d)
    out = jax.block_until_ready(out)

    ref = reference_forward(x, w1_pt, b1, w2_pt, b2)  # fp32 reference
    assert out.shape == (B, OUT_DIM)
    # bf16 matmul inputs with fp32 accumulation -> loosened tolerance vs fp32 reference.
    assert jnp.allclose(out, ref, atol=1e-2, rtol=5e-2), "mismatch vs reference"

    print("KERNEL_OK")
</pallas_src>

<mosaic_0001>
module attributes {stable_mosaic.version = 11 : i64} {
  func.func @mlp_kernel(%arg0: i32, %arg1: memref<8x1024xf32, #tpu.memory_space<vmem>>, %arg2: memref<1024x1024xbf16, #tpu.memory_space<vmem>>, %arg3: memref<1x1024xf32, #tpu.memory_space<vmem>>, %arg4: memref<1024x1024xbf16, #tpu.memory_space<vmem>>, %arg5: memref<1x1024xf32, #tpu.memory_space<vmem>>, %arg6: memref<8x1024xf32, #tpu.memory_space<vmem>>) attributes {dimension_semantics = [#tpu.dimension_semantics<parallel>], iteration_bounds = array<i64: 1>, scalar_prefetch = 0 : i64, scratch_operands = 0 : i64, tpu.core_type = #tpu.core_type<tc>, window_params = [{transform_indices = @transform_0, window_bounds = array<i64: 8, 1024>}, {pipeline_mode = #tpu.pipeline_mode<synchronous>, transform_indices = @transform_1, window_bounds = array<i64: 1024, 1024>}, {pipeline_mode = #tpu.pipeline_mode<synchronous>, transform_indices = @transform_2, window_bounds = array<i64: 1, 1024>}, {pipeline_mode = #tpu.pipeline_mode<synchronous>, transform_indices = @transform_3, window_bounds = array<i64: 1024, 1024>}, {pipeline_mode = #tpu.pipeline_mode<synchronous>, transform_indices = @transform_4, window_bounds = array<i64: 1, 1024>}, {transform_indices = @transform_5, window_bounds = array<i64: 8, 1024>}]} {
    %c0 = arith.constant 0 : index
    %c0_0 = arith.constant 0 : index
    %0 = vector.load %arg1[%c0, %c0_0] : memref<8x1024xf32, #tpu.memory_space<vmem>>, vector<8x1024xf32>
    %1 = arith.truncf %0 : vector<8x1024xf32> to vector<8x1024xbf16>
    %c0_1 = arith.constant 0 : index
    %c0_2 = arith.constant 0 : index
    %2 = vector.load %arg2[%c0_1, %c0_2] : memref<1024x1024xbf16, #tpu.memory_space<vmem>>, vector<1024x1024xbf16>
    %cst = arith.constant dense<0.000000e+00> : vector<8x1024xf32>
    %3 = tpu.matmul %1, %2, %cst {dimension_numbers = #tpu.dot_dimension_numbers<[1], [0], [0], [1], [0, 0, 1, 1], [], []>} : vector<8x1024xbf16>, vector<1024x1024xbf16>, vector<8x1024xf32> -> vector<8x1024xf32>
    %c0_3 = arith.constant 0 : index
    %c0_4 = arith.constant 0 : index
    %4 = vector.load %arg3[%c0_3, %c0_4] : memref<1x1024xf32, #tpu.memory_space<vmem>>, vector<1x1024xf32>
    %5 = vector.broadcast %4 : vector<1x1024xf32> to vector<8x1024xf32>
    %6 = arith.addf %3, %5 : vector<8x1024xf32>
    %cst_5 = arith.constant 0.000000e+00 : f32
    %7 = vector.broadcast %cst_5 : f32 to vector<8x1024xf32>
    %8 = arith.maximumf %6, %7 : vector<8x1024xf32>
    %9 = arith.mulf %8, %8 : vector<8x1024xf32>
    %10 = arith.truncf %9 : vector<8x1024xf32> to vector<8x1024xbf16>
    %c0_6 = arith.constant 0 : index
    %c0_7 = arith.constant 0 : index
    %11 = vector.load %arg4[%c0_6, %c0_7] : memref<1024x1024xbf16, #tpu.memory_space<vmem>>, vector<1024x1024xbf16>
    %cst_8 = arith.constant dense<0.000000e+00> : vector<8x1024xf32>
    %12 = tpu.matmul %10, %11, %cst_8 {dimension_numbers = #tpu.dot_dimension_numbers<[1], [0], [0], [1], [0, 0, 1, 1], [], []>} : vector<8x1024xbf16>, vector<1024x1024xbf16>, vector<8x1024xf32> -> vector<8x1024xf32>
    %c0_9 = arith.constant 0 : index
    %c0_10 = arith.constant 0 : index
    %13 = vector.load %arg5[%c0_9, %c0_10] : memref<1x1024xf32, #tpu.memory_space<vmem>>, vector<1x1024xf32>
    %14 = vector.broadcast %13 : vector<1x1024xf32> to vector<8x1024xf32>
    %15 = arith.addf %12, %14 : vector<8x1024xf32>
    %cst_11 = arith.constant 0.000000e+00 : f32
    %16 = vector.broadcast %cst_11 : f32 to vector<8x1024xf32>
    %17 = arith.maximumf %15, %16 : vector<8x1024xf32>
    %18 = arith.mulf %17, %17 : vector<8x1024xf32>
    %c0_12 = arith.constant 0 : index
    %c0_13 = arith.constant 0 : index
    %19 = vector.load %arg6[%c0_12, %c0_13] : memref<8x1024xf32, #tpu.memory_space<vmem>>, vector<8x1024xf32>
    tpu.vector_store %arg6[%c0_12, %c0_13], %18 {strides = array<i32>} : memref<8x1024xf32, #tpu.memory_space<vmem>>, vector<8x1024xf32>,
    return
  }
  func.func @transform_0(%arg0: i32) -> (i32, i32) {
    %c0_i32 = arith.constant 0 : i32
    %c0_i32_0 = arith.constant 0 : i32
    return %arg0, %c0_i32 : i32, i32
  }
  func.func @transform_1(%arg0: i32) -> (i32, i32) {
    %c0_i32 = arith.constant 0 : i32
    %c0_i32_0 = arith.constant 0 : i32
    %c0_i32_1 = arith.constant 0 : i32
    return %c0_i32, %c0_i32_0 : i32, i32
  }
  func.func @transform_2(%arg0: i32) -> (i32, i32) {
    %c0_i32 = arith.constant 0 : i32
    %c0_i32_0 = arith.constant 0 : i32
    %c0_i32_1 = arith.constant 0 : i32
    return %c0_i32, %c0_i32_0 : i32, i32
  }
  func.func @transform_3(%arg0: i32) -> (i32, i32) {
    %c0_i32 = arith.constant 0 : i32
    %c0_i32_0 = arith.constant 0 : i32
    %c0_i32_1 = arith.constant 0 : i32
    return %c0_i32, %c0_i32_0 : i32, i32
  }
  func.func @transform_4(%arg0: i32) -> (i32, i32) {
    %c0_i32 = arith.constant 0 : i32
    %c0_i32_0 = arith.constant 0 : i32
    %c0_i32_1 = arith.constant 0 : i32
    return %c0_i32, %c0_i32_0 : i32, i32
  }
  func.func @transform_5(%arg0: i32) -> (i32, i32) {
    %c0_i32 = arith.constant 0 : i32
    %c0_i32_0 = arith.constant 0 : i32
    return %arg0, %c0_i32 : i32, i32
  }
}

</mosaic_0001>

<llo_original>
// kernel: tpu_custom_call.1
$region0: #{tpu_custom_call.1}
  #allocation0 [shape = 'u32[]', space=smem, size = 0x4, offset = 0x4, fixed_abs, tag = 'smem constant byte address 0x4 - core index']
  #allocation1 [shape = 'u32[144,128]{1,0:T(1,128)}', space=vmem, size = 0x12000, scoped, tag = 'internal scratch']
  %s0 = inlined_call_operand.hbm [shape: f32[8,1024], index: 0, kind: input, shape index: {}]
  %s1 = inlined_call_operand.hbm [shape: bf16[1024,1024], index: 1, kind: input, shape index: {}]
  %s2 = inlined_call_operand.hbm [shape: f32[1,1024], index: 2, kind: input, shape index: {}]
  %s3 = inlined_call_operand.hbm [shape: bf16[1024,1024], index: 3, kind: input, shape index: {}]
  %s4 = inlined_call_operand.hbm [shape: f32[1,1024], index: 4, kind: input, shape index: {}]
  %s5 = inlined_call_operand.hbm [shape: f32[8,1024], index: 5, kind: output, shape index: {}]
  %s6 = sld [smem:[#allocation0]]
  $region50: #{tpu_custom_call.1} parent=0
    _
  %s8 = ssub.s32 1, %s6
  %s9 = scalar_select 0, %s8, %s6
  $region1: #{tpu_custom_call.1} parent=0
    #allocation2 [shape = 'u8[32768]{0}', space=vmem, size = 0x8000, scoped, tag = 'input window, operand 0, single buffered']
    #allocation3 [shape = 's32[1]{0}', space=sflag, size = 0x4, scoped, tag = 'scoped memory for tpu_custom_call.1']
    #allocation4 [shape = 's32[1]{0}', space=sflag, size = 0x4, scoped, tag = 'scoped memory for tpu_custom_call.1']
    #allocation5 [shape = 'u8[2097152]{0}', space=vmem, size = 0x200000, scoped, tag = 'input window, operand 1, single buffered']
    #allocation6 [shape = 's32[1]{0}', space=sflag, size = 0x4, scoped, tag = 'scoped memory for tpu_custom_call.1']
    #allocation7 [shape = 'u8[4096]{0}', space=vmem, size = 0x1000, scoped, tag = 'input window, operand 2, single buffered']
    #allocation8 [shape = 'u8[2097152]{0}', space=vmem, size = 0x200000, scoped, tag = 'input window, operand 3, single buffered']
    #allocation9 [shape = 's32[1]{0}', space=sflag, size = 0x4, scoped, tag = 'scoped memory for tpu_custom_call.1']
    #allocation10 [shape = 'u8[4096]{0}', space=vmem, size = 0x1000, scoped, tag = 'input window, operand 4, single buffered']
    #allocation11 [shape = 'u8[32768]{0}', space=vmem, size = 0x8000, scoped, tag = 'output window, operand 0, single buffered']
    %10 = vsyncpa [#allocation3], 0
    %11 = vsyncpa [#allocation6], 0
    %12 = vsyncpa [#allocation9], 0
    %13 = vsyncpa [#allocation4], 0
    // Predicated region
    $region2: #{tpu_custom_call.1} parent=1 // pred_check
      _
    $region3: #{tpu_custom_call.1} parent=1 // pred_check_branch
      %15 = sbr.rel (0) target = $region5
    $region4: #{tpu_custom_call.1} parent=1 // pred_region
      %s17 = ssub.s32 1024, 1024
      %18 = vsyncadd [#allocation3], %s17
      %s20 = sshll.u32 [#allocation2], 4
      %s21 = int_to_ptr.vmem [resolvable:$true] %s20
      %23 = dma.hbm_to_vmem [thread:$0]  %s0, 1024, %s21, [#allocation3]
    $region5: #{tpu_custom_call.1} parent=1 // pred_fallthru
      _
    // Predicated region
    $region6: #{tpu_custom_call.1} parent=1 // pred_check
      _
    $region7: #{tpu_custom_call.1} parent=1 // pred_check_branch
      %25 = sbr.rel (0) target = $region9
    $region8: #{tpu_custom_call.1} parent=1 // pred_region
      %s27 = ssub.s32 65536, 65536
      %28 = vsyncadd [#allocation6], %s27
      %s29 = sshll.u32 [#allocation5], 4
      %s30 = int_to_ptr.vmem [resolvable:$true] %s29
      %35 = dma.hbm_to_vmem [thread:$0]  %s1, 65536, %s30, [#allocation6], 512, 512, 32
    $region9: #{tpu_custom_call.1} parent=1 // pred_fallthru
      _
    // Predicated region
    $region10: #{tpu_custom_call.1} parent=1 // pred_check
      _
    $region11: #{tpu_custom_call.1} parent=1 // pred_check_branch
      %37 = sbr.rel (0) target = $region13
    $region12: #{tpu_custom_call.1} parent=1 // pred_region
      %s39 = ssub.s32 128, 128
      %40 = vsyncadd [#allocation6], %s39
      %s42 = sshll.u32 [#allocation7], 4
      %s43 = int_to_ptr.vmem [resolvable:$true] %s42
      %45 = dma.hbm_to_vmem [thread:$0]  %s2, 128, %s43, [#allocation6]
    $region13: #{tpu_custom_call.1} parent=1 // pred_fallthru
      _
    // Predicated region
    $region14: #{tpu_custom_call.1} parent=1 // pred_check
      _
    $region15: #{tpu_custom_call.1} parent=1 // pred_check_branch
      %47 = sbr.rel (0) target = $region17
    $region16: #{tpu_custom_call.1} parent=1 // pred_region
      %s49 = ssub.s32 65536, 65536
      %50 = vsyncadd [#allocation9], %s49
      %s51 = sshll.u32 [#allocation8], 4
      %s52 = int_to_ptr.vmem [resolvable:$true] %s51
      %57 = dma.hbm_to_vmem [thread:$0]  %s3, 65536, %s52, [#allocation9], 512, 512, 32
    $region17: #{tpu_custom_call.1} parent=1 // pred_fallthru
      _
    // Predicated region
    $region18: #{tpu_custom_call.1} parent=1 // pred_check
      _
    $region19: #{tpu_custom_call.1} parent=1 // pred_check_branch
      %59 = sbr.rel (0) target = $region21
    $region20: #{tpu_custom_call.1} parent=1 // pred_region
      %s61 = ssub.s32 128, 128
      %62 = vsyncadd [#allocation9], %s61
      %s64 = sshll.u32 [#allocation10], 4
      %s65 = int_to_ptr.vmem [resolvable:$true] %s64
      %67 = dma.hbm_to_vmem [thread:$0]  %s4, 128, %s65, [#allocation9]
    $region21: #{tpu_custom_call.1} parent=1 // pred_fallthru
      _
    // Predicated region
    $region22: #{tpu_custom_call.1} parent=1 // pred_check
      _
    $region23: #{tpu_custom_call.1} parent=1 // pred_check_branch
      %69 = sbr.rel (0) target = $region25
    $region24: #{tpu_custom_call.1} parent=1 // pred_region
      %70 = dma.done [#allocation3], 1024
    $region25: #{tpu_custom_call.1} parent=1 // pred_fallthru
      _
    // Predicated region
    $region26: #{tpu_custom_call.1} parent=1 // pred_check
      _
    $region27: #{tpu_custom_call.1} parent=1 // pred_check_branch
      %72 = sbr.rel (0) target = $region29
    $region28: #{tpu_custom_call.1} parent=1 // pred_region
      %73 = dma.done [#allocation6], 65536
    $region29: #{tpu_custom_call.1} parent=1 // pred_fallthru
      _
    // Predicated region
    $region30: #{tpu_custom_call.1} parent=1 // pred_check
      _
    $region31: #{tpu_custom_call.1} parent=1 // pred_check_branch
      %75 = sbr.rel (0) target = $region33
    $region32: #{tpu_custom_call.1} parent=1 // pred_region
      %76 = dma.done [#allocation6], 128
    $region33: #{tpu_custom_call.1} parent=1 // pred_fallthru
      _
    // Predicated region
    $region34: #{tpu_custom_call.1} parent=1 // pred_check
      _
    $region35: #{tpu_custom_call.1} parent=1 // pred_check_branch
      %78 = sbr.rel (0) target = $region37
    $region36: #{tpu_custom_call.1} parent=1 // pred_region
      %79 = dma.done [#allocation9], 65536
    $region37: #{tpu_custom_call.1} parent=1 // pred_fallthru
      _
    // Predicated region
    $region38: #{tpu_custom_call.1} parent=1 // pred_check
      _
    $region39: #{tpu_custom_call.1} parent=1 // pred_check_branch
      %81 = sbr.rel (0) target = $region41
    $region40: #{tpu_custom_call.1} parent=1 // pred_region
      %82 = dma.done [#allocation9], 128
    $region41: #{tpu_custom_call.1} parent=1 // pred_fallthru
      _
    %v83 = vld [vmem:[#allocation2] sm:$0xff]
    %v84 = vld [vmem:[#allocation2 + $0x8] sm:$0xff]
    %v85 = vld [vmem:[#allocation2 + $0x10] sm:$0xff]
    %v86 = vld [vmem:[#allocation2 + $0x18] sm:$0xff]
    %v87 = vld [vmem:[#allocation2 + $0x20] sm:$0xff]
    %v88 = vld [vmem:[#allocation2 + $0x28] sm:$0xff]
    %v89 = vld [vmem:[#allocation2 + $0x30] sm:$0xff]
    %v90 = vld [vmem:[#allocation2 + $0x38] sm:$0xff]
    %v91 = vpack.c.bf16 %v83, %v83
    %v92 = vpack.c.bf16 %v84, %v84
    %v93 = vpack.c.bf16 %v85, %v85
    %v94 = vpack.c.bf16 %v86, %v86
    %v95 = vpack.c.bf16 %v87, %v87
    %v96 = vpack.c.bf16 %v88, %v88
    %v97 = vpack.c.bf16 %v89, %v89
    %v98 = vpack.c.bf16 %v90, %v90
    %v99 = vld [vmem:[#allocation5] sm:$0xff]
    %v100 = vld [vmem:[#allocation5 + $0x8] sm:$0xff]
    %v101 = vld [vmem:[#allocation5 + $0x10] sm:$0xff]
    %v102 = vld [vmem:[#allocation5 + $0x18] sm:$0xff]
    %v103 = vld [vmem:[#allocation5 + $0x20] sm:$0xff]
    %v104 = vld [vmem:[#allocation5 + $0x28] sm:$0xff]
    %v105 = vld [vmem:[#allocation5 + $0x30] sm:$0xff]
    %v106 = vld [vmem:[#allocation5 + $0x38] sm:$0xff]
    %v107 = vld [vmem:[#allocation5 + $0x40] sm:$0xff]
    %v108 = vld [vmem:[#allocation5 + $0x48] sm:$0xff]
    %v109 = vld [vmem:[#allocation5 + $0x50] sm:$0xff]
    %v110 = vld [vmem:[#allocation5 + $0x58] sm:$0xff]
    %v111 = vld [vmem:[#allocation5 + $0x60] sm:$0xff]
    %v112 = vld [vmem:[#allocation5 + $0x68] sm:$0xff]
    %v113 = vld [vmem:[#allocation5 + $0x70] sm:$0xff]
    %v114 = vld [vmem:[#allocation5 + $0x78] sm:$0xff]
    %v115 = vld [vmem:[#allocation5 + $0x80] sm:$0xff]
    %v116 = vld [vmem:[#allocation5 + $0x88] sm:$0xff]
    %v117 = vld [vmem:[#allocation5 + $0x90] sm:$0xff]
    %v118 = vld [vmem:[#allocation5 + $0x98] sm:$0xff]
    %v119 = vld [vmem:[#allocation5 + $0xa0] sm:$0xff]
    %v120 = vld [vmem:[#allocation5 + $0xa8] sm:$0xff]
    %v121 = vld [vmem:[#allocation5 + $0xb0] sm:$0xff]
    %v122 = vld [vmem:[#allocation5 + $0xb8] sm:$0xff]
    %v123 = vld [vmem:[#allocation5 + $0xc0] sm:$0xff]
    %v124 = vld [vmem:[#allocation5 + $0xc8] sm:$0xff]
    %v125 = vld [vmem:[#allocation5 + $0xd0] sm:$0xff]
    %v126 = vld [vmem:[#allocation5 + $0xd8] sm:$0xff]
    %v127 = vld [vmem:[#allocation5 + $0xe0] sm:$0xff]
    %v128 = vld [vmem:[#allocation5 + $0xe8] sm:$0xff]
    %v129 = vld [vmem:[#allocation5 + $0xf0] sm:$0xff]
    %v130 = vld [vmem:[#allocation5 + $0xf8] sm:$0xff]
    %v131 = vld [vmem:[#allocation5 + $0x100] sm:$0xff]
    %v132 = vld [vmem:[#allocation5 + $0x108] sm:$0xff]
    %v133 = vld [vmem:[#allocation5 + $0x110] sm:$0xff]
    %v134 = vld [vmem:[#allocation5 + $0x118] sm:$0xff]
    %v135 = vld [vmem:[#allocation5 + $0x120] sm:$0xff]
    %v136 = vld [vmem:[#allocation5 + $0x128] sm:$0xff]
    %v137 = vld [vmem:[#allocation5 + $0x130] sm:$0xff]
    %v138 = vld [vmem:[#allocation5 + $0x138] sm:$0xff]
    %v139 = vld [vmem:[#allocation5 + $0x140] sm:$0xff]
    %v140 = vld [vmem:[#allocation5 + $0x148] sm:$0xff]
    %v141 = vld [vmem:[#allocation5 + $0x150] sm:$0xff]
    %v142 = vld [vmem:[#allocation5 + $0x158] sm:$0xff]
    %v143 = vld [vmem:[#allocation5 + $0x160] sm:$0xff]
    %v144 = vld [vmem:[#allocation5 + $0x168] sm:$0xff]
    %v145 = vld [vmem:[#allocation5 + $0x170] sm:$0xff]
    %v146 = vld [vmem:[#allocation5 + $0x178] sm:$0xff]
    %v147 = vld [vmem:[#allocation5 + $0x180] sm:$0xff]
    %v148 = vld [vmem:[#allocation5 + $0x188] sm:$0xff]
    %v149 = vld [vmem:[#allocation5 + $0x190] sm:$0xff]
    %v150 = vld [vmem:[#allocation5 + $0x198] sm:$0xff]
    %v151 = vld [vmem:[#allocation5 + $0x1a0] sm:$0xff]
    %v152 = vld [vmem:[#allocation5 + $0x1a8] sm:$0xff]
    %v153 = vld [vmem:[#allocation5 + $0x1b0] sm:$0xff]
    %v154 = vld [vmem:[#allocation5 + $0x1b8] sm:$0xff]
    %v155 = vld [vmem:[#allocation5 + $0x1c0] sm:$0xff]
    %v156 = vld [vmem:[#allocation5 + $0x1c8] sm:$0xff]
    %v157 = vld [vmem:[#allocation5 + $0x1d0] sm:$0xff]
    %v158 = vld [vmem:[#allocation5 + $0x1d8] sm:$0xff]
    %v159 = vld [vmem:[#allocation5 + $0x1e0] sm:$0xff]
    %v160 = vld [vmem:[#allocation5 + $0x1e8] sm:$0xff]
    %v161 = vld [vmem:[#allocation5 + $0x1f0] sm:$0xff]
    %v162 = vld [vmem:[#allocation5 + $0x1f8] sm:$0xff]
    %v163 = vld [vmem:[#allocation5 + $0x200] sm:$0xff]
    %v164 = vld [vmem:[#allocation5 + $0x208] sm:$0xff]
    %v165 = vld [vmem:[#allocation5 + $0x210] sm:$0xff]
    %v166 = vld [vmem:[#allocation5 + $0x218] sm:$0xff]
    %v167 = vld [vmem:[#allocation5 + $0x220] sm:$0xff]
    %v168 = vld [vmem:[#allocation5 + $0x228] sm:$0xff]
    %v169 = vld [vmem:[#allocation5 + $0x230] sm:$0xff]
    %v170 = vld [vmem:[#allocation5 + $0x238] sm:$0xff]
    %v171 = vld [vmem:[#allocation5 + $0x240] sm:$0xff]
    %v172 = vld [vmem:[#allocation5 + $0x248] sm:$0xff]
    %v173 = vld [vmem:[#allocation5 + $0x250] sm:$0xff]
    %v174 = vld [vmem:[#allocation5 + $0x258] sm:$0xff]
    %v175 = vld [vmem:[#allocation5 + $0x260] sm:$0xff]
    %v176 = vld [vmem:[#allocation5 + $0x268] sm:$0xff]
    %v177 = vld [vmem:[#allocation5 + $0x270] sm:$0xff]
    %v178 = vld [vmem:[#allocation5 + $0x278] sm:$0xff]
    %v179 = vld [vmem:[#allocation5 + $0x280] sm:$0xff]
    %v180 = vld [vmem:[#allocation5 + $0x288] sm:$0xff]
    %v181 = vld [vmem:[#allocation5 + $0x290] sm:$0xff]
    %v182 = vld [vmem:[#allocation5 + $0x298] sm:$0xff]
    %v183 = vld [vmem:[#allocation5 + $0x2a0] sm:$0xff]
    %v184 = vld [vmem:[#allocation5 + $0x2a8] sm:$0xff]
    %v185 = vld [vmem:[#allocation5 + $0x2b0] sm:$0xff]
    %v186 = vld [vmem:[#allocation5 + $0x2b8] sm:$0xff]
    %v187 = vld [vmem:[#allocation5 + $0x2c0] sm:$0xff]
    %v188 = vld [vmem:[#allocation5 + $0x2c8] sm:$0xff]
    %v189 = vld [vmem:[#allocation5 + $0x2d0] sm:$0xff]
    %v190 = vld [vmem:[#allocation5 + $0x2d8] sm:$0xff]
    %v191 = vld [vmem:[#allocation5 + $0x2e0] sm:$0xff]
    %v192 = vld [vmem:[#allocation5 + $0x2e8] sm:$0xff]
    %v193 = vld [vmem:[#allocation5 + $0x2f0] sm:$0xff]
    %v194 = vld [vmem:[#allocation5 + $0x2f8] sm:$0xff]
    %v195 = vld [vmem:[#allocation5 + $0x300] sm:$0xff]
    %v196 = vld [vmem:[#allocation5 + $0x308] sm:$0xff]
    %v197 = vld [vmem:[#allocation5 + $0x310] sm:$0xff]
    %v198 = vld [vmem:[#allocation5 + $0x318] sm:$0xff]
    %v199 = vld [vmem:[#allocation5 + $0x320] sm:$0xff]
    %v200 = vld [vmem:[#allocation5 + $0x328] sm:$0xff]
    %v201 = vld [vmem:[#allocation5 + $0x330] sm:$0xff]
    %v202 = vld [vmem:[#allocation5 + $0x338] sm:$0xff]
    %v203 = vld [vmem:[#allocation5 + $0x340] sm:$0xff]
    %v204 = vld [vmem:[#allocation5 + $0x348] sm:$0xff]
    %v205 = vld [vmem:[#allocation5 + $0x350] sm:$0xff]
    %v206 = vld [vmem:[#allocation5 + $0x358] sm:$0xff]
    %v207 = vld [vmem:[#allocation5 + $0x360] sm:$0xff]
    %v208 = vld [vmem:[#allocation5 + $0x368] sm:$0xff]
    %v209 = vld [vmem:[#allocation5 + $0x370] sm:$0xff]
    %v210 = vld [vmem:[#allocation5 + $0x378] sm:$0xff]
    %v211 = vld [vmem:[#allocation5 + $0x380] sm:$0xff]
    %v212 = vld [vmem:[#allocation5 + $0x388] sm:$0xff]
    %v213 = vld [vmem:[#allocation5 + $0x390] sm:$0xff]
    %v214 = vld [vmem:[#allocation5 + $0x398] sm:$0xff]
    %v215 = vld [vmem:[#allocation5 + $0x3a0] sm:$0xff]
    %v216 = vld [vmem:[#allocation5 + $0x3a8] sm:$0xff]
    %v217 = vld [vmem:[#allocation5 + $0x3b0] sm:$0xff]
    %v218 = vld [vmem:[#allocation5 + $0x3b8] sm:$0xff]
    %v219 = vld [vmem:[#allocation5 + $0x3c0] sm:$0xff]
    %v220 = vld [vmem:[#allocation5 + $0x3c8] sm:$0xff]
    %v221 = vld [vmem:[#allocation5 + $0x3d0] sm:$0xff]
    %v222 = vld [vmem:[#allocation5 + $0x3d8] sm:$0xff]
    %v223 = vld [vmem:[#allocation5 + $0x3e0] sm:$0xff]
    %v224 = vld [vmem:[#allocation5 + $0x3e8] sm:$0xff]
    %v225 = vld [vmem:[#allocation5 + $0x3f0] sm:$0xff]
    %v226 = vld [vmem:[#allocation5 + $0x3f8] sm:$0xff]
    %v227 = vld [vmem:[#allocation5 + $0x400] sm:$0xff]
    %v228 = vld [vmem:[#allocation5 + $0x408] sm:$0xff]
    %v229 = vld [vmem:[#allocation5 + $0x410] sm:$0xff]
    %v230 = vld [vmem:[#allocation5 + $0x418] sm:$0xff]
    %v231 = vld [vmem:[#allocation5 + $0x420] sm:$0xff]
    %v232 = vld [vmem:[#allocation5 + $0x428] sm:$0xff]
    %v233 = vld [vmem:[#allocation5 + $0x430] sm:$0xff]
    %v234 = vld [vmem:[#allocation5 + $0x438] sm:$0xff]
    %v235 = vld [vmem:[#allocation5 + $0x440] sm:$0xff]
    %v236 = vld [vmem:[#allocation5 + $0x448] sm:$0xff]
    %v237 = vld [vmem:[#allocation5 + $0x450] sm:$0xff]
    %v238 = vld [vmem:[#allocation5 + $0x458] sm:$0xff]
    %v239 = vld [vmem:[#allocation5 + $0x460] sm:$0xff]
    %v240 = vld [vmem:[#allocation5 + $0x468] sm:$0xff]
    %v241 = vld [vmem:[#allocation5 + $0x470] sm:$0xff]
    %v242 = vld [vmem:[#allocation5 + $0x478] sm:$0xff]
    %v243 = vld [vmem:[#allocation5 + $0x480] sm:$0xff]
    %v244 = vld [vmem:[#allocation5 + $0x488] sm:$0xff]
    %v245 = vld [vmem:[#allocation5 + $0x490] sm:$0xff]
    %v246 = vld [vmem:[#allocation5 + $0x498] sm:$0xff]
    %v247 = vld [vmem:[#allocation5 + $0x4a0] sm:$0xff]
    %v248 = vld [vmem:[#allocation5 + $0x4a8] sm:$0xff]
    %v249 = vld [vmem:[#allocation5 + $0x4b0] sm:$0xff]
    %v250 = vld [vmem:[#allocation5 + $0x4b8] sm:$0xff]
    %v251 = vld [vmem:[#allocation5 + $0x4c0] sm:$0xff]
    %v252 = vld [vmem:[#allocation5 + $0x4c8] sm:$0xff]
    %v253 = vld [vmem:[#allocation5 + $0x4d0] sm:$0xff]
    %v254 = vld [vmem:[#allocation5 + $0x4d8] sm:$0xff]
    %v255 = vld [vmem:[#allocation5 + $0x4e0] sm:$0xff]
    %v256 = vld [vmem:[#allocation5 + $0x4e8] sm:$0xff]
    %v257 = vld [vmem:[#allocation5 + $0x4f0] sm:$0xff]
    %v258 = vld [vmem:[#allocation5 + $0x4f8] sm:$0xff]
    %v259 = vld [vmem:[#allocation5 + $0x500] sm:$0xff]
    %v260 = vld [vmem:[#allocation5 + $0x508] sm:$0xff]
    %v261 = vld [vmem:[#allocation5 + $0x510] sm:$0xff]
    %v262 = vld [vmem:[#allocation5 + $0x518] sm:$0xff]
    %v263 = vld [vmem:[#allocation5 + $0x520] sm:$0xff]
    %v264 = vld [vmem:[#allocation5 + $0x528] sm:$0xff]
    %v265 = vld [vmem:[#allocation5 + $0x530] sm:$0xff]
    %v266 = vld [vmem:[#allocation5 + $0x538] sm:$0xff]
    %v267 = vld [vmem:[#allocation5 + $0x540] sm:$0xff]
    %v268 = vld [vmem:[#allocation5 + $0x548] sm:$0xff]
    %v269 = vld [vmem:[#allocation5 + $0x550] sm:$0xff]
    %v270 = vld [vmem:[#allocation5 + $0x558] sm:$0xff]
    %v271 = vld [vmem:[#allocation5 + $0x560] sm:$0xff]
    %v272 = vld [vmem:[#allocation5 + $0x568] sm:$0xff]
    %v273 = vld [vmem:[#allocation5 + $0x570] sm:$0xff]
    %v274 = vld [vmem:[#allocation5 + $0x578] sm:$0xff]
    %v275 = vld [vmem:[#allocation5 + $0x580] sm:$0xff]
    %v276 = vld [vmem:[#allocation5 + $0x588] sm:$0xff]
    %v277 = vld [vmem:[#allocation5 + $0x590] sm:$0xff]
    %v278 = vld [vmem:[#allocation5 + $0x598] sm:$0xff]
    %v279 = vld [vmem:[#allocation5 + $0x5a0] sm:$0xff]
    %v280 = vld [vmem:[#allocation5 + $0x5a8] sm:$0xff]
    %v281 = vld [vmem:[#allocation5 + $0x5b0] sm:$0xff]
    %v282 = vld [vmem:[#allocation5 + $0x5b8] sm:$0xff]
    %v283 = vld [vmem:[#allocation5 + $0x5c0] sm:$0xff]
    %v284 = vld [vmem:[#allocation5 + $0x5c8] sm:$0xff]
    %v285 = vld [vmem:[#allocation5 + $0x5d0] sm:$0xff]
    %v286 = vld [vmem:[#allocation5 + $0x5d8] sm:$0xff]
    %v287 = vld [vmem:[#allocation5 + $0x5e0] sm:$0xff]
    %v288 = vld [vmem:[#allocation5 + $0x5e8] sm:$0xff]
    %v289 = vld [vmem:[#allocation5 + $0x5f0] sm:$0xff]
    %v290 = vld [vmem:[#allocation5 + $0x5f8] sm:$0xff]
    %v291 = vld [vmem:[#allocation5 + $0x600] sm:$0xff]
    %v292 = vld [vmem:[#allocation5 + $0x608] sm:$0xff]
    %v293 = vld [vmem:[#allocation5 + $0x610] sm:$0xff]
    %v294 = vld [vmem:[#allocation5 + $0x618] sm:$0xff]
    %v295 = vld [vmem:[#allocation5 + $0x620] sm:$0xff]
    %v296 = vld [vmem:[#allocation5 + $0x628] sm:$0xff]
    %v297 = vld [vmem:[#allocation5 + $0x630] sm:$0xff]
    %v298 = vld [vmem:[#allocation5 + $0x638] sm:$0xff]
    %v299 = vld [vmem:[#allocation5 + $0x640] sm:$0xff]
    %v300 = vld [vmem:[#allocation5 + $0x648] sm:$0xff]
    %v301 = vld [vmem:[#allocation5 + $0x650] sm:$0xff]
    %v302 = vld [vmem:[#allocation5 + $0x658] sm:$0xff]
    %v303 = vld [vmem:[#allocation5 + $0x660] sm:$0xff]
    %v304 = vld [vmem:[#allocation5 + $0x668] sm:$0xff]
    %v305 = vld [vmem:[#allocation5 + $0x670] sm:$0xff]
    %v306 = vld [vmem:[#allocation5 + $0x678] sm:$0xff]
    %v307 = vld [vmem:[#allocation5 + $0x680] sm:$0xff]
    %v308 = vld [vmem:[#allocation5 + $0x688] sm:$0xff]
    %v309 = vld [vmem:[#allocation5 + $0x690] sm:$0xff]
    %v310 = vld [vmem:[#allocation5 + $0x698] sm:$0xff]
    %v311 = vld [vmem:[#allocation5 + $0x6a0] sm:$0xff]
    %v312 = vld [vmem:[#allocation5 + $0x6a8] sm:$0xff]
    %v313 = vld [vmem:[#allocation5 + $0x6b0] sm:$0xff]
    %v314 = vld [vmem:[#allocation5 + $0x6b8] sm:$0xff]
    %v315 = vld [vmem:[#allocation5 + $0x6c0] sm:$0xff]
    %v316 = vld [vmem:[#allocation5 + $0x6c8] sm:$0xff]
    %v317 = vld [vmem:[#allocation5 + $0x6d0] sm:$0xff]
    %v318 = vld [vmem:[#allocation5 + $0x6d8] sm:$0xff]
    %v319 = vld [vmem:[#allocation5 + $0x6e0] sm:$0xff]
    %v320 = vld [vmem:[#allocation5 + $0x6e8] sm:$0xff]
    %v321 = vld [vmem:[#allocation5 + $0x6f0] sm:$0xff]
    %v322 = vld [vmem:[#allocation5 + $0x6f8] sm:$0xff]
    %v323 = vld [vmem:[#allocation5 + $0x700] sm:$0xff]
    %v324 = vld [vmem:[#allocation5 + $0x708] sm:$0xff]
    %v325 = vld [vmem:[#allocation5 + $0x710] sm:$0xff]
    %v326 = vld [vmem:[#allocation5 + $0x718] sm:$0xff]
    %v327 = vld [vmem:[#allocation5 + $0x720] sm:$0xff]
    %v328 = vld [vmem:[#allocation5 + $0x728] sm:$0xff]
    %v329 = vld [vmem:[#allocation5 + $0x730] sm:$0xff]
    %v330 = vld [vmem:[#allocation5 + $0x738] sm:$0xff]
    %v331 = vld [vmem:[#allocation5 + $0x740] sm:$0xff]
    %v332 = vld [vmem:[#allocation5 + $0x748] sm:$0xff]
    %v333 = vld [vmem:[#allocation5 + $0x750] sm:$0xff]
    %v334 = vld [vmem:[#allocation5 + $0x758] sm:$0xff]
    %v335 = vld [vmem:[#allocation5 + $0x760] sm:$0xff]
    %v336 = vld [vmem:[#allocation5 + $0x768] sm:$0xff]
    %v337 = vld [vmem:[#allocation5 + $0x770] sm:$0xff]
    %v338 = vld [vmem:[#allocation5 + $0x778] sm:$0xff]
    %v339 = vld [vmem:[#allocation5 + $0x780] sm:$0xff]
    %v340 = vld [vmem:[#allocation5 + $0x788] sm:$0xff]
    %v341 = vld [vmem:[#allocation5 + $0x790] sm:$0xff]
    %v342 = vld [vmem:[#allocation5 + $0x798] sm:$0xff]
    %v343 = vld [vmem:[#allocation5 + $0x7a0] sm:$0xff]
    %v344 = vld [vmem:[#allocation5 + $0x7a8] sm:$0xff]
    %v345 = vld [vmem:[#allocation5 + $0x7b0] sm:$0xff]
    %v346 = vld [vmem:[#allocation5 + $0x7b8] sm:$0xff]
    %v347 = vld [vmem:[#allocation5 + $0x7c0] sm:$0xff]
    %v348 = vld [vmem:[#allocation5 + $0x7c8] sm:$0xff]
    %v349 = vld [vmem:[#allocation5 + $0x7d0] sm:$0xff]
    %v350 = vld [vmem:[#allocation5 + $0x7d8] sm:$0xff]
    %v351 = vld [vmem:[#allocation5 + $0x7e0] sm:$0xff]
    %v352 = vld [vmem:[#allocation5 + $0x7e8] sm:$0xff]
    %v353 = vld [vmem:[#allocation5 + $0x7f0] sm:$0xff]
    %v354 = vld [vmem:[#allocation5 + $0x7f8] sm:$0xff]
    %v355 = vld [vmem:[#allocation5 + $0x800] sm:$0xff]
    %v356 = vld [vmem:[#allocation5 + $0x808] sm:$0xff]
    %v357 = vld [vmem:[#allocation5 + $0x810] sm:$0xff]
    %v358 = vld [vmem:[#allocation5 + $0x818] sm:$0xff]
    %v359 = vld [vmem:[#allocation5 + $0x820] sm:$0xff]
    %v360 = vld [vmem:[#allocation5 + $0x828] sm:$0xff]
    %v361 = vld [vmem:[#allocation5 + $0x830] sm:$0xff]
    %v362 = vld [vmem:[#allocation5 + $0x838] sm:$0xff]
    %v363 = vld [vmem:[#allocation5 + $0x840] sm:$0xff]
    %v364 = vld [vmem:[#allocation5 + $0x848] sm:$0xff]
    %v365 = vld [vmem:[#allocation5 + $0x850] sm:$0xff]
    %v366 = vld [vmem:[#allocation5 + $0x858] sm:$0xff]
    %v367 = vld [vmem:[#allocation5 + $0x860] sm:$0xff]
    %v368 = vld [vmem:[#allocation5 + $0x868] sm:$0xff]
    %v369 = vld [vmem:[#allocation5 + $0x870] sm:$0xff]
    %v370 = vld [vmem:[#allocation5 + $0x878] sm:$0xff]
    %v371 = vld [vmem:[#allocation5 + $0x880] sm:$0xff]
    %v372 = vld [vmem:[#allocation5 + $0x888] sm:$0xff]
    %v373 = vld [vmem:[#allocation5 + $0x890] sm:$0xff]
    %v374 = vld [vmem:[#allocation5 + $0x898] sm:$0xff]
    %v375 = vld [vmem:[#allocation5 + $0x8a0] sm:$0xff]
    %v376 = vld [vmem:[#allocation5 + $0x8a8] sm:$0xff]
    %v377 = vld [vmem:[#allocation5 + $0x8b0] sm:$0xff]
    %v378 = vld [vmem:[#allocation5 + $0x8b8] sm:$0xff]
    %v379 = vld [vmem:[#allocation5 + $0x8c0] sm:$0xff]
    %v380 = vld [vmem:[#allocation5 + $0x8c8] sm:$0xff]
    %v381 = vld [vmem:[#allocation5 + $0x8d0] sm:$0xff]
    %v382 = vld [vmem:[#allocation5 + $0x8d8] sm:$0xff]
    %v383 = vld [vmem:[#allocation5 + $0x8e0] sm:$0xff]
    %v384 = vld [vmem:[#allocation5 + $0x8e8] sm:$0xff]
    %v385 = vld [vmem:[#allocation5 + $0x8f0] sm:$0xff]
    %v386 = vld [vmem:[#allocation5 + $0x8f8] sm:$0xff]
    %v387 = vld [vmem:[#allocation5 + $0x900] sm:$0xff]
    %v388 = vld [vmem:[#allocation5 + $0x908] sm:$0xff]
    %v389 = vld [vmem:[#allocation5 + $0x910] sm:$0xff]
    %v390 = vld [vmem:[#allocation5 + $0x918] sm:$0xff]
    %v391 = vld [vmem:[#allocation5 + $0x920] sm:$0xff]
    %v392 = vld [vmem:[#allocation5 + $0x928] sm:$0xff]
    %v393 = vld [vmem:[#allocation5 + $0x930] sm:$0xff]
    %v394 = vld [vmem:[#allocation5 + $0x938] sm:$0xff]
    %v395 = vld [vmem:[#allocation5 + $0x940] sm:$0xff]
    %v396 = vld [vmem:[#allocation5 + $0x948] sm:$0xff]
    %v397 = vld [vmem:[#allocation5 + $0x950] sm:$0xff]
    %v398 = vld [vmem:[#allocation5 + $0x958] sm:$0xff]
    %v399 = vld [vmem:[#allocation5 + $0x960] sm:$0xff]
    %v400 = vld [vmem:[#allocation5 + $0x968] sm:$0xff]
    %v401 = vld [vmem:[#allocation5 + $0x970] sm:$0xff]
    %v402 = vld [vmem:[#allocation5 + $0x978] sm:$0xff]
    %v403 = vld [vmem:[#allocation5 + $0x980] sm:$0xff]
    %v404 = vld [vmem:[#allocation5 + $0x988] sm:$0xff]
    %v405 = vld [vmem:[#allocation5 + $0x990] sm:$0xff]
    %v406 = vld [vmem:[#allocation5 + $0x998] sm:$0xff]
    %v407 = vld [vmem:[#allocation5 + $0x9a0] sm:$0xff]
    %v408 = vld [vmem:[#allocation5 + $0x9a8] sm:$0xff]
    %v409 = vld [vmem:[#allocation5 + $0x9b0] sm:$0xff]
    %v410 = vld [vmem:[#allocation5 + $0x9b8] sm:$0xff]
    %v411 = vld [vmem:[#allocation5 + $0x9c0] sm:$0xff]
    %v412 = vld [vmem:[#allocation5 + $0x9c8] sm:$0xff]
    %v413 = vld [vmem:[#allocation5 + $0x9d0] sm:$0xff]
    %v414 = vld [vmem:[#allocation5 + $0x9d8] sm:$0xff]
    %v415 = vld [vmem:[#allocation5 + $0x9e0] sm:$0xff]
    %v416 = vld [vmem:[#allocation5 + $0x9e8] sm:$0xff]
    %v417 = vld [vmem:[#allocation5 + $0x9f0] sm:$0xff]
    %v418 = vld [vmem:[#allocation5 + $0x9f8] sm:$0xff]
    %v419 = vld [vmem:[#allocation5 + $0xa00] sm:$0xff]
    %v420 = vld [vmem:[#allocation5 + $0xa08] sm:$0xff]
    %v421 = vld [vmem:[#allocation5 + $0xa10] sm:$0xff]
    %v422 = vld [vmem:[#allocation5 + $0xa18] sm:$0xff]
    %v423 = vld [vmem:[#allocation5 + $0xa20] sm:$0xff]
    %v424 = vld [vmem:[#allocation5 + $0xa28] sm:$0xff]
    %v425 = vld [vmem:[#allocation5 + $0xa30] sm:$0xff]
    %v426 = vld [vmem:[#allocation5 + $0xa38] sm:$0xff]
    %v427 = vld [vmem:[#allocation5 + $0xa40] sm:$0xff]
    %v428 = vld [vmem:[#allocation5 + $0xa48] sm:$0xff]
    %v429 = vld [vmem:[#allocation5 + $0xa50] sm:$0xff]
    %v430 = vld [vmem:[#allocation5 + $0xa58] sm:$0xff]
    %v431 = vld [vmem:[#allocation5 + $0xa60] sm:$0xff]
    %v432 = vld [vmem:[#allocation5 + $0xa68] sm:$0xff]
    %v433 = vld [vmem:[#allocation5 + $0xa70] sm:$0xff]
    %v434 = vld [vmem:[#allocation5 + $0xa78] sm:$0xff]
    %v435 = vld [vmem:[#allocation5 + $0xa80] sm:$0xff]
    %v436 = vld [vmem:[#allocation5 + $0xa88] sm:$0xff]
    %v437 = vld [vmem:[#allocation5 + $0xa90] sm:$0xff]
    %v438 = vld [vmem:[#allocation5 + $0xa98] sm:$0xff]
    %v439 = vld [vmem:[#allocation5 + $0xaa0] sm:$0xff]
    %v440 = vld [vmem:[#allocation5 + $0xaa8] sm:$0xff]
    %v441 = vld [vmem:[#allocation5 + $0xab0] sm:$0xff]
    %v442 = vld [vmem:[#allocation5 + $0xab8] sm:$0xff]
    %v443 = vld [vmem:[#allocation5 + $0xac0] sm:$0xff]
    %v444 = vld [vmem:[#allocation5 + $0xac8] sm:$0xff]
    %v445 = vld [vmem:[#allocation5 + $0xad0] sm:$0xff]
    %v446 = vld [vmem:[#allocation5 + $0xad8] sm:$0xff]
    %v447 = vld [vmem:[#allocation5 + $0xae0] sm:$0xff]
    %v448 = vld [vmem:[#allocation5 + $0xae8] sm:$0xff]
    %v449 = vld [vmem:[#allocation5 + $0xaf0] sm:$0xff]
    %v450 = vld [vmem:[#allocation5 + $0xaf8] sm:$0xff]
    %v451 = vld [vmem:[#allocation5 + $0xb00] sm:$0xff]
    %v452 = vld [vmem:[#allocation5 + $0xb08] sm:$0xff]
    %v453 = vld [vmem:[#allocation5 + $0xb10] sm:$0xff]
    %v454 = vld [vmem:[#allocation5 + $0xb18] sm:$0xff]
    %v455 = vld [vmem:[#allocation5 + $0xb20] sm:$0xff]
    %v456 = vld [vmem:[#allocation5 + $0xb28] sm:$0xff]
    %v457 = vld [vmem:[#allocation5 + $0xb30] sm:$0xff]
    %v458 = vld [vmem:[#allocation5 + $0xb38] sm:$0xff]
    %v459 = vld [vmem:[#allocation5 + $0xb40] sm:$0xff]
    %v460 = vld [vmem:[#allocation5 + $0xb48] sm:$0xff]
    %v461 = vld [vmem:[#allocation5 + $0xb50] sm:$0xff]
    %v462 = vld [vmem:[#allocation5 + $0xb58] sm:$0xff]
    %v463 = vld [vmem:[#allocation5 + $0xb60] sm:$0xff]
    %v464 = vld [vmem:[#allocation5 + $0xb68] sm:$0xff]
    %v465 = vld [vmem:[#allocation5 + $0xb70] sm:$0xff]
    %v466 = vld [vmem:[#allocation5 + $0xb78] sm:$0xff]
    %v467 = vld [vmem:[#allocation5 + $0xb80] sm:$0xff]
    %v468 = vld [vmem:[#allocation5 + $0xb88] sm:$0xff]
    %v469 = vld [vmem:[#allocation5 + $0xb90] sm:$0xff]
    %v470 = vld [vmem:[#allocation5 + $0xb98] sm:$0xff]
    %v471 = vld [vmem:[#allocation5 + $0xba0] sm:$0xff]
    %v472 = vld [vmem:[#allocation5 + $0xba8] sm:$0xff]
    %v473 = vld [vmem:[#allocation5 + $0xbb0] sm:$0xff]
    %v474 = vld [vmem:[#allocation5 + $0xbb8] sm:$0xff]
    %v475 = vld [vmem:[#allocation5 + $0xbc0] sm:$0xff]
    %v476 = vld [vmem:[#allocation5 + $0xbc8] sm:$0xff]
    %v477 = vld [vmem:[#allocation5 + $0xbd0] sm:$0xff]
    %v478 = vld [vmem:[#allocation5 + $0xbd8] sm:$0xff]
    %v479 = vld [vmem:[#allocation5 + $0xbe0] sm:$0xff]
    %v480 = vld [vmem:[#allocation5 + $0xbe8] sm:$0xff]
    %v481 = vld [vmem:[#allocation5 + $0xbf0] sm:$0xff]
    %v482 = vld [vmem:[#allocation5 + $0xbf8] sm:$0xff]
    %v483 = vld [vmem:[#allocation5 + $0xc00] sm:$0xff]
    %v484 = vld [vmem:[#allocation5 + $0xc08] sm:$0xff]
    %v485 = vld [vmem:[#allocation5 + $0xc10] sm:$0xff]
    %v486 = vld [vmem:[#allocation5 + $0xc18] sm:$0xff]
    %v487 = vld [vmem:[#allocation5 + $0xc20] sm:$0xff]
    %v488 = vld [vmem:[#allocation5 + $0xc28] sm:$0xff]
    %v489 = vld [vmem:[#allocation5 + $0xc30] sm:$0xff]
    %v490 = vld [vmem:[#allocation5 + $0xc38] sm:$0xff]
    %v491 = vld [vmem:[#allocation5 + $0xc40] sm:$0xff]
    %v492 = vld [vmem:[#allocation5 + $0xc48] sm:$0xff]
    %v493 = vld [vmem:[#allocation5 + $0xc50] sm:$0xff]
    %v494 = vld [vmem:[#allocation5 + $0xc58] sm:$0xff]
    %v495 = vld [vmem:[#allocation5 + $0xc60] sm:$0xff]
    %v496 = vld [vmem:[#allocation5 + $0xc68] sm:$0xff]
    %v497 = vld [vmem:[#allocation5 + $0xc70] sm:$0xff]
    %v498 = vld [vmem:[#allocation5 + $0xc78] sm:$0xff]
    %v499 = vld [vmem:[#allocation5 + $0xc80] sm:$0xff]
    %v500 = vld [vmem:[#allocation5 + $0xc88] sm:$0xff]
    %v501 = vld [vmem:[#allocation5 + $0xc90] sm:$0xff]
    %v502 = vld [vmem:[#allocation5 + $0xc98] sm:$0xff]
    %v503 = vld [vmem:[#allocation5 + $0xca0] sm:$0xff]
    %v504 = vld [vmem:[#allocation5 + $0xca8] sm:$0xff]
    %v505 = vld [vmem:[#allocation5 + $0xcb0] sm:$0xff]
    %v506 = vld [vmem:[#allocation5 + $0xcb8] sm:$0xff]
    %v507 = vld [vmem:[#allocation5 + $0xcc0] sm:$0xff]
    %v508 = vld [vmem:[#allocation5 + $0xcc8] sm:$0xff]
    %v509 = vld [vmem:[#allocation5 + $0xcd0] sm:$0xff]
    %v510 = vld [vmem:[#allocation5 + $0xcd8] sm:$0xff]
    %v511 = vld [vmem:[#allocation5 + $0xce0] sm:$0xff]
    %v512 = vld [vmem:[#allocation5 + $0xce8] sm:$0xff]
    %v513 = vld [vmem:[#allocation5 + $0xcf0] sm:$0xff]
    %v514 = vld [vmem:[#allocation5 + $0xcf8] sm:$0xff]
    %v515 = vld [vmem:[#allocation5 + $0xd00] sm:$0xff]
    %v516 = vld [vmem:[#allocation5 + $0xd08] sm:$0xff]
    %v517 = vld [vmem:[#allocation5 + $0xd10] sm:$0xff]
    %v518 = vld [vmem:[#allocation5 + $0xd18] sm:$0xff]
    %v519 = vld [vmem:[#allocation5 + $0xd20] sm:$0xff]
    %v520 = vld [vmem:[#allocation5 + $0xd28] sm:$0xff]
    %v521 = vld [vmem:[#allocation5 + $0xd30] sm:$0xff]
    %v522 = vld [vmem:[#allocation5 + $0xd38] sm:$0xff]
    %v523 = vld [vmem:[#allocation5 + $0xd40] sm:$0xff]
    %v524 = vld [vmem:[#allocation5 + $0xd48] sm:$0xff]
    %v525 = vld [vmem:[#allocation5 + $0xd50] sm:$0xff]
    %v526 = vld [vmem:[#allocation5 + $0xd58] sm:$0xff]
    %v527 = vld [vmem:[#allocation5 + $0xd60] sm:$0xff]
    %v528 = vld [vmem:[#allocation5 + $0xd68] sm:$0xff]
    %v529 = vld [vmem:[#allocation5 + $0xd70] sm:$0xff]
    %v530 = vld [vmem:[#allocation5 + $0xd78] sm:$0xff]
    %v531 = vld [vmem:[#allocation5 + $0xd80] sm:$0xff]
    %v532 = vld [vmem:[#allocation5 + $0xd88] sm:$0xff]
    %v533 = vld [vmem:[#allocation5 + $0xd90] sm:$0xff]
    %v534 = vld [vmem:[#allocation5 + $0xd98] sm:$0xff]
    %v535 = vld [vmem:[#allocation5 + $0xda0] sm:$0xff]
    %v536 = vld [vmem:[#allocation5 + $0xda8] sm:$0xff]
    %v537 = vld [vmem:[#allocation5 + $0xdb0] sm:$0xff]
    %v538 = vld [vmem:[#allocation5 + $0xdb8] sm:$0xff]
    %v539 = vld [vmem:[#allocation5 + $0xdc0] sm:$0xff]
    %v540 = vld [vmem:[#allocation5 + $0xdc8] sm:$0xff]
    %v541 = vld [vmem:[#allocation5 + $0xdd0] sm:$0xff]
    %v542 = vld [vmem:[#allocation5 + $0xdd8] sm:$0xff]
    %v543 = vld [vmem:[#allocation5 + $0xde0] sm:$0xff]
    %v544 = vld [vmem:[#allocation5 + $0xde8] sm:$0xff]
    %v545 = vld [vmem:[#allocation5 + $0xdf0] sm:$0xff]
    %v546 = vld [vmem:[#allocation5 + $0xdf8] sm:$0xff]
    %v547 = vld [vmem:[#allocation5 + $0xe00] sm:$0xff]
    %v548 = vld [vmem:[#allocation5 + $0xe08] sm:$0xff]
    %v549 = vld [vmem:[#allocation5 + $0xe10] sm:$0xff]
    %v550 = vld [vmem:[#allocation5 + $0xe18] sm:$0xff]
    %v551 = vld [vmem:[#allocation5 + $0xe20] sm:$0xff]
    %v552 = vld [vmem:[#allocation5 + $0xe28] sm:$0xff]
    %v553 = vld [vmem:[#allocation5 + $0xe30] sm:$0xff]
    %v554 = vld [vmem:[#allocation5 + $0xe38] sm:$0xff]
    %v555 = vld [vmem:[#allocation5 + $0xe40] sm:$0xff]
    %v556 = vld [vmem:[#allocation5 + $0xe48] sm:$0xff]
    %v557 = vld [vmem:[#allocation5 + $0xe50] sm:$0xff]
    %v558 = vld [vmem:[#allocation5 + $0xe58] sm:$0xff]
    %v559 = vld [vmem:[#allocation5 + $0xe60] sm:$0xff]
    %v560 = vld [vmem:[#allocation5 + $0xe68] sm:$0xff]
    %v561 = vld [vmem:[#allocation5 + $0xe70] sm:$0xff]
    %v562 = vld [vmem:[#allocation5 + $0xe78] sm:$0xff]
    %v563 = vld [vmem:[#allocation5 + $0xe80] sm:$0xff]
    %v564 = vld [vmem:[#allocation5 + $0xe88] sm:$0xff]
    %v565 = vld [vmem:[#allocation5 + $0xe90] sm:$0xff]
    %v566 = vld [vmem:[#allocation5 + $0xe98] sm:$0xff]
    %v567 = vld [vmem:[#allocation5 + $0xea0] sm:$0xff]
    %v568 = vld [vmem:[#allocation5 + $0xea8] sm:$0xff]
    %v569 = vld [vmem:[#allocation5 + $0xeb0] sm:$0xff]
    %v570 = vld [vmem:[#allocation5 + $0xeb8] sm:$0xff]
    %v571 = vld [vmem:[#allocation5 + $0xec0] sm:$0xff]
    %v572 = vld [vmem:[#allocation5 + $0xec8] sm:$0xff]
    %v573 = vld [vmem:[#allocation5 + $0xed0] sm:$0xff]
    %v574 = vld [vmem:[#allocation5 + $0xed8] sm:$0xff]
    %v575 = vld [vmem:[#allocation5 + $0xee0] sm:$0xff]
    %v576 = vld [vmem:[#allocation5 + $0xee8] sm:$0xff]
    %v577 = vld [vmem:[#allocation5 + $0xef0] sm:$0xff]
    %v578 = vld [vmem:[#allocation5 + $0xef8] sm:$0xff]
    %v579 = vld [vmem:[#allocation5 + $0xf00] sm:$0xff]
    %v580 = vld [vmem:[#allocation5 + $0xf08] sm:$0xff]
    %v581 = vld [vmem:[#allocation5 + $0xf10] sm:$0xff]
    %v582 = vld [vmem:[#allocation5 + $0xf18] sm:$0xff]
    %v583 = vld [vmem:[#allocation5 + $0xf20] sm:$0xff]
    %v584 = vld [vmem:[#allocation5 + $0xf28] sm:$0xff]
    %v585 = vld [vmem:[#allocation5 + $0xf30] sm:$0xff]
    %v586 = vld [vmem:[#allocation5 + $0xf38] sm:$0xff]
    %v587 = vld [vmem:[#allocation5 + $0xf40] sm:$0xff]
    %v588 = vld [vmem:[#allocation5 + $0xf48] sm:$0xff]
    %v589 = vld [vmem:[#allocation5 + $0xf50] sm:$0xff]
    %v590 = vld [vmem:[#allocation5 + $0xf58] sm:$0xff]
    %v591 = vld [vmem:[#allocation5 + $0xf60] sm:$0xff]
    %v592 = vld [vmem:[#allocation5 + $0xf68] sm:$0xff]
    %v593 = vld [vmem:[#allocation5 + $0xf70] sm:$0xff]
    %v594 = vld [vmem:[#allocation5 + $0xf78] sm:$0xff]
    %v595 = vld [vmem:[#allocation5 + $0xf80] sm:$0xff]
    %v596 = vld [vmem:[#allocation5 + $0xf88] sm:$0xff]
    %v597 = vld [vmem:[#allocation5 + $0xf90] sm:$0xff]
    %v598 = vld [vmem:[#allocation5 + $0xf98] sm:$0xff]
    %v599 = vld [vmem:[#allocation5 + $0xfa0] sm:$0xff]
    %v600 = vld [vmem:[#allocation5 + $0xfa8] sm:$0xff]
    %v601 = vld [vmem:[#allocation5 + $0xfb0] sm:$0xff]
    %v602 = vld [vmem:[#allocation5 + $0xfb8] sm:$0xff]
    %v603 = vld [vmem:[#allocation5 + $0xfc0] sm:$0xff]
    %v604 = vld [vmem:[#allocation5 + $0xfc8] sm:$0xff]
    %v605 = vld [vmem:[#allocation5 + $0xfd0] sm:$0xff]
    %v606 = vld [vmem:[#allocation5 + $0xfd8] sm:$0xff]
    %v607 = vld [vmem:[#allocation5 + $0xfe0] sm:$0xff]
    %v608 = vld [vmem:[#allocation5 + $0xfe8] sm:$0xff]
    %v609 = vld [vmem:[#allocation5 + $0xff0] sm:$0xff]
    %v610 = vld [vmem:[#allocation5 + $0xff8] sm:$0xff]
    %v611 = vld [vmem:[#allocation7] sm:$0xff]
    %v613 = vlaneseq
    %v614 = vshrl.u32 %v613, 7
    %v615 = vsub.s32 0, %v614
    %v616 = vrot.slane %v611, %v615
    %v617 = vlaneseq
    %v618 = vshrl.u32 %v617, 7
    %v619 = vsub.s32 1, %v618
    %v620 = vrot.slane %v611, %v619
    %v621 = vlaneseq
    %v622 = vshrl.u32 %v621, 7
    %v623 = vsub.s32 2, %v622
    %v624 = vrot.slane %v611, %v623
    %v625 = vlaneseq
    %v626 = vshrl.u32 %v625, 7
    %v627 = vsub.s32 3, %v626
    %v628 = vrot.slane %v611, %v627
    %v629 = vlaneseq
    %v630 = vshrl.u32 %v629, 7
    %v631 = vsub.s32 4, %v630
    %v632 = vrot.slane %v611, %v631
    %v633 = vlaneseq
    %v634 = vshrl.u32 %v633, 7
    %v635 = vsub.s32 5, %v634
    %v636 = vrot.slane %v611, %v635
    %v637 = vlaneseq
    %v638 = vshrl.u32 %v637, 7
    %v639 = vsub.s32 6, %v638
    %v640 = vrot.slane %v611, %v639
    %v641 = vlaneseq
    %v642 = vshrl.u32 %v641, 7
    %v643 = vsub.s32 7, %v642
    %v644 = vrot.slane %v611, %v643
    %v1165 = vunpack.c.l.b16 %v99
    %v1166 = vunpack.c.h.b16 %v99
    %v1167 = vunpack.c.l.b16 %v100
    %v1168 = vunpack.c.h.b16 %v100
    %v1169 = vunpack.c.l.b16 %v101
    %v1170 = vunpack.c.h.b16 %v101
    %v1171 = vunpack.c.l.b16 %v102
    %v1172 = vunpack.c.h.b16 %v102
    %v1173 = vunpack.c.l.b16 %v103
    %v1174 = vunpack.c.h.b16 %v103
    %v1175 = vunpack.c.l.b16 %v104
    %v1176 = vunpack.c.h.b16 %v104
    %v1177 = vunpack.c.l.b16 %v105
    %v1178 = vunpack.c.h.b16 %v105
    %v1179 = vunpack.c.l.b16 %v106
    %v1180 = vunpack.c.h.b16 %v106
    %v1181 = vunpack.c.l.b16 %v107
    %v1182 = vunpack.c.h.b16 %v107
    %v1183 = vunpack.c.l.b16 %v108
    %v1184 = vunpack.c.h.b16 %v108
    %v1185 = vunpack.c.l.b16 %v109
    %v1186 = vunpack.c.h.b16 %v109
    %v1187 = vunpack.c.l.b16 %v110
    %v1188 = vunpack.c.h.b16 %v110
    %v1189 = vunpack.c.l.b16 %v111
    %v1190 = vunpack.c.h.b16 %v111
    %v1191 = vunpack.c.l.b16 %v112
    %v1192 = vunpack.c.h.b16 %v112
    %v1193 = vunpack.c.l.b16 %v113
    %v1194 = vunpack.c.h.b16 %v113
    %v1195 = vunpack.c.l.b16 %v114
    %v1196 = vunpack.c.h.b16 %v114
    %v1197 = vunpack.c.l.b16 %v115
    %v1198 = vunpack.c.h.b16 %v115
    %v1199 = vunpack.c.l.b16 %v116
    %v1200 = vunpack.c.h.b16 %v116
    %v1201 = vunpack.c.l.b16 %v117
    %v1202 = vunpack.c.h.b16 %v117
    %v1203 = vunpack.c.l.b16 %v118
    %v1204 = vunpack.c.h.b16 %v118
    %v1205 = vunpack.c.l.b16 %v119
    %v1206 = vunpack.c.h.b16 %v119
    %v1207 = vunpack.c.l.b16 %v120
    %v1208 = vunpack.c.h.b16 %v120
    %v1209 = vunpack.c.l.b16 %v121
    %v1210 = vunpack.c.h.b16 %v121
    %v1211 = vunpack.c.l.b16 %v122
    %v1212 = vunpack.c.h.b16 %v122
    %v1213 = vunpack.c.l.b16 %v123
    %v1214 = vunpack.c.h.b16 %v123
    %v1215 = vunpack.c.l.b16 %v124
    %v1216 = vunpack.c.h.b16 %v124
    %v1217 = vunpack.c.l.b16 %v125
    %v1218 = vunpack.c.h.b16 %v125
    %v1219 = vunpack.c.l.b16 %v126
    %v1220 = vunpack.c.h.b16 %v126
    %v1221 = vunpack.c.l.b16 %v127
    %v1222 = vunpack.c.h.b16 %v127
    %v1223 = vunpack.c.l.b16 %v128
    %v1224 = vunpack.c.h.b16 %v128
    %v1225 = vunpack.c.l.b16 %v129
    %v1226 = vunpack.c.h.b16 %v129
    %v1227 = vunpack.c.l.b16 %v130
    %v1228 = vunpack.c.h.b16 %v130
    %v1229 = vunpack.c.l.b16 %v131
    %v1230 = vunpack.c.h.b16 %v131
    %v1231 = vunpack.c.l.b16 %v132
    %v1232 = vunpack.c.h.b16 %v132
    %v1233 = vunpack.c.l.b16 %v133
    %v1234 = vunpack.c.h.b16 %v133
    %v1235 = vunpack.c.l.b16 %v134
    %v1236 = vunpack.c.h.b16 %v134
    %v1237 = vunpack.c.l.b16 %v135
    %v1238 = vunpack.c.h.b16 %v135
    %v1239 = vunpack.c.l.b16 %v136
    %v1240 = vunpack.c.h.b16 %v136
    %v1241 = vunpack.c.l.b16 %v137
    %v1242 = vunpack.c.h.b16 %v137
    %v1243 = vunpack.c.l.b16 %v138
    %v1244 = vunpack.c.h.b16 %v138
    %v1245 = vunpack.c.l.b16 %v139
    %v1246 = vunpack.c.h.b16 %v139
    %v1247 = vunpack.c.l.b16 %v140
    %v1248 = vunpack.c.h.b16 %v140
    %v1249 = vunpack.c.l.b16 %v141
    %v1250 = vunpack.c.h.b16 %v141
    %v1251 = vunpack.c.l.b16 %v142
    %v1252 = vunpack.c.h.b16 %v142
    %v1253 = vunpack.c.l.b16 %v143
    %v1254 = vunpack.c.h.b16 %v143
    %v1255 = vunpack.c.l.b16 %v144
    %v1256 = vunpack.c.h.b16 %v144
    %v1257 = vunpack.c.l.b16 %v145
    %v1258 = vunpack.c.h.b16 %v145
    %v1259 = vunpack.c.l.b16 %v146
    %v1260 = vunpack.c.h.b16 %v146
    %v1261 = vunpack.c.l.b16 %v147
    %v1262 = vunpack.c.h.b16 %v147
    %v1263 = vunpack.c.l.b16 %v148
    %v1264 = vunpack.c.h.b16 %v148
    %v1265 = vunpack.c.l.b16 %v149
    %v1266 = vunpack.c.h.b16 %v149
    %v1267 = vunpack.c.l.b16 %v150
    %v1268 = vunpack.c.h.b16 %v150
    %v1269 = vunpack.c.l.b16 %v151
    %v1270 = vunpack.c.h.b16 %v151
    %v1271 = vunpack.c.l.b16 %v152
    %v1272 = vunpack.c.h.b16 %v152
    %v1273 = vunpack.c.l.b16 %v153
    %v1274 = vunpack.c.h.b16 %v153
    %v1275 = vunpack.c.l.b16 %v154
    %v1276 = vunpack.c.h.b16 %v154
    %v1277 = vunpack.c.l.b16 %v155
    %v1278 = vunpack.c.h.b16 %v155
    %v1279 = vunpack.c.l.b16 %v156
    %v1280 = vunpack.c.h.b16 %v156
    %v1281 = vunpack.c.l.b16 %v157
    %v1282 = vunpack.c.h.b16 %v157
    %v1283 = vunpack.c.l.b16 %v158
    %v1284 = vunpack.c.h.b16 %v158
    %v1285 = vunpack.c.l.b16 %v159
    %v1286 = vunpack.c.h.b16 %v159
    %v1287 = vunpack.c.l.b16 %v160
    %v1288 = vunpack.c.h.b16 %v160
    %v1289 = vunpack.c.l.b16 %v161
    %v1290 = vunpack.c.h.b16 %v161
    %v1291 = vunpack.c.l.b16 %v162
    %v1292 = vunpack.c.h.b16 %v162
    %v1293 = vunpack.c.l.b16 %v163
    %v1294 = vunpack.c.h.b16 %v163
    %v1295 = vunpack.c.l.b16 %v164
    %v1296 = vunpack.c.h.b16 %v164
    %v1297 = vunpack.c.l.b16 %v165
    %v1298 = vunpack.c.h.b16 %v165
    %v1299 = vunpack.c.l.b16 %v166
    %v1300 = vunpack.c.h.b16 %v166
    %v1301 = vunpack.c.l.b16 %v167
    %v1302 = vunpack.c.h.b16 %v167
    %v1303 = vunpack.c.l.b16 %v168
    %v1304 = vunpack.c.h.b16 %v168
    %v1305 = vunpack.c.l.b16 %v169
    %v1306 = vunpack.c.h.b16 %v169
    %v1307 = vunpack.c.l.b16 %v170
    %v1308 = vunpack.c.h.b16 %v170
    %v1309 = vunpack.c.l.b16 %v171
    %v1310 = vunpack.c.h.b16 %v171
    %v1311 = vunpack.c.l.b16 %v172
    %v1312 = vunpack.c.h.b16 %v172
    %v1313 = vunpack.c.l.b16 %v173
    %v1314 = vunpack.c.h.b16 %v173
    %v1315 = vunpack.c.l.b16 %v174
    %v1316 = vunpack.c.h.b16 %v174
    %v1317 = vunpack.c.l.b16 %v175
    %v1318 = vunpack.c.h.b16 %v175
    %v1319 = vunpack.c.l.b16 %v176
    %v1320 = vunpack.c.h.b16 %v176
    %v1321 = vunpack.c.l.b16 %v177
    %v1322 = vunpack.c.h.b16 %v177
    %v1323 = vunpack.c.l.b16 %v178
    %v1324 = vunpack.c.h.b16 %v178
    %v1325 = vunpack.c.l.b16 %v179
    %v1326 = vunpack.c.h.b16 %v179
    %v1327 = vunpack.c.l.b16 %v180
    %v1328 = vunpack.c.h.b16 %v180
    %v1329 = vunpack.c.l.b16 %v181
    %v1330 = vunpack.c.h.b16 %v181
    %v1331 = vunpack.c.l.b16 %v182
    %v1332 = vunpack.c.h.b16 %v182
    %v1333 = vunpack.c.l.b16 %v183
    %v1334 = vunpack.c.h.b16 %v183
    %v1335 = vunpack.c.l.b16 %v184
    %v1336 = vunpack.c.h.b16 %v184
    %v1337 = vunpack.c.l.b16 %v185
    %v1338 = vunpack.c.h.b16 %v185
    %v1339 = vunpack.c.l.b16 %v186
    %v1340 = vunpack.c.h.b16 %v186
    %v1341 = vunpack.c.l.b16 %v187
    %v1342 = vunpack.c.h.b16 %v187
    %v1343 = vunpack.c.l.b16 %v188
    %v1344 = vunpack.c.h.b16 %v188
    %v1345 = vunpack.c.l.b16 %v189
    %v1346 = vunpack.c.h.b16 %v189
    %v1347 = vunpack.c.l.b16 %v190
    %v1348 = vunpack.c.h.b16 %v190
    %v1349 = vunpack.c.l.b16 %v191
    %v1350 = vunpack.c.h.b16 %v191
    %v1351 = vunpack.c.l.b16 %v192
    %v1352 = vunpack.c.h.b16 %v192
    %v1353 = vunpack.c.l.b16 %v193
    %v1354 = vunpack.c.h.b16 %v193
    %v1355 = vunpack.c.l.b16 %v194
    %v1356 = vunpack.c.h.b16 %v194
    %v1357 = vunpack.c.l.b16 %v195
    %v1358 = vunpack.c.h.b16 %v195
    %v1359 = vunpack.c.l.b16 %v196
    %v1360 = vunpack.c.h.b16 %v196
    %v1361 = vunpack.c.l.b16 %v197
    %v1362 = vunpack.c.h.b16 %v197
    %v1363 = vunpack.c.l.b16 %v198
    %v1364 = vunpack.c.h.b16 %v198
    %v1365 = vunpack.c.l.b16 %v199
    %v1366 = vunpack.c.h.b16 %v199
    %v1367 = vunpack.c.l.b16 %v200
    %v1368 = vunpack.c.h.b16 %v200
    %v1369 = vunpack.c.l.b16 %v201
    %v1370 = vunpack.c.h.b16 %v201
    %v1371 = vunpack.c.l.b16 %v202
    %v1372 = vunpack.c.h.b16 %v202
    %v1373 = vunpack.c.l.b16 %v203
    %v1374 = vunpack.c.h.b16 %v203
    %v1375 = vunpack.c.l.b16 %v204
    %v1376 = vunpack.c.h.b16 %v204
    %v1377 = vunpack.c.l.b16 %v205
    %v1378 = vunpack.c.h.b16 %v205
    %v1379 = vunpack.c.l.b16 %v206
    %v1380 = vunpack.c.h.b16 %v206
    %v1381 = vunpack.c.l.b16 %v207
    %v1382 = vunpack.c.h.b16 %v207
    %v1383 = vunpack.c.l.b16 %v208
    %v1384 = vunpack.c.h.b16 %v208
    %v1385 = vunpack.c.l.b16 %v209
    %v1386 = vunpack.c.h.b16 %v209
    %v1387 = vunpack.c.l.b16 %v210
    %v1388 = vunpack.c.h.b16 %v210
    %v1389 = vunpack.c.l.b16 %v211
    %v1390 = vunpack.c.h.b16 %v211
    %v1391 = vunpack.c.l.b16 %v212
    %v1392 = vunpack.c.h.b16 %v212
    %v1393 = vunpack.c.l.b16 %v213
    %v1394 = vunpack.c.h.b16 %v213
    %v1395 = vunpack.c.l.b16 %v214
    %v1396 = vunpack.c.h.b16 %v214
    %v1397 = vunpack.c.l.b16 %v215
    %v1398 = vunpack.c.h.b16 %v215
    %v1399 = vunpack.c.l.b16 %v216
    %v1400 = vunpack.c.h.b16 %v216
    %v1401 = vunpack.c.l.b16 %v217
    %v1402 = vunpack.c.h.b16 %v217
    %v1403 = vunpack.c.l.b16 %v218
    %v1404 = vunpack.c.h.b16 %v218
    %v1405 = vunpack.c.l.b16 %v219
    %v1406 = vunpack.c.h.b16 %v219
    %v1407 = vunpack.c.l.b16 %v220
    %v1408 = vunpack.c.h.b16 %v220
    %v1409 = vunpack.c.l.b16 %v221
    %v1410 = vunpack.c.h.b16 %v221
    %v1411 = vunpack.c.l.b16 %v222
    %v1412 = vunpack.c.h.b16 %v222
    %v1413 = vunpack.c.l.b16 %v223
    %v1414 = vunpack.c.h.b16 %v223
    %v1415 = vunpack.c.l.b16 %v224
    %v1416 = vunpack.c.h.b16 %v224
    %v1417 = vunpack.c.l.b16 %v225
    %v1418 = vunpack.c.h.b16 %v225
    %v1419 = vunpack.c.l.b16 %v226
    %v1420 = vunpack.c.h.b16 %v226
    %v1421 = vunpack.c.l.b16 %v227
    %v1422 = vunpack.c.h.b16 %v227
    %v1423 = vunpack.c.l.b16 %v228
    %v1424 = vunpack.c.h.b16 %v228
    %v1425 = vunpack.c.l.b16 %v229
    %v1426 = vunpack.c.h.b16 %v229
    %v1427 = vunpack.c.l.b16 %v230
    %v1428 = vunpack.c.h.b16 %v230
    %v1429 = vunpack.c.l.b16 %v231
    %v1430 = vunpack.c.h.b16 %v231
    %v1431 = vunpack.c.l.b16 %v232
    %v1432 = vunpack.c.h.b16 %v232
    %v1433 = vunpack.c.l.b16 %v233
    %v1434 = vunpack.c.h.b16 %v233
    %v1435 = vunpack.c.l.b16 %v234
    %v1436 = vunpack.c.h.b16 %v234
    %v1437 = vunpack.c.l.b16 %v235
    %v1438 = vunpack.c.h.b16 %v235
    %v1439 = vunpack.c.l.b16 %v236
    %v1440 = vunpack.c.h.b16 %v236
    %v1441 = vunpack.c.l.b16 %v237
    %v1442 = vunpack.c.h.b16 %v237
    %v1443 = vunpack.c.l.b16 %v238
    %v1444 = vunpack.c.h.b16 %v238
    %v1445 = vunpack.c.l.b16 %v239
    %v1446 = vunpack.c.h.b16 %v239
    %v1447 = vunpack.c.l.b16 %v240
    %v1448 = vunpack.c.h.b16 %v240
    %v1449 = vunpack.c.l.b16 %v241
    %v1450 = vunpack.c.h.b16 %v241
    %v1451 = vunpack.c.l.b16 %v242
    %v1452 = vunpack.c.h.b16 %v242
    %v1453 = vunpack.c.l.b16 %v243
    %v1454 = vunpack.c.h.b16 %v243
    %v1455 = vunpack.c.l.b16 %v244
    %v1456 = vunpack.c.h.b16 %v244
    %v1457 = vunpack.c.l.b16 %v245
    %v1458 = vunpack.c.h.b16 %v245
    %v1459 = vunpack.c.l.b16 %v246
    %v1460 = vunpack.c.h.b16 %v246
    %v1461 = vunpack.c.l.b16 %v247
    %v1462 = vunpack.c.h.b16 %v247
    %v1463 = vunpack.c.l.b16 %v248
    %v1464 = vunpack.c.h.b16 %v248
    %v1465 = vunpack.c.l.b16 %v249
    %v1466 = vunpack.c.h.b16 %v249
    %v1467 = vunpack.c.l.b16 %v250
    %v1468 = vunpack.c.h.b16 %v250
    %v1469 = vunpack.c.l.b16 %v251
    %v1470 = vunpack.c.h.b16 %v251
    %v1471 = vunpack.c.l.b16 %v252
    %v1472 = vunpack.c.h.b16 %v252
    %v1473 = vunpack.c.l.b16 %v253
    %v1474 = vunpack.c.h.b16 %v253
    %v1475 = vunpack.c.l.b16 %v254
    %v1476 = vunpack.c.h.b16 %v254
    %v1477 = vunpack.c.l.b16 %v255
    %v1478 = vunpack.c.h.b16 %v255
    %v1479 = vunpack.c.l.b16 %v256
    %v1480 = vunpack.c.h.b16 %v256
    %v1481 = vunpack.c.l.b16 %v257
    %v1482 = vunpack.c.h.b16 %v257
    %v1483 = vunpack.c.l.b16 %v258
    %v1484 = vunpack.c.h.b16 %v258
    %v1485 = vunpack.c.l.b16 %v259
    %v1486 = vunpack.c.h.b16 %v259
    %v1487 = vunpack.c.l.b16 %v260
    %v1488 = vunpack.c.h.b16 %v260
    %v1489 = vunpack.c.l.b16 %v261
    %v1490 = vunpack.c.h.b16 %v261
    %v1491 = vunpack.c.l.b16 %v262
    %v1492 = vunpack.c.h.b16 %v262
    %v1493 = vunpack.c.l.b16 %v263
    %v1494 = vunpack.c.h.b16 %v263
    %v1495 = vunpack.c.l.b16 %v264
    %v1496 = vunpack.c.h.b16 %v264
    %v1497 = vunpack.c.l.b16 %v265
    %v1498 = vunpack.c.h.b16 %v265
    %v1499 = vunpack.c.l.b16 %v266
    %v1500 = vunpack.c.h.b16 %v266
    %v1501 = vunpack.c.l.b16 %v267
    %v1502 = vunpack.c.h.b16 %v267
    %v1503 = vunpack.c.l.b16 %v268
    %v1504 = vunpack.c.h.b16 %v268
    %v1505 = vunpack.c.l.b16 %v269
    %v1506 = vunpack.c.h.b16 %v269
    %v1507 = vunpack.c.l.b16 %v270
    %v1508 = vunpack.c.h.b16 %v270
    %v1509 = vunpack.c.l.b16 %v271
    %v1510 = vunpack.c.h.b16 %v271
    %v1511 = vunpack.c.l.b16 %v272
    %v1512 = vunpack.c.h.b16 %v272
    %v1513 = vunpack.c.l.b16 %v273
    %v1514 = vunpack.c.h.b16 %v273
    %v1515 = vunpack.c.l.b16 %v274
    %v1516 = vunpack.c.h.b16 %v274
    %v1517 = vunpack.c.l.b16 %v275
    %v1518 = vunpack.c.h.b16 %v275
    %v1519 = vunpack.c.l.b16 %v276
    %v1520 = vunpack.c.h.b16 %v276
    %v1521 = vunpack.c.l.b16 %v277
    %v1522 = vunpack.c.h.b16 %v277
    %v1523 = vunpack.c.l.b16 %v278
    %v1524 = vunpack.c.h.b16 %v278
    %v1525 = vunpack.c.l.b16 %v279
    %v1526 = vunpack.c.h.b16 %v279
    %v1527 = vunpack.c.l.b16 %v280
    %v1528 = vunpack.c.h.b16 %v280
    %v1529 = vunpack.c.l.b16 %v281
    %v1530 = vunpack.c.h.b16 %v281
    %v1531 = vunpack.c.l.b16 %v282
    %v1532 = vunpack.c.h.b16 %v282
    %v1533 = vunpack.c.l.b16 %v283
    %v1534 = vunpack.c.h.b16 %v283
    %v1535 = vunpack.c.l.b16 %v284
    %v1536 = vunpack.c.h.b16 %v284
    %v1537 = vunpack.c.l.b16 %v285
    %v1538 = vunpack.c.h.b16 %v285
    %v1539 = vunpack.c.l.b16 %v286
    %v1540 = vunpack.c.h.b16 %v286
    %v1541 = vunpack.c.l.b16 %v287
    %v1542 = vunpack.c.h.b16 %v287
    %v1543 = vunpack.c.l.b16 %v288
    %v1544 = vunpack.c.h.b16 %v288
    %v1545 = vunpack.c.l.b16 %v289
    %v1546 = vunpack.c.h.b16 %v289
    %v1547 = vunpack.c.l.b16 %v290
    %v1548 = vunpack.c.h.b16 %v290
    %v1549 = vunpack.c.l.b16 %v291
    %v1550 = vunpack.c.h.b16 %v291
    %v1551 = vunpack.c.l.b16 %v292
    %v1552 = vunpack.c.h.b16 %v292
    %v1553 = vunpack.c.l.b16 %v293
    %v1554 = vunpack.c.h.b16 %v293
    %v1555 = vunpack.c.l.b16 %v294
    %v1556 = vunpack.c.h.b16 %v294
    %v1557 = vunpack.c.l.b16 %v295
    %v1558 = vunpack.c.h.b16 %v295
    %v1559 = vunpack.c.l.b16 %v296
    %v1560 = vunpack.c.h.b16 %v296
    %v1561 = vunpack.c.l.b16 %v297
    %v1562 = vunpack.c.h.b16 %v297
    %v1563 = vunpack.c.l.b16 %v298
    %v1564 = vunpack.c.h.b16 %v298
    %v1565 = vunpack.c.l.b16 %v299
    %v1566 = vunpack.c.h.b16 %v299
    %v1567 = vunpack.c.l.b16 %v300
    %v1568 = vunpack.c.h.b16 %v300
    %v1569 = vunpack.c.l.b16 %v301
    %v1570 = vunpack.c.h.b16 %v301
    %v1571 = vunpack.c.l.b16 %v302
    %v1572 = vunpack.c.h.b16 %v302
    %v1573 = vunpack.c.l.b16 %v303
    %v1574 = vunpack.c.h.b16 %v303
    %v1575 = vunpack.c.l.b16 %v304
    %v1576 = vunpack.c.h.b16 %v304
    %v1577 = vunpack.c.l.b16 %v305
    %v1578 = vunpack.c.h.b16 %v305
    %v1579 = vunpack.c.l.b16 %v306
    %v1580 = vunpack.c.h.b16 %v306
    %v1581 = vunpack.c.l.b16 %v307
    %v1582 = vunpack.c.h.b16 %v307
    %v1583 = vunpack.c.l.b16 %v308
    %v1584 = vunpack.c.h.b16 %v308
    %v1585 = vunpack.c.l.b16 %v309
    %v1586 = vunpack.c.h.b16 %v309
    %v1587 = vunpack.c.l.b16 %v310
    %v1588 = vunpack.c.h.b16 %v310
    %v1589 = vunpack.c.l.b16 %v311
    %v1590 = vunpack.c.h.b16 %v311
    %v1591 = vunpack.c.l.b16 %v312
    %v1592 = vunpack.c.h.b16 %v312
    %v1593 = vunpack.c.l.b16 %v313
    %v1594 = vunpack.c.h.b16 %v313
    %v1595 = vunpack.c.l.b16 %v314
    %v1596 = vunpack.c.h.b16 %v314
    %v1597 = vunpack.c.l.b16 %v315
    %v1598 = vunpack.c.h.b16 %v315
    %v1599 = vunpack.c.l.b16 %v316
    %v1600 = vunpack.c.h.b16 %v316
    %v1601 = vunpack.c.l.b16 %v317
    %v1602 = vunpack.c.h.b16 %v317
    %v1603 = vunpack.c.l.b16 %v318
    %v1604 = vunpack.c.h.b16 %v318
    %v1605 = vunpack.c.l.b16 %v319
    %v1606 = vunpack.c.h.b16 %v319
    %v1607 = vunpack.c.l.b16 %v320
    %v1608 = vunpack.c.h.b16 %v320
    %v1609 = vunpack.c.l.b16 %v321
    %v1610 = vunpack.c.h.b16 %v321
    %v1611 = vunpack.c.l.b16 %v322
    %v1612 = vunpack.c.h.b16 %v322
    %v1613 = vunpack.c.l.b16 %v323
    %v1614 = vunpack.c.h.b16 %v323
    %v1615 = vunpack.c.l.b16 %v324
    %v1616 = vunpack.c.h.b16 %v324
    %v1617 = vunpack.c.l.b16 %v325
    %v1618 = vunpack.c.h.b16 %v325
    %v1619 = vunpack.c.l.b16 %v326
    %v1620 = vunpack.c.h.b16 %v326
    %v1621 = vunpack.c.l.b16 %v327
    %v1622 = vunpack.c.h.b16 %v327
    %v1623 = vunpack.c.l.b16 %v328
    %v1624 = vunpack.c.h.b16 %v328
    %v1625 = vunpack.c.l.b16 %v329
    %v1626 = vunpack.c.h.b16 %v329
    %v1627 = vunpack.c.l.b16 %v330
    %v1628 = vunpack.c.h.b16 %v330
    %v1629 = vunpack.c.l.b16 %v331
    %v1630 = vunpack.c.h.b16 %v331
    %v1631 = vunpack.c.l.b16 %v332
    %v1632 = vunpack.c.h.b16 %v332
    %v1633 = vunpack.c.l.b16 %v333
    %v1634 = vunpack.c.h.b16 %v333
    %v1635 = vunpack.c.l.b16 %v334
    %v1636 = vunpack.c.h.b16 %v334
    %v1637 = vunpack.c.l.b16 %v335
    %v1638 = vunpack.c.h.b16 %v335
    %v1639 = vunpack.c.l.b16 %v336
    %v1640 = vunpack.c.h.b16 %v336
    %v1641 = vunpack.c.l.b16 %v337
    %v1642 = vunpack.c.h.b16 %v337
    %v1643 = vunpack.c.l.b16 %v338
    %v1644 = vunpack.c.h.b16 %v338
    %v1645 = vunpack.c.l.b16 %v339
    %v1646 = vunpack.c.h.b16 %v339
    %v1647 = vunpack.c.l.b16 %v340
    %v1648 = vunpack.c.h.b16 %v340
    %v1649 = vunpack.c.l.b16 %v341
    %v1650 = vunpack.c.h.b16 %v341
    %v1651 = vunpack.c.l.b16 %v342
    %v1652 = vunpack.c.h.b16 %v342
    %v1653 = vunpack.c.l.b16 %v343
    %v1654 = vunpack.c.h.b16 %v343
    %v1655 = vunpack.c.l.b16 %v344
    %v1656 = vunpack.c.h.b16 %v344
    %v1657 = vunpack.c.l.b16 %v345
    %v1658 = vunpack.c.h.b16 %v345
    %v1659 = vunpack.c.l.b16 %v346
    %v1660 = vunpack.c.h.b16 %v346
    %v1661 = vunpack.c.l.b16 %v347
    %v1662 = vunpack.c.h.b16 %v347
    %v1663 = vunpack.c.l.b16 %v348
    %v1664 = vunpack.c.h.b16 %v348
    %v1665 = vunpack.c.l.b16 %v349
    %v1666 = vunpack.c.h.b16 %v349
    %v1667 = vunpack.c.l.b16 %v350
    %v1668 = vunpack.c.h.b16 %v350
    %v1669 = vunpack.c.l.b16 %v351
    %v1670 = vunpack.c.h.b16 %v351
    %v1671 = vunpack.c.l.b16 %v352
    %v1672 = vunpack.c.h.b16 %v352
    %v1673 = vunpack.c.l.b16 %v353
    %v1674 = vunpack.c.h.b16 %v353
    %v1675 = vunpack.c.l.b16 %v354
    %v1676 = vunpack.c.h.b16 %v354
    %v1677 = vunpack.c.l.b16 %v355
    %v1678 = vunpack.c.h.b16 %v355
    %v1679 = vunpack.c.l.b16 %v356
    %v1680 = vunpack.c.h.b16 %v356
    %v1681 = vunpack.c.l.b16 %v357
    %v1682 = vunpack.c.h.b16 %v357
    %v1683 = vunpack.c.l.b16 %v358
    %v1684 = vunpack.c.h.b16 %v358
    %v1685 = vunpack.c.l.b16 %v359
    %v1686 = vunpack.c.h.b16 %v359
    %v1687 = vunpack.c.l.b16 %v360
    %v1688 = vunpack.c.h.b16 %v360
    %v1689 = vunpack.c.l.b16 %v361
    %v1690 = vunpack.c.h.b16 %v361
    %v1691 = vunpack.c.l.b16 %v362
    %v1692 = vunpack.c.h.b16 %v362
    %v1693 = vunpack.c.l.b16 %v363
    %v1694 = vunpack.c.h.b16 %v363
    %v1695 = vunpack.c.l.b16 %v364
    %v1696 = vunpack.c.h.b16 %v364
    %v1697 = vunpack.c.l.b16 %v365
    %v1698 = vunpack.c.h.b16 %v365
    %v1699 = vunpack.c.l.b16 %v366
    %v1700 = vunpack.c.h.b16 %v366
    %v1701 = vunpack.c.l.b16 %v367
    %v1702 = vunpack.c.h.b16 %v367
    %v1703 = vunpack.c.l.b16 %v368
    %v1704 = vunpack.c.h.b16 %v368
    %v1705 = vunpack.c.l.b16 %v369
    %v1706 = vunpack.c.h.b16 %v369
    %v1707 = vunpack.c.l.b16 %v370
    %v1708 = vunpack.c.h.b16 %v370
    %v1709 = vunpack.c.l.b16 %v371
    %v1710 = vunpack.c.h.b16 %v371
    %v1711 = vunpack.c.l.b16 %v372
    %v1712 = vunpack.c.h.b16 %v372
    %v1713 = vunpack.c.l.b16 %v373
    %v1714 = vunpack.c.h.b16 %v373
    %v1715 = vunpack.c.l.b16 %v374
    %v1716 = vunpack.c.h.b16 %v374
    %v1717 = vunpack.c.l.b16 %v375
    %v1718 = vunpack.c.h.b16 %v375
    %v1719 = vunpack.c.l.b16 %v376
    %v1720 = vunpack.c.h.b16 %v376
    %v1721 = vunpack.c.l.b16 %v377
    %v1722 = vunpack.c.h.b16 %v377
    %v1723 = vunpack.c.l.b16 %v378
    %v1724 = vunpack.c.h.b16 %v378
    %v1725 = vunpack.c.l.b16 %v379
    %v1726 = vunpack.c.h.b16 %v379
    %v1727 = vunpack.c.l.b16 %v380
    %v1728 = vunpack.c.h.b16 %v380
    %v1729 = vunpack.c.l.b16 %v381
    %v1730 = vunpack.c.h.b16 %v381
    %v1731 = vunpack.c.l.b16 %v382
    %v1732 = vunpack.c.h.b16 %v382
    %v1733 = vunpack.c.l.b16 %v383
    %v1734 = vunpack.c.h.b16 %v383
    %v1735 = vunpack.c.l.b16 %v384
    %v1736 = vunpack.c.h.b16 %v384
    %v1737 = vunpack.c.l.b16 %v385
    %v1738 = vunpack.c.h.b16 %v385
    %v1739 = vunpack.c.l.b16 %v386
    %v1740 = vunpack.c.h.b16 %v386
    %v1741 = vunpack.c.l.b16 %v387
    %v1742 = vunpack.c.h.b16 %v387
    %v1743 = vunpack.c.l.b16 %v388
    %v1744 = vunpack.c.h.b16 %v388
    %v1745 = vunpack.c.l.b16 %v389
    %v1746 = vunpack.c.h.b16 %v389
    %v1747 = vunpack.c.l.b16 %v390
    %v1748 = vunpack.c.h.b16 %v390
    %v1749 = vunpack.c.l.b16 %v391
    %v1750 = vunpack.c.h.b16 %v391
    %v1751 = vunpack.c.l.b16 %v392
    %v1752 = vunpack.c.h.b16 %v392
    %v1753 = vunpack.c.l.b16 %v393
    %v1754 = vunpack.c.h.b16 %v393
    %v1755 = vunpack.c.l.b16 %v394
    %v1756 = vunpack.c.h.b16 %v394
    %v1757 = vunpack.c.l.b16 %v395
    %v1758 = vunpack.c.h.b16 %v395
    %v1759 = vunpack.c.l.b16 %v396
    %v1760 = vunpack.c.h.b16 %v396
    %v1761 = vunpack.c.l.b16 %v397
    %v1762 = vunpack.c.h.b16 %v397
    %v1763 = vunpack.c.l.b16 %v398
    %v1764 = vunpack.c.h.b16 %v398
    %v1765 = vunpack.c.l.b16 %v399
    %v1766 = vunpack.c.h.b16 %v399
    %v1767 = vunpack.c.l.b16 %v400
    %v1768 = vunpack.c.h.b16 %v400
    %v1769 = vunpack.c.l.b16 %v401
    %v1770 = vunpack.c.h.b16 %v401
    %v1771 = vunpack.c.l.b16 %v402
    %v1772 = vunpack.c.h.b16 %v402
    %v1773 = vunpack.c.l.b16 %v403
    %v1774 = vunpack.c.h.b16 %v403
    %v1775 = vunpack.c.l.b16 %v404
    %v1776 = vunpack.c.h.b16 %v404
    %v1777 = vunpack.c.l.b16 %v405
    %v1778 = vunpack.c.h.b16 %v405
    %v1779 = vunpack.c.l.b16 %v406
    %v1780 = vunpack.c.h.b16 %v406
    %v1781 = vunpack.c.l.b16 %v407
    %v1782 = vunpack.c.h.b16 %v407
    %v1783 = vunpack.c.l.b16 %v408
    %v1784 = vunpack.c.h.b16 %v408
    %v1785 = vunpack.c.l.b16 %v409
    %v1786 = vunpack.c.h.b16 %v409
    %v1787 = vunpack.c.l.b16 %v410
    %v1788 = vunpack.c.h.b16 %v410
    %v1789 = vunpack.c.l.b16 %v411
    %v1790 = vunpack.c.h.b16 %v411
    %v1791 = vunpack.c.l.b16 %v412
    %v1792 = vunpack.c.h.b16 %v412
    %v1793 = vunpack.c.l.b16 %v413
    %v1794 = vunpack.c.h.b16 %v413
    %v1795 = vunpack.c.l.b16 %v414
    %v1796 = vunpack.c.h.b16 %v414
    %v1797 = vunpack.c.l.b16 %v415
    %v1798 = vunpack.c.h.b16 %v415
    %v1799 = vunpack.c.l.b16 %v416
    %v1800 = vunpack.c.h.b16 %v416
    %v1801 = vunpack.c.l.b16 %v417
    %v1802 = vunpack.c.h.b16 %v417
    %v1803 = vunpack.c.l.b16 %v418
    %v1804 = vunpack.c.h.b16 %v418
    %v1805 = vunpack.c.l.b16 %v419
    %v1806 = vunpack.c.h.b16 %v419
    %v1807 = vunpack.c.l.b16 %v420
    %v1808 = vunpack.c.h.b16 %v420
    %v1809 = vunpack.c.l.b16 %v421
    %v1810 = vunpack.c.h.b16 %v421
    %v1811 = vunpack.c.l.b16 %v422
    %v1812 = vunpack.c.h.b16 %v422
    %v1813 = vunpack.c.l.b16 %v423
    %v1814 = vunpack.c.h.b16 %v423
    %v1815 = vunpack.c.l.b16 %v424
    %v1816 = vunpack.c.h.b16 %v424
    %v1817 = vunpack.c.l.b16 %v425
    %v1818 = vunpack.c.h.b16 %v425
    %v1819 = vunpack.c.l.b16 %v426
    %v1820 = vunpack.c.h.b16 %v426
    %v1821 = vunpack.c.l.b16 %v427
    %v1822 = vunpack.c.h.b16 %v427
    %v1823 = vunpack.c.l.b16 %v428
    %v1824 = vunpack.c.h.b16 %v428
    %v1825 = vunpack.c.l.b16 %v429
    %v1826 = vunpack.c.h.b16 %v429
    %v1827 = vunpack.c.l.b16 %v430
    %v1828 = vunpack.c.h.b16 %v430
    %v1829 = vunpack.c.l.b16 %v431
    %v1830 = vunpack.c.h.b16 %v431
    %v1831 = vunpack.c.l.b16 %v432
    %v1832 = vunpack.c.h.b16 %v432
    %v1833 = vunpack.c.l.b16 %v433
    %v1834 = vunpack.c.h.b16 %v433
    %v1835 = vunpack.c.l.b16 %v434
    %v1836 = vunpack.c.h.b16 %v434
    %v1837 = vunpack.c.l.b16 %v435
    %v1838 = vunpack.c.h.b16 %v435
    %v1839 = vunpack.c.l.b16 %v436
    %v1840 = vunpack.c.h.b16 %v436
    %v1841 = vunpack.c.l.b16 %v437
    %v1842 = vunpack.c.h.b16 %v437
    %v1843 = vunpack.c.l.b16 %v438
    %v1844 = vunpack.c.h.b16 %v438
    %v1845 = vunpack.c.l.b16 %v439
    %v1846 = vunpack.c.h.b16 %v439
    %v1847 = vunpack.c.l.b16 %v440
    %v1848 = vunpack.c.h.b16 %v440
    %v1849 = vunpack.c.l.b16 %v441
    %v1850 = vunpack.c.h.b16 %v441
    %v1851 = vunpack.c.l.b16 %v442
    %v1852 = vunpack.c.h.b16 %v442
    %v1853 = vunpack.c.l.b16 %v443
    %v1854 = vunpack.c.h.b16 %v443
    %v1855 = vunpack.c.l.b16 %v444
    %v1856 = vunpack.c.h.b16 %v444
    %v1857 = vunpack.c.l.b16 %v445
    %v1858 = vunpack.c.h.b16 %v445
    %v1859 = vunpack.c.l.b16 %v446
    %v1860 = vunpack.c.h.b16 %v446
    %v1861 = vunpack.c.l.b16 %v447
    %v1862 = vunpack.c.h.b16 %v447
    %v1863 = vunpack.c.l.b16 %v448
    %v1864 = vunpack.c.h.b16 %v448
    %v1865 = vunpack.c.l.b16 %v449
    %v1866 = vunpack.c.h.b16 %v449
    %v1867 = vunpack.c.l.b16 %v450
    %v1868 = vunpack.c.h.b16 %v450
    %v1869 = vunpack.c.l.b16 %v451
    %v1870 = vunpack.c.h.b16 %v451
    %v1871 = vunpack.c.l.b16 %v452
    %v1872 = vunpack.c.h.b16 %v452
    %v1873 = vunpack.c.l.b16 %v453
    %v1874 = vunpack.c.h.b16 %v453
    %v1875 = vunpack.c.l.b16 %v454
    %v1876 = vunpack.c.h.b16 %v454
    %v1877 = vunpack.c.l.b16 %v455
    %v1878 = vunpack.c.h.b16 %v455
    %v1879 = vunpack.c.l.b16 %v456
    %v1880 = vunpack.c.h.b16 %v456
    %v1881 = vunpack.c.l.b16 %v457
    %v1882 = vunpack.c.h.b16 %v457
    %v1883 = vunpack.c.l.b16 %v458
    %v1884 = vunpack.c.h.b16 %v458
    %v1885 = vunpack.c.l.b16 %v459
    %v1886 = vunpack.c.h.b16 %v459
    %v1887 = vunpack.c.l.b16 %v460
    %v1888 = vunpack.c.h.b16 %v460
    %v1889 = vunpack.c.l.b16 %v461
    %v1890 = vunpack.c.h.b16 %v461
    %v1891 = vunpack.c.l.b16 %v462
    %v1892 = vunpack.c.h.b16 %v462
    %v1893 = vunpack.c.l.b16 %v463
    %v1894 = vunpack.c.h.b16 %v463
    %v1895 = vunpack.c.l.b16 %v464
    %v1896 = vunpack.c.h.b16 %v464
    %v1897 = vunpack.c.l.b16 %v465
    %v1898 = vunpack.c.h.b16 %v465
    %v1899 = vunpack.c.l.b16 %v466
    %v1900 = vunpack.c.h.b16 %v466
    %v1901 = vunpack.c.l.b16 %v467
    %v1902 = vunpack.c.h.b16 %v467
    %v1903 = vunpack.c.l.b16 %v468
    %v1904 = vunpack.c.h.b16 %v468
    %v1905 = vunpack.c.l.b16 %v469
    %v1906 = vunpack.c.h.b16 %v469
    %v1907 = vunpack.c.l.b16 %v470
    %v1908 = vunpack.c.h.b16 %v470
    %v1909 = vunpack.c.l.b16 %v471
    %v1910 = vunpack.c.h.b16 %v471
    %v1911 = vunpack.c.l.b16 %v472
    %v1912 = vunpack.c.h.b16 %v472
    %v1913 = vunpack.c.l.b16 %v473
    %v1914 = vunpack.c.h.b16 %v473
    %v1915 = vunpack.c.l.b16 %v474
    %v1916 = vunpack.c.h.b16 %v474
    %v1917 = vunpack.c.l.b16 %v475
    %v1918 = vunpack.c.h.b16 %v475
    %v1919 = vunpack.c.l.b16 %v476
    %v1920 = vunpack.c.h.b16 %v476
    %v1921 = vunpack.c.l.b16 %v477
    %v1922 = vunpack.c.h.b16 %v477
    %v1923 = vunpack.c.l.b16 %v478
    %v1924 = vunpack.c.h.b16 %v478
    %v1925 = vunpack.c.l.b16 %v479
    %v1926 = vunpack.c.h.b16 %v479
    %v1927 = vunpack.c.l.b16 %v480
    %v1928 = vunpack.c.h.b16 %v480
    %v1929 = vunpack.c.l.b16 %v481
    %v1930 = vunpack.c.h.b16 %v481
    %v1931 = vunpack.c.l.b16 %v482
    %v1932 = vunpack.c.h.b16 %v482
    %v1933 = vunpack.c.l.b16 %v483
    %v1934 = vunpack.c.h.b16 %v483
    %v1935 = vunpack.c.l.b16 %v484
    %v1936 = vunpack.c.h.b16 %v484
    %v1937 = vunpack.c.l.b16 %v485
    %v1938 = vunpack.c.h.b16 %v485
    %v1939 = vunpack.c.l.b16 %v486
    %v1940 = vunpack.c.h.b16 %v486
    %v1941 = vunpack.c.l.b16 %v487
    %v1942 = vunpack.c.h.b16 %v487
    %v1943 = vunpack.c.l.b16 %v488
    %v1944 = vunpack.c.h.b16 %v488
    %v1945 = vunpack.c.l.b16 %v489
    %v1946 = vunpack.c.h.b16 %v489
    %v1947 = vunpack.c.l.b16 %v490
    %v1948 = vunpack.c.h.b16 %v490
    %v1949 = vunpack.c.l.b16 %v491
    %v1950 = vunpack.c.h.b16 %v491
    %v1951 = vunpack.c.l.b16 %v492
    %v1952 = vunpack.c.h.b16 %v492
    %v1953 = vunpack.c.l.b16 %v493
    %v1954 = vunpack.c.h.b16 %v493
    %v1955 = vunpack.c.l.b16 %v494
    %v1956 = vunpack.c.h.b16 %v494
    %v1957 = vunpack.c.l.b16 %v495
    %v1958 = vunpack.c.h.b16 %v495
    %v1959 = vunpack.c.l.b16 %v496
    %v1960 = vunpack.c.h.b16 %v496
    %v1961 = vunpack.c.l.b16 %v497
    %v1962 = vunpack.c.h.b16 %v497
    %v1963 = vunpack.c.l.b16 %v498
    %v1964 = vunpack.c.h.b16 %v498
    %v1965 = vunpack.c.l.b16 %v499
    %v1966 = vunpack.c.h.b16 %v499
    %v1967 = vunpack.c.l.b16 %v500
    %v1968 = vunpack.c.h.b16 %v500
    %v1969 = vunpack.c.l.b16 %v501
    %v1970 = vunpack.c.h.b16 %v501
    %v1971 = vunpack.c.l.b16 %v502
    %v1972 = vunpack.c.h.b16 %v502
    %v1973 = vunpack.c.l.b16 %v503
    %v1974 = vunpack.c.h.b16 %v503
    %v1975 = vunpack.c.l.b16 %v504
    %v1976 = vunpack.c.h.b16 %v504
    %v1977 = vunpack.c.l.b16 %v505
    %v1978 = vunpack.c.h.b16 %v505
    %v1979 = vunpack.c.l.b16 %v506
    %v1980 = vunpack.c.h.b16 %v506
    %v1981 = vunpack.c.l.b16 %v507
    %v1982 = vunpack.c.h.b16 %v507
    %v1983 = vunpack.c.l.b16 %v508
    %v1984 = vunpack.c.h.b16 %v508
    %v1985 = vunpack.c.l.b16 %v509
    %v1986 = vunpack.c.h.b16 %v509
    %v1987 = vunpack.c.l.b16 %v510
    %v1988 = vunpack.c.h.b16 %v510
    %v1989 = vunpack.c.l.b16 %v511
    %v1990 = vunpack.c.h.b16 %v511
    %v1991 = vunpack.c.l.b16 %v512
    %v1992 = vunpack.c.h.b16 %v512
    %v1993 = vunpack.c.l.b16 %v513
    %v1994 = vunpack.c.h.b16 %v513
    %v1995 = vunpack.c.l.b16 %v514
    %v1996 = vunpack.c.h.b16 %v514
    %v1997 = vunpack.c.l.b16 %v515
    %v1998 = vunpack.c.h.b16 %v515
    %v1999 = vunpack.c.l.b16 %v516
    %v2000 = vunpack.c.h.b16 %v516
    %v2001 = vunpack.c.l.b16 %v517
    %v2002 = vunpack.c.h.b16 %v517
    %v2003 = vunpack.c.l.b16 %v518
    %v2004 = vunpack.c.h.b16 %v518
    %v2005 = vunpack.c.l.b16 %v519
    %v2006 = vunpack.c.h.b16 %v519
    %v2007 = vunpack.c.l.b16 %v520
    %v2008 = vunpack.c.h.b16 %v520
    %v2009 = vunpack.c.l.b16 %v521
    %v2010 = vunpack.c.h.b16 %v521
    %v2011 = vunpack.c.l.b16 %v522
    %v2012 = vunpack.c.h.b16 %v522
    %v2013 = vunpack.c.l.b16 %v523
    %v2014 = vunpack.c.h.b16 %v523
    %v2015 = vunpack.c.l.b16 %v524
    %v2016 = vunpack.c.h.b16 %v524
    %v2017 = vunpack.c.l.b16 %v525
    %v2018 = vunpack.c.h.b16 %v525
    %v2019 = vunpack.c.l.b16 %v526
    %v2020 = vunpack.c.h.b16 %v526
    %v2021 = vunpack.c.l.b16 %v527
    %v2022 = vunpack.c.h.b16 %v527
    %v2023 = vunpack.c.l.b16 %v528
    %v2024 = vunpack.c.h.b16 %v528
    %v2025 = vunpack.c.l.b16 %v529
    %v2026 = vunpack.c.h.b16 %v529
    %v2027 = vunpack.c.l.b16 %v530
    %v2028 = vunpack.c.h.b16 %v530
    %v2029 = vunpack.c.l.b16 %v531
    %v2030 = vunpack.c.h.b16 %v531
    %v2031 = vunpack.c.l.b16 %v532
    %v2032 = vunpack.c.h.b16 %v532
    %v2033 = vunpack.c.l.b16 %v533
    %v2034 = vunpack.c.h.b16 %v533
    %v2035 = vunpack.c.l.b16 %v534
    %v2036 = vunpack.c.h.b16 %v534
    %v2037 = vunpack.c.l.b16 %v535
    %v2038 = vunpack.c.h.b16 %v535
    %v2039 = vunpack.c.l.b16 %v536
    %v2040 = vunpack.c.h.b16 %v536
    %v2041 = vunpack.c.l.b16 %v537
    %v2042 = vunpack.c.h.b16 %v537
    %v2043 = vunpack.c.l.b16 %v538
    %v2044 = vunpack.c.h.b16 %v538
    %v2045 = vunpack.c.l.b16 %v539
    %v2046 = vunpack.c.h.b16 %v539
    %v2047 = vunpack.c.l.b16 %v540
    %v2048 = vunpack.c.h.b16 %v540
    %v2049 = vunpack.c.l.b16 %v541
    %v2050 = vunpack.c.h.b16 %v541
    %v2051 = vunpack.c.l.b16 %v542
    %v2052 = vunpack.c.h.b16 %v542
    %v2053 = vunpack.c.l.b16 %v543
    %v2054 = vunpack.c.h.b16 %v543
    %v2055 = vunpack.c.l.b16 %v544
    %v2056 = vunpack.c.h.b16 %v544
    %v2057 = vunpack.c.l.b16 %v545
    %v2058 = vunpack.c.h.b16 %v545
    %v2059 = vunpack.c.l.b16 %v546
    %v2060 = vunpack.c.h.b16 %v546
    %v2061 = vunpack.c.l.b16 %v547
    %v2062 = vunpack.c.h.b16 %v547
    %v2063 = vunpack.c.l.b16 %v548
    %v2064 = vunpack.c.h.b16 %v548
    %v2065 = vunpack.c.l.b16 %v549
    %v2066 = vunpack.c.h.b16 %v549
    %v2067 = vunpack.c.l.b16 %v550
    %v2068 = vunpack.c.h.b16 %v550
    %v2069 = vunpack.c.l.b16 %v551
    %v2070 = vunpack.c.h.b16 %v551
    %v2071 = vunpack.c.l.b16 %v552
    %v2072 = vunpack.c.h.b16 %v552
    %v2073 = vunpack.c.l.b16 %v553
    %v2074 = vunpack.c.h.b16 %v553
    %v2075 = vunpack.c.l.b16 %v554
    %v2076 = vunpack.c.h.b16 %v554
    %v2077 = vunpack.c.l.b16 %v555
    %v2078 = vunpack.c.h.b16 %v555
    %v2079 = vunpack.c.l.b16 %v556
    %v2080 = vunpack.c.h.b16 %v556
    %v2081 = vunpack.c.l.b16 %v557
    %v2082 = vunpack.c.h.b16 %v557
    %v2083 = vunpack.c.l.b16 %v558
    %v2084 = vunpack.c.h.b16 %v558
    %v2085 = vunpack.c.l.b16 %v559
    %v2086 = vunpack.c.h.b16 %v559
    %v2087 = vunpack.c.l.b16 %v560
    %v2088 = vunpack.c.h.b16 %v560
    %v2089 = vunpack.c.l.b16 %v561
    %v2090 = vunpack.c.h.b16 %v561
    %v2091 = vunpack.c.l.b16 %v562
    %v2092 = vunpack.c.h.b16 %v562
    %v2093 = vunpack.c.l.b16 %v563
    %v2094 = vunpack.c.h.b16 %v563
    %v2095 = vunpack.c.l.b16 %v564
    %v2096 = vunpack.c.h.b16 %v564
    %v2097 = vunpack.c.l.b16 %v565
    %v2098 = vunpack.c.h.b16 %v565
    %v2099 = vunpack.c.l.b16 %v566
    %v2100 = vunpack.c.h.b16 %v566
    %v2101 = vunpack.c.l.b16 %v567
    %v2102 = vunpack.c.h.b16 %v567
    %v2103 = vunpack.c.l.b16 %v568
    %v2104 = vunpack.c.h.b16 %v568
    %v2105 = vunpack.c.l.b16 %v569
    %v2106 = vunpack.c.h.b16 %v569
    %v2107 = vunpack.c.l.b16 %v570
    %v2108 = vunpack.c.h.b16 %v570
    %v2109 = vunpack.c.l.b16 %v571
    %v2110 = vunpack.c.h.b16 %v571
    %v2111 = vunpack.c.l.b16 %v572
    %v2112 = vunpack.c.h.b16 %v572
    %v2113 = vunpack.c.l.b16 %v573
    %v2114 = vunpack.c.h.b16 %v573
    %v2115 = vunpack.c.l.b16 %v574
    %v2116 = vunpack.c.h.b16 %v574
    %v2117 = vunpack.c.l.b16 %v575
    %v2118 = vunpack.c.h.b16 %v575
    %v2119 = vunpack.c.l.b16 %v576
    %v2120 = vunpack.c.h.b16 %v576
    %v2121 = vunpack.c.l.b16 %v577
    %v2122 = vunpack.c.h.b16 %v577
    %v2123 = vunpack.c.l.b16 %v578
    %v2124 = vunpack.c.h.b16 %v578
    %v2125 = vunpack.c.l.b16 %v579
    %v2126 = vunpack.c.h.b16 %v579
    %v2127 = vunpack.c.l.b16 %v580
    %v2128 = vunpack.c.h.b16 %v580
    %v2129 = vunpack.c.l.b16 %v581
    %v2130 = vunpack.c.h.b16 %v581
    %v2131 = vunpack.c.l.b16 %v582
    %v2132 = vunpack.c.h.b16 %v582
    %v2133 = vunpack.c.l.b16 %v583
    %v2134 = vunpack.c.h.b16 %v583
    %v2135 = vunpack.c.l.b16 %v584
    %v2136 = vunpack.c.h.b16 %v584
    %v2137 = vunpack.c.l.b16 %v585
    %v2138 = vunpack.c.h.b16 %v585
    %v2139 = vunpack.c.l.b16 %v586
    %v2140 = vunpack.c.h.b16 %v586
    %v2141 = vunpack.c.l.b16 %v587
    %v2142 = vunpack.c.h.b16 %v587
    %v2143 = vunpack.c.l.b16 %v588
    %v2144 = vunpack.c.h.b16 %v588
    %v2145 = vunpack.c.l.b16 %v589
    %v2146 = vunpack.c.h.b16 %v589
    %v2147 = vunpack.c.l.b16 %v590
    %v2148 = vunpack.c.h.b16 %v590
    %v2149 = vunpack.c.l.b16 %v591
    %v2150 = vunpack.c.h.b16 %v591
    %v2151 = vunpack.c.l.b16 %v592
    %v2152 = vunpack.c.h.b16 %v592
    %v2153 = vunpack.c.l.b16 %v593
    %v2154 = vunpack.c.h.b16 %v593
    %v2155 = vunpack.c.l.b16 %v594
    %v2156 = vunpack.c.h.b16 %v594
    %v2157 = vunpack.c.l.b16 %v595
    %v2158 = vunpack.c.h.b16 %v595
    %v2159 = vunpack.c.l.b16 %v596
    %v2160 = vunpack.c.h.b16 %v596
    %v2161 = vunpack.c.l.b16 %v597
    %v2162 = vunpack.c.h.b16 %v597
    %v2163 = vunpack.c.l.b16 %v598
    %v2164 = vunpack.c.h.b16 %v598
    %v2165 = vunpack.c.l.b16 %v599
    %v2166 = vunpack.c.h.b16 %v599
    %v2167 = vunpack.c.l.b16 %v600
    %v2168 = vunpack.c.h.b16 %v600
    %v2169 = vunpack.c.l.b16 %v601
    %v2170 = vunpack.c.h.b16 %v601
    %v2171 = vunpack.c.l.b16 %v602
    %v2172 = vunpack.c.h.b16 %v602
    %v2173 = vunpack.c.l.b16 %v603
    %v2174 = vunpack.c.h.b16 %v603
    %v2175 = vunpack.c.l.b16 %v604
    %v2176 = vunpack.c.h.b16 %v604
    %v2177 = vunpack.c.l.b16 %v605
    %v2178 = vunpack.c.h.b16 %v605
    %v2179 = vunpack.c.l.b16 %v606
    %v2180 = vunpack.c.h.b16 %v606
    %v2181 = vunpack.c.l.b16 %v607
    %v2182 = vunpack.c.h.b16 %v607
    %v2183 = vunpack.c.l.b16 %v608
    %v2184 = vunpack.c.h.b16 %v608
    %v2185 = vunpack.c.l.b16 %v609
    %v2186 = vunpack.c.h.b16 %v609
    %v2187 = vunpack.c.l.b16 %v610
    %v2188 = vunpack.c.h.b16 %v610
    %v2189 = vpack.c.b16 %v1173, %v1165
    %v2190 = vpack.c.b16 %v1174, %v1166
    %v2191 = vpack.c.b16 %v1175, %v1167
    %v2192 = vpack.c.b16 %v1176, %v1168
    %v2193 = vpack.c.b16 %v1177, %v1169
    %v2194 = vpack.c.b16 %v1178, %v1170
    %v2195 = vpack.c.b16 %v1179, %v1171
    %v2196 = vpack.c.b16 %v1180, %v1172
    %v2197 = vpack.c.b16 %v1189, %v1181
    %v2198 = vpack.c.b16 %v1190, %v1182
    %v2199 = vpack.c.b16 %v1191, %v1183
    %v2200 = vpack.c.b16 %v1192, %v1184
    %v2201 = vpack.c.b16 %v1193, %v1185
    %v2202 = vpack.c.b16 %v1194, %v1186
    %v2203 = vpack.c.b16 %v1195, %v1187
    %v2204 = vpack.c.b16 %v1196, %v1188
    %v2205 = vpack.c.b16 %v1205, %v1197
    %v2206 = vpack.c.b16 %v1206, %v1198
    %v2207 = vpack.c.b16 %v1207, %v1199
    %v2208 = vpack.c.b16 %v1208, %v1200
    %v2209 = vpack.c.b16 %v1209, %v1201
    %v2210 = vpack.c.b16 %v1210, %v1202
    %v2211 = vpack.c.b16 %v1211, %v1203
    %v2212 = vpack.c.b16 %v1212, %v1204
    %v2213 = vpack.c.b16 %v1221, %v1213
    %v2214 = vpack.c.b16 %v1222, %v1214
    %v2215 = vpack.c.b16 %v1223, %v1215
    %v2216 = vpack.c.b16 %v1224, %v1216
    %v2217 = vpack.c.b16 %v1225, %v1217
    %v2218 = vpack.c.b16 %v1226, %v1218
    %v2219 = vpack.c.b16 %v1227, %v1219
    %v2220 = vpack.c.b16 %v1228, %v1220
    %v2221 = vpack.c.b16 %v1237, %v1229
    %v2222 = vpack.c.b16 %v1238, %v1230
    %v2223 = vpack.c.b16 %v1239, %v1231
    %v2224 = vpack.c.b16 %v1240, %v1232
    %v2225 = vpack.c.b16 %v1241, %v1233
    %v2226 = vpack.c.b16 %v1242, %v1234
    %v2227 = vpack.c.b16 %v1243, %v1235
    %v2228 = vpack.c.b16 %v1244, %v1236
    %v2229 = vpack.c.b16 %v1253, %v1245
    %v2230 = vpack.c.b16 %v1254, %v1246
    %v2231 = vpack.c.b16 %v1255, %v1247
    %v2232 = vpack.c.b16 %v1256, %v1248
    %v2233 = vpack.c.b16 %v1257, %v1249
    %v2234 = vpack.c.b16 %v1258, %v1250
    %v2235 = vpack.c.b16 %v1259, %v1251
    %v2236 = vpack.c.b16 %v1260, %v1252
    %v2237 = vpack.c.b16 %v1269, %v1261
    %v2238 = vpack.c.b16 %v1270, %v1262
    %v2239 = vpack.c.b16 %v1271, %v1263
    %v2240 = vpack.c.b16 %v1272, %v1264
    %v2241 = vpack.c.b16 %v1273, %v1265
    %v2242 = vpack.c.b16 %v1274, %v1266
    %v2243 = vpack.c.b16 %v1275, %v1267
    %v2244 = vpack.c.b16 %v1276, %v1268
    %v2245 = vpack.c.b16 %v1285, %v1277
    %v2246 = vpack.c.b16 %v1286, %v1278
    %v2247 = vpack.c.b16 %v1287, %v1279
    %v2248 = vpack.c.b16 %v1288, %v1280
    %v2249 = vpack.c.b16 %v1289, %v1281
    %v2250 = vpack.c.b16 %v1290, %v1282
    %v2251 = vpack.c.b16 %v1291, %v1283
    %v2252 = vpack.c.b16 %v1292, %v1284
    %v2253 = vpack.c.b16 %v1301, %v1293
    %v2254 = vpack.c.b16 %v1302, %v1294
    %v2255 = vpack.c.b16 %v1303, %v1295
    %v2256 = vpack.c.b16 %v1304, %v1296
    %v2257 = vpack.c.b16 %v1305, %v1297
    %v2258 = vpack.c.b16 %v1306, %v1298
    %v2259 = vpack.c.b16 %v1307, %v1299
    %v2260 = vpack.c.b16 %v1308, %v1300
    %v2261 = vpack.c.b16 %v1317, %v1309
    %v2262 = vpack.c.b16 %v1318, %v1310
    %v2263 = vpack.c.b16 %v1319, %v1311
    %v2264 = vpack.c.b16 %v1320, %v1312
    %v2265 = vpack.c.b16 %v1321, %v1313
    %v2266 = vpack.c.b16 %v1322, %v1314
    %v2267 = vpack.c.b16 %v1323, %v1315
    %v2268 = vpack.c.b16 %v1324, %v1316
    %v2269 = vpack.c.b16 %v1333, %v1325
    %v2270 = vpack.c.b16 %v1334, %v1326
    %v2271 = vpack.c.b16 %v1335, %v1327
    %v2272 = vpack.c.b16 %v1336, %v1328
    %v2273 = vpack.c.b16 %v1337, %v1329
    %v2274 = vpack.c.b16 %v1338, %v1330
    %v2275 = vpack.c.b16 %v1339, %v1331
    %v2276 = vpack.c.b16 %v1340, %v1332
    %v2277 = vpack.c.b16 %v1349, %v1341
    %v2278 = vpack.c.b16 %v1350, %v1342
    %v2279 = vpack.c.b16 %v1351, %v1343
    %v2280 = vpack.c.b16 %v1352, %v1344
    %v2281 = vpack.c.b16 %v1353, %v1345
    %v2282 = vpack.c.b16 %v1354, %v1346
    %v2283 = vpack.c.b16 %v1355, %v1347
    %v2284 = vpack.c.b16 %v1356, %v1348
    %v2285 = vpack.c.b16 %v1365, %v1357
    %v2286 = vpack.c.b16 %v1366, %v1358
    %v2287 = vpack.c.b16 %v1367, %v1359
    %v2288 = vpack.c.b16 %v1368, %v1360
    %v2289 = vpack.c.b16 %v1369, %v1361
    %v2290 = vpack.c.b16 %v1370, %v1362
    %v2291 = vpack.c.b16 %v1371, %v1363
    %v2292 = vpack.c.b16 %v1372, %v1364
    %v2293 = vpack.c.b16 %v1381, %v1373
    %v2294 = vpack.c.b16 %v1382, %v1374
    %v2295 = vpack.c.b16 %v1383, %v1375
    %v2296 = vpack.c.b16 %v1384, %v1376
    %v2297 = vpack.c.b16 %v1385, %v1377
    %v2298 = vpack.c.b16 %v1386, %v1378
    %v2299 = vpack.c.b16 %v1387, %v1379
    %v2300 = vpack.c.b16 %v1388, %v1380
    %v2301 = vpack.c.b16 %v1397, %v1389
    %v2302 = vpack.c.b16 %v1398, %v1390
    %v2303 = vpack.c.b16 %v1399, %v1391
    %v2304 = vpack.c.b16 %v1400, %v1392
    %v2305 = vpack.c.b16 %v1401, %v1393
    %v2306 = vpack.c.b16 %v1402, %v1394
    %v2307 = vpack.c.b16 %v1403, %v1395
    %v2308 = vpack.c.b16 %v1404, %v1396
    %v2309 = vpack.c.b16 %v1413, %v1405
    %v2310 = vpack.c.b16 %v1414, %v1406
    %v2311 = vpack.c.b16 %v1415, %v1407
    %v2312 = vpack.c.b16 %v1416, %v1408
    %v2313 = vpack.c.b16 %v1417, %v1409
    %v2314 = vpack.c.b16 %v1418, %v1410
    %v2315 = vpack.c.b16 %v1419, %v1411
    %v2316 = vpack.c.b16 %v1420, %v1412
    %v2317 = vpack.c.b16 %v1429, %v1421
    %v2318 = vpack.c.b16 %v1430, %v1422
    %v2319 = vpack.c.b16 %v1431, %v1423
    %v2320 = vpack.c.b16 %v1432, %v1424
    %v2321 = vpack.c.b16 %v1433, %v1425
    %v2322 = vpack.c.b16 %v1434, %v1426
    %v2323 = vpack.c.b16 %v1435, %v1427
    %v2324 = vpack.c.b16 %v1436, %v1428
    %v2325 = vpack.c.b16 %v1445, %v1437
    %v2326 = vpack.c.b16 %v1446, %v1438
    %v2327 = vpack.c.b16 %v1447, %v1439
    %v2328 = vpack.c.b16 %v1448, %v1440
    %v2329 = vpack.c.b16 %v1449, %v1441
    %v2330 = vpack.c.b16 %v1450, %v1442
    %v2331 = vpack.c.b16 %v1451, %v1443
    %v2332 = vpack.c.b16 %v1452, %v1444
    %v2333 = vpack.c.b16 %v1461, %v1453
    %v2334 = vpack.c.b16 %v1462, %v1454
    %v2335 = vpack.c.b16 %v1463, %v1455
    %v2336 = vpack.c.b16 %v1464, %v1456
    %v2337 = vpack.c.b16 %v1465, %v1457
    %v2338 = vpack.c.b16 %v1466, %v1458
    %v2339 = vpack.c.b16 %v1467, %v1459
    %v2340 = vpack.c.b16 %v1468, %v1460
    %v2341 = vpack.c.b16 %v1477, %v1469
    %v2342 = vpack.c.b16 %v1478, %v1470
    %v2343 = vpack.c.b16 %v1479, %v1471
    %v2344 = vpack.c.b16 %v1480, %v1472
    %v2345 = vpack.c.b16 %v1481, %v1473
    %v2346 = vpack.c.b16 %v1482, %v1474
    %v2347 = vpack.c.b16 %v1483, %v1475
    %v2348 = vpack.c.b16 %v1484, %v1476
    %v2349 = vpack.c.b16 %v1493, %v1485
    %v2350 = vpack.c.b16 %v1494, %v1486
    %v2351 = vpack.c.b16 %v1495, %v1487
    %v2352 = vpack.c.b16 %v1496, %v1488
    %v2353 = vpack.c.b16 %v1497, %v1489
    %v2354 = vpack.c.b16 %v1498, %v1490
    %v2355 = vpack.c.b16 %v1499, %v1491
    %v2356 = vpack.c.b16 %v1500, %v1492
    %v2357 = vpack.c.b16 %v1509, %v1501
    %v2358 = vpack.c.b16 %v1510, %v1502
    %v2359 = vpack.c.b16 %v1511, %v1503
    %v2360 = vpack.c.b16 %v1512, %v1504
    %v2361 = vpack.c.b16 %v1513, %v1505
    %v2362 = vpack.c.b16 %v1514, %v1506
    %v2363 = vpack.c.b16 %v1515, %v1507
    %v2364 = vpack.c.b16 %v1516, %v1508
    %v2365 = vpack.c.b16 %v1525, %v1517
    %v2366 = vpack.c.b16 %v1526, %v1518
    %v2367 = vpack.c.b16 %v1527, %v1519
    %v2368 = vpack.c.b16 %v1528, %v1520
    %v2369 = vpack.c.b16 %v1529, %v1521
    %v2370 = vpack.c.b16 %v1530, %v1522
    %v2371 = vpack.c.b16 %v1531, %v1523
    %v2372 = vpack.c.b16 %v1532, %v1524
    %v2373 = vpack.c.b16 %v1541, %v1533
    %v2374 = vpack.c.b16 %v1542, %v1534
    %v2375 = vpack.c.b16 %v1543, %v1535
    %v2376 = vpack.c.b16 %v1544, %v1536
    %v2377 = vpack.c.b16 %v1545, %v1537
    %v2378 = vpack.c.b16 %v1546, %v1538
    %v2379 = vpack.c.b16 %v1547, %v1539
    %v2380 = vpack.c.b16 %v1548, %v1540
    %v2381 = vpack.c.b16 %v1557, %v1549
    %v2382 = vpack.c.b16 %v1558, %v1550
    %v2383 = vpack.c.b16 %v1559, %v1551
    %v2384 = vpack.c.b16 %v1560, %v1552
    %v2385 = vpack.c.b16 %v1561, %v1553
    %v2386 = vpack.c.b16 %v1562, %v1554
    %v2387 = vpack.c.b16 %v1563, %v1555
    %v2388 = vpack.c.b16 %v1564, %v1556
    %v2389 = vpack.c.b16 %v1573, %v1565
    %v2390 = vpack.c.b16 %v1574, %v1566
    %v2391 = vpack.c.b16 %v1575, %v1567
    %v2392 = vpack.c.b16 %v1576, %v1568
    %v2393 = vpack.c.b16 %v1577, %v1569
    %v2394 = vpack.c.b16 %v1578, %v1570
    %v2395 = vpack.c.b16 %v1579, %v1571
    %v2396 = vpack.c.b16 %v1580, %v1572
    %v2397 = vpack.c.b16 %v1589, %v1581
    %v2398 = vpack.c.b16 %v1590, %v1582
    %v2399 = vpack.c.b16 %v1591, %v1583
    %v2400 = vpack.c.b16 %v1592, %v1584
    %v2401 = vpack.c.b16 %v1593, %v1585
    %v2402 = vpack.c.b16 %v1594, %v1586
    %v2403 = vpack.c.b16 %v1595, %v1587
    %v2404 = vpack.c.b16 %v1596, %v1588
    %v2405 = vpack.c.b16 %v1605, %v1597
    %v2406 = vpack.c.b16 %v1606, %v1598
    %v2407 = vpack.c.b16 %v1607, %v1599
    %v2408 = vpack.c.b16 %v1608, %v1600
    %v2409 = vpack.c.b16 %v1609, %v1601
    %v2410 = vpack.c.b16 %v1610, %v1602
    %v2411 = vpack.c.b16 %v1611, %v1603
    %v2412 = vpack.c.b16 %v1612, %v1604
    %v2413 = vpack.c.b16 %v1621, %v1613
    %v2414 = vpack.c.b16 %v1622, %v1614
    %v2415 = vpack.c.b16 %v1623, %v1615
    %v2416 = vpack.c.b16 %v1624, %v1616
    %v2417 = vpack.c.b16 %v1625, %v1617
    %v2418 = vpack.c.b16 %v1626, %v1618
    %v2419 = vpack.c.b16 %v1627, %v1619
    %v2420 = vpack.c.b16 %v1628, %v1620
    %v2421 = vpack.c.b16 %v1637, %v1629
    %v2422 = vpack.c.b16 %v1638, %v1630
    %v2423 = vpack.c.b16 %v1639, %v1631
    %v2424 = vpack.c.b16 %v1640, %v1632
    %v2425 = vpack.c.b16 %v1641, %v1633
    %v2426 = vpack.c.b16 %v1642, %v1634
    %v2427 = vpack.c.b16 %v1643, %v1635
    %v2428 = vpack.c.b16 %v1644, %v1636
    %v2429 = vpack.c.b16 %v1653, %v1645
    %v2430 = vpack.c.b16 %v1654, %v1646
    %v2431 = vpack.c.b16 %v1655, %v1647
    %v2432 = vpack.c.b16 %v1656, %v1648
    %v2433 = vpack.c.b16 %v1657, %v1649
    %v2434 = vpack.c.b16 %v1658, %v1650
    %v2435 = vpack.c.b16 %v1659, %v1651
    %v2436 = vpack.c.b16 %v1660, %v1652
    %v2437 = vpack.c.b16 %v1669, %v1661
    %v2438 = vpack.c.b16 %v1670, %v1662
    %v2439 = vpack.c.b16 %v1671, %v1663
    %v2440 = vpack.c.b16 %v1672, %v1664
    %v2441 = vpack.c.b16 %v1673, %v1665
    %v2442 = vpack.c.b16 %v1674, %v1666
    %v2443 = vpack.c.b16 %v1675, %v1667
    %v2444 = vpack.c.b16 %v1676, %v1668
    %v2445 = vpack.c.b16 %v1685, %v1677
    %v2446 = vpack.c.b16 %v1686, %v1678
    %v2447 = vpack.c.b16 %v1687, %v1679
    %v2448 = vpack.c.b16 %v1688, %v1680
    %v2449 = vpack.c.b16 %v1689, %v1681
    %v2450 = vpack.c.b16 %v1690, %v1682
    %v2451 = vpack.c.b16 %v1691, %v1683
    %v2452 = vpack.c.b16 %v1692, %v1684
    %v2453 = vpack.c.b16 %v1701, %v1693
    %v2454 = vpack.c.b16 %v1702, %v1694
    %v2455 = vpack.c.b16 %v1703, %v1695
    %v2456 = vpack.c.b16 %v1704, %v1696
    %v2457 = vpack.c.b16 %v1705, %v1697
    %v2458 = vpack.c.b16 %v1706, %v1698
    %v2459 = vpack.c.b16 %v1707, %v1699
    %v2460 = vpack.c.b16 %v1708, %v1700
    %v2461 = vpack.c.b16 %v1717, %v1709
    %v2462 = vpack.c.b16 %v1718, %v1710
    %v2463 = vpack.c.b16 %v1719, %v1711
    %v2464 = vpack.c.b16 %v1720, %v1712
    %v2465 = vpack.c.b16 %v1721, %v1713
    %v2466 = vpack.c.b16 %v1722, %v1714
    %v2467 = vpack.c.b16 %v1723, %v1715
    %v2468 = vpack.c.b16 %v1724, %v1716
    %v2469 = vpack.c.b16 %v1733, %v1725
    %v2470 = vpack.c.b16 %v1734, %v1726
    %v2471 = vpack.c.b16 %v1735, %v1727
    %v2472 = vpack.c.b16 %v1736, %v1728
    %v2473 = vpack.c.b16 %v1737, %v1729
    %v2474 = vpack.c.b16 %v1738, %v1730
    %v2475 = vpack.c.b16 %v1739, %v1731
    %v2476 = vpack.c.b16 %v1740, %v1732
    %v2477 = vpack.c.b16 %v1749, %v1741
    %v2478 = vpack.c.b16 %v1750, %v1742
    %v2479 = vpack.c.b16 %v1751, %v1743
    %v2480 = vpack.c.b16 %v1752, %v1744
    %v2481 = vpack.c.b16 %v1753, %v1745
    %v2482 = vpack.c.b16 %v1754, %v1746
    %v2483 = vpack.c.b16 %v1755, %v1747
    %v2484 = vpack.c.b16 %v1756, %v1748
    %v2485 = vpack.c.b16 %v1765, %v1757
    %v2486 = vpack.c.b16 %v1766, %v1758
    %v2487 = vpack.c.b16 %v1767, %v1759
    %v2488 = vpack.c.b16 %v1768, %v1760
    %v2489 = vpack.c.b16 %v1769, %v1761
    %v2490 = vpack.c.b16 %v1770, %v1762
    %v2491 = vpack.c.b16 %v1771, %v1763
    %v2492 = vpack.c.b16 %v1772, %v1764
    %v2493 = vpack.c.b16 %v1781, %v1773
    %v2494 = vpack.c.b16 %v1782, %v1774
    %v2495 = vpack.c.b16 %v1783, %v1775
    %v2496 = vpack.c.b16 %v1784, %v1776
    %v2497 = vpack.c.b16 %v1785, %v1777
    %v2498 = vpack.c.b16 %v1786, %v1778
    %v2499 = vpack.c.b16 %v1787, %v1779
    %v2500 = vpack.c.b16 %v1788, %v1780
    %v2501 = vpack.c.b16 %v1797, %v1789
    %v2502 = vpack.c.b16 %v1798, %v1790
    %v2503 = vpack.c.b16 %v1799, %v1791
    %v2504 = vpack.c.b16 %v1800, %v1792
    %v2505 = vpack.c.b16 %v1801, %v1793
    %v2506 = vpack.c.b16 %v1802, %v1794
    %v2507 = vpack.c.b16 %v1803, %v1795
    %v2508 = vpack.c.b16 %v1804, %v1796
    %v2509 = vpack.c.b16 %v1813, %v1805
    %v2510 = vpack.c.b16 %v1814, %v1806
    %v2511 = vpack.c.b16 %v1815, %v1807
    %v2512 = vpack.c.b16 %v1816, %v1808
    %v2513 = vpack.c.b16 %v1817, %v1809
    %v2514 = vpack.c.b16 %v1818, %v1810
    %v2515 = vpack.c.b16 %v1819, %v1811
    %v2516 = vpack.c.b16 %v1820, %v1812
    %v2517 = vpack.c.b16 %v1829, %v1821
    %v2518 = vpack.c.b16 %v1830, %v1822
    %v2519 = vpack.c.b16 %v1831, %v1823
    %v2520 = vpack.c.b16 %v1832, %v1824
    %v2521 = vpack.c.b16 %v1833, %v1825
    %v2522 = vpack.c.b16 %v1834, %v1826
    %v2523 = vpack.c.b16 %v1835, %v1827
    %v2524 = vpack.c.b16 %v1836, %v1828
    %v2525 = vpack.c.b16 %v1845, %v1837
    %v2526 = vpack.c.b16 %v1846, %v1838
    %v2527 = vpack.c.b16 %v1847, %v1839
    %v2528 = vpack.c.b16 %v1848, %v1840
    %v2529 = vpack.c.b16 %v1849, %v1841
    %v2530 = vpack.c.b16 %v1850, %v1842
    %v2531 = vpack.c.b16 %v1851, %v1843
    %v2532 = vpack.c.b16 %v1852, %v1844
    %v2533 = vpack.c.b16 %v1861, %v1853
    %v2534 = vpack.c.b16 %v1862, %v1854
    %v2535 = vpack.c.b16 %v1863, %v1855
    %v2536 = vpack.c.b16 %v1864, %v1856
    %v2537 = vpack.c.b16 %v1865, %v1857
    %v2538 = vpack.c.b16 %v1866, %v1858
    %v2539 = vpack.c.b16 %v1867, %v1859
    %v2540 = vpack.c.b16 %v1868, %v1860
    %v2541 = vpack.c.b16 %v1877, %v1869
    %v2542 = vpack.c.b16 %v1878, %v1870
    %v2543 = vpack.c.b16 %v1879, %v1871
    %v2544 = vpack.c.b16 %v1880, %v1872
    %v2545 = vpack.c.b16 %v1881, %v1873
    %v2546 = vpack.c.b16 %v1882, %v1874
    %v2547 = vpack.c.b16 %v1883, %v1875
    %v2548 = vpack.c.b16 %v1884, %v1876
    %v2549 = vpack.c.b16 %v1893, %v1885
    %v2550 = vpack.c.b16 %v1894, %v1886
    %v2551 = vpack.c.b16 %v1895, %v1887
    %v2552 = vpack.c.b16 %v1896, %v1888
    %v2553 = vpack.c.b16 %v1897, %v1889
    %v2554 = vpack.c.b16 %v1898, %v1890
    %v2555 = vpack.c.b16 %v1899, %v1891
    %v2556 = vpack.c.b16 %v1900, %v1892
    %v2557 = vpack.c.b16 %v1909, %v1901
    %v2558 = vpack.c.b16 %v1910, %v1902
    %v2559 = vpack.c.b16 %v1911, %v1903
    %v2560 = vpack.c.b16 %v1912, %v1904
    %v2561 = vpack.c.b16 %v1913, %v1905
    %v2562 = vpack.c.b16 %v1914, %v1906
    %v2563 = vpack.c.b16 %v1915, %v1907
    %v2564 = vpack.c.b16 %v1916, %v1908
    %v2565 = vpack.c.b16 %v1925, %v1917
    %v2566 = vpack.c.b16 %v1926, %v1918
    %v2567 = vpack.c.b16 %v1927, %v1919
    %v2568 = vpack.c.b16 %v1928, %v1920
    %v2569 = vpack.c.b16 %v1929, %v1921
    %v2570 = vpack.c.b16 %v1930, %v1922
    %v2571 = vpack.c.b16 %v1931, %v1923
    %v2572 = vpack.c.b16 %v1932, %v1924
    %v2573 = vpack.c.b16 %v1941, %v1933
    %v2574 = vpack.c.b16 %v1942, %v1934
    %v2575 = vpack.c.b16 %v1943, %v1935
    %v2576 = vpack.c.b16 %v1944, %v1936
    %v2577 = vpack.c.b16 %v1945, %v1937
    %v2578 = vpack.c.b16 %v1946, %v1938
    %v2579 = vpack.c.b16 %v1947, %v1939
    %v2580 = vpack.c.b16 %v1948, %v1940
    %v2581 = vpack.c.b16 %v1957, %v1949
    %v2582 = vpack.c.b16 %v1958, %v1950
    %v2583 = vpack.c.b16 %v1959, %v1951
    %v2584 = vpack.c.b16 %v1960, %v1952
    %v2585 = vpack.c.b16 %v1961, %v1953
    %v2586 = vpack.c.b16 %v1962, %v1954
    %v2587 = vpack.c.b16 %v1963, %v1955
    %v2588 = vpack.c.b16 %v1964, %v1956
    %v2589 = vpack.c.b16 %v1973, %v1965
    %v2590 = vpack.c.b16 %v1974, %v1966
    %v2591 = vpack.c.b16 %v1975, %v1967
    %v2592 = vpack.c.b16 %v1976, %v1968
    %v2593 = vpack.c.b16 %v1977, %v1969
    %v2594 = vpack.c.b16 %v1978, %v1970
    %v2595 = vpack.c.b16 %v1979, %v1971
    %v2596 = vpack.c.b16 %v1980, %v1972
    %v2597 = vpack.c.b16 %v1989, %v1981
    %v2598 = vpack.c.b16 %v1990, %v1982
    %v2599 = vpack.c.b16 %v1991, %v1983
    %v2600 = vpack.c.b16 %v1992, %v1984
    %v2601 = vpack.c.b16 %v1993, %v1985
    %v2602 = vpack.c.b16 %v1994, %v1986
    %v2603 = vpack.c.b16 %v1995, %v1987
    %v2604 = vpack.c.b16 %v1996, %v1988
    %v2605 = vpack.c.b16 %v2005, %v1997
    %v2606 = vpack.c.b16 %v2006, %v1998
    %v2607 = vpack.c.b16 %v2007, %v1999
    %v2608 = vpack.c.b16 %v2008, %v2000
    %v2609 = vpack.c.b16 %v2009, %v2001
    %v2610 = vpack.c.b16 %v2010, %v2002
    %v2611 = vpack.c.b16 %v2011, %v2003
    %v2612 = vpack.c.b16 %v2012, %v2004
    %v2613 = vpack.c.b16 %v2021, %v2013
    %v2614 = vpack.c.b16 %v2022, %v2014
    %v2615 = vpack.c.b16 %v2023, %v2015
    %v2616 = vpack.c.b16 %v2024, %v2016
    %v2617 = vpack.c.b16 %v2025, %v2017
    %v2618 = vpack.c.b16 %v2026, %v2018
    %v2619 = vpack.c.b16 %v2027, %v2019
    %v2620 = vpack.c.b16 %v2028, %v2020
    %v2621 = vpack.c.b16 %v2037, %v2029
    %v2622 = vpack.c.b16 %v2038, %v2030
    %v2623 = vpack.c.b16 %v2039, %v2031
    %v2624 = vpack.c.b16 %v2040, %v2032
    %v2625 = vpack.c.b16 %v2041, %v2033
    %v2626 = vpack.c.b16 %v2042, %v2034
    %v2627 = vpack.c.b16 %v2043, %v2035
    %v2628 = vpack.c.b16 %v2044, %v2036
    %v2629 = vpack.c.b16 %v2053, %v2045
    %v2630 = vpack.c.b16 %v2054, %v2046
    %v2631 = vpack.c.b16 %v2055, %v2047
    %v2632 = vpack.c.b16 %v2056, %v2048
    %v2633 = vpack.c.b16 %v2057, %v2049
    %v2634 = vpack.c.b16 %v2058, %v2050
    %v2635 = vpack.c.b16 %v2059, %v2051
    %v2636 = vpack.c.b16 %v2060, %v2052
    %v2637 = vpack.c.b16 %v2069, %v2061
    %v2638 = vpack.c.b16 %v2070, %v2062
    %v2639 = vpack.c.b16 %v2071, %v2063
    %v2640 = vpack.c.b16 %v2072, %v2064
    %v2641 = vpack.c.b16 %v2073, %v2065
    %v2642 = vpack.c.b16 %v2074, %v2066
    %v2643 = vpack.c.b16 %v2075, %v2067
    %v2644 = vpack.c.b16 %v2076, %v2068
    %v2645 = vpack.c.b16 %v2085, %v2077
    %v2646 = vpack.c.b16 %v2086, %v2078
    %v2647 = vpack.c.b16 %v2087, %v2079
    %v2648 = vpack.c.b16 %v2088, %v2080
    %v2649 = vpack.c.b16 %v2089, %v2081
    %v2650 = vpack.c.b16 %v2090, %v2082
    %v2651 = vpack.c.b16 %v2091, %v2083
    %v2652 = vpack.c.b16 %v2092, %v2084
    %v2653 = vpack.c.b16 %v2101, %v2093
    %v2654 = vpack.c.b16 %v2102, %v2094
    %v2655 = vpack.c.b16 %v2103, %v2095
    %v2656 = vpack.c.b16 %v2104, %v2096
    %v2657 = vpack.c.b16 %v2105, %v2097
    %v2658 = vpack.c.b16 %v2106, %v2098
    %v2659 = vpack.c.b16 %v2107, %v2099
    %v2660 = vpack.c.b16 %v2108, %v2100
    %v2661 = vpack.c.b16 %v2117, %v2109
    %v2662 = vpack.c.b16 %v2118, %v2110
    %v2663 = vpack.c.b16 %v2119, %v2111
    %v2664 = vpack.c.b16 %v2120, %v2112
    %v2665 = vpack.c.b16 %v2121, %v2113
    %v2666 = vpack.c.b16 %v2122, %v2114
    %v2667 = vpack.c.b16 %v2123, %v2115
    %v2668 = vpack.c.b16 %v2124, %v2116
    %v2669 = vpack.c.b16 %v2133, %v2125
    %v2670 = vpack.c.b16 %v2134, %v2126
    %v2671 = vpack.c.b16 %v2135, %v2127
    %v2672 = vpack.c.b16 %v2136, %v2128
    %v2673 = vpack.c.b16 %v2137, %v2129
    %v2674 = vpack.c.b16 %v2138, %v2130
    %v2675 = vpack.c.b16 %v2139, %v2131
    %v2676 = vpack.c.b16 %v2140, %v2132
    %v2677 = vpack.c.b16 %v2149, %v2141
    %v2678 = vpack.c.b16 %v2150, %v2142
    %v2679 = vpack.c.b16 %v2151, %v2143
    %v2680 = vpack.c.b16 %v2152, %v2144
    %v2681 = vpack.c.b16 %v2153, %v2145
    %v2682 = vpack.c.b16 %v2154, %v2146
    %v2683 = vpack.c.b16 %v2155, %v2147
    %v2684 = vpack.c.b16 %v2156, %v2148
    %v2685 = vpack.c.b16 %v2165, %v2157
    %v2686 = vpack.c.b16 %v2166, %v2158
    %v2687 = vpack.c.b16 %v2167, %v2159
    %v2688 = vpack.c.b16 %v2168, %v2160
    %v2689 = vpack.c.b16 %v2169, %v2161
    %v2690 = vpack.c.b16 %v2170, %v2162
    %v2691 = vpack.c.b16 %v2171, %v2163
    %v2692 = vpack.c.b16 %v2172, %v2164
    %v2693 = vpack.c.b16 %v2181, %v2173
    %v2694 = vpack.c.b16 %v2182, %v2174
    %v2695 = vpack.c.b16 %v2183, %v2175
    %v2696 = vpack.c.b16 %v2184, %v2176
    %v2697 = vpack.c.b16 %v2185, %v2177
    %v2698 = vpack.c.b16 %v2186, %v2178
    %v2699 = vpack.c.b16 %v2187, %v2179
    %v2700 = vpack.c.b16 %v2188, %v2180
    %3213 = vmatprep.subr.bf16.mxu0 %v2190
    %3214 = vmatpush1.bf16.msra.mxu0 %v2189
    %3215 = vmatprep.subr.bf16.mxu0 %v2198
    %3216 = vmatpush1.bf16.msra.mxu0 %v2197
    %3217 = vmatprep.subr.bf16.mxu0 %v2206
    %3218 = vmatpush1.bf16.msra.mxu0 %v2205
    %3219 = vmatprep.subr.bf16.mxu0 %v2214
    %3220 = vmatpush1.bf16.msra.mxu0 %v2213
    %3221 = vmatprep.subr.bf16.mxu0 %v2222
    %3222 = vmatpush1.bf16.msra.mxu0 %v2221
    %3223 = vmatprep.subr.bf16.mxu0 %v2230
    %3224 = vmatpush1.bf16.msra.mxu0 %v2229
    %3225 = vmatprep.subr.bf16.mxu0 %v2238
    %3226 = vmatpush1.bf16.msra.mxu0 %v2237
    %3227 = vmatprep.subr.bf16.mxu0 %v2246
    %3228 = vmatpush1.bf16.msra.mxu0 %v2245
    %3229 = vmatprep.subr.bf16.mxu0 %v2254
    %3230 = vmatpush1.bf16.msra.mxu0 %v2253
    %3231 = vmatprep.subr.bf16.mxu0 %v2262
    %3232 = vmatpush1.bf16.msra.mxu0 %v2261
    %3233 = vmatprep.subr.bf16.mxu0 %v2270
    %3234 = vmatpush1.bf16.msra.mxu0 %v2269
    %3235 = vmatprep.subr.bf16.mxu0 %v2278
    %3236 = vmatpush1.bf16.msra.mxu0 %v2277
    %3237 = vmatprep.subr.bf16.mxu0 %v2286
    %3238 = vmatpush1.bf16.msra.mxu0 %v2285
    %3239 = vmatprep.subr.bf16.mxu0 %v2294
    %3240 = vmatpush1.bf16.msra.mxu0 %v2293
    %3241 = vmatprep.subr.bf16.mxu0 %v2302
    %3242 = vmatpush1.bf16.msra.mxu0 %v2301
    %3243 = vmatprep.subr.bf16.mxu0 %v2310
    %3244 = vmatpush1.bf16.msra.mxu0 %v2309
    %3245 = vmatprep.mubr.bf16.mxu0 %v92
    %3246 = vmatmul.mubr.bf16.gmra.mrb[0].mxu0 %v91
    %v3247 = vpop.f32.mrb[0].mxu0
    %v3248 = vadd.f32 %v616, %v3247
    %v3249 = vpop.f32.mrb[0].mxu0
    %v3250 = vadd.f32 %v620, %v3249
    %v3251 = vpop.f32.mrb[0].mxu0
    %v3252 = vpop.f32.mrb[0].mxu0
    %3253 = vdwg.mxu0
    %3254 = vmatprep.subr.bf16.mxu0 %v2318
    %3255 = vmatpush1.bf16.msra.mxu0 %v2317
    %3256 = vmatprep.subr.bf16.mxu0 %v2326
    %3257 = vmatpush1.bf16.msra.mxu0 %v2325
    %3258 = vmatprep.subr.bf16.mxu0 %v2334
    %3259 = vmatpush1.bf16.msra.mxu0 %v2333
    %3260 = vmatprep.subr.bf16.mxu0 %v2342
    %3261 = vmatpush1.bf16.msra.mxu0 %v2341
    %3262 = vmatprep.subr.bf16.mxu0 %v2350
    %3263 = vmatpush1.bf16.msra.mxu0 %v2349
    %3264 = vmatprep.subr.bf16.mxu0 %v2358
    %3265 = vmatpush1.bf16.msra.mxu0 %v2357
    %3266 = vmatprep.subr.bf16.mxu0 %v2366
    %3267 = vmatpush1.bf16.msra.mxu0 %v2365
    %3268 = vmatprep.subr.bf16.mxu0 %v2374
    %3269 = vmatpush1.bf16.msra.mxu0 %v2373
    %3270 = vmatprep.subr.bf16.mxu0 %v2382
    %3271 = vmatpush1.bf16.msra.mxu0 %v2381
    %3272 = vmatprep.subr.bf16.mxu0 %v2390
    %3273 = vmatpush1.bf16.msra.mxu0 %v2389
    %3274 = vmatprep.subr.bf16.mxu0 %v2398
    %3275 = vmatpush1.bf16.msra.mxu0 %v2397
    %3276 = vmatprep.subr.bf16.mxu0 %v2406
    %3277 = vmatpush1.bf16.msra.mxu0 %v2405
    %3278 = vmatprep.subr.bf16.mxu0 %v2414
    %3279 = vmatpush1.bf16.msra.mxu0 %v2413
    %3280 = vmatprep.subr.bf16.mxu0 %v2422
    %3281 = vmatpush1.bf16.msra.mxu0 %v2421
    %3282 = vmatprep.subr.bf16.mxu0 %v2430
    %3283 = vmatpush1.bf16.msra.mxu0 %v2429
    %3284 = vmatprep.subr.bf16.mxu0 %v2438
    %3285 = vmatpush1.bf16.msra.mxu0 %v2437
    %3286 = vmatprep.mubr.bf16.mxu0 %v94
    %3287 = vmatmul.mubr.bf16.gmra.mrb[0].mxu0 %v93
    %v3288 = vpop.f32.mrb[0].mxu0
    %v3289 = vadd.f32 %v3248, %v3288
    %v3290 = vpop.f32.mrb[0].mxu0
    %v3291 = vadd.f32 %v3250, %v3290
    %v3292 = vpop.f32.mrb[0].mxu0
    %v3293 = vpop.f32.mrb[0].mxu0
    %3294 = vdwg.mxu0
    %3295 = vmatprep.subr.bf16.mxu0 %v2446
    %3296 = vmatpush1.bf16.msra.mxu0 %v2445
    %3297 = vmatprep.subr.bf16.mxu0 %v2454
    %3298 = vmatpush1.bf16.msra.mxu0 %v2453
    %3299 = vmatprep.subr.bf16.mxu0 %v2462
    %3300 = vmatpush1.bf16.msra.mxu0 %v2461
    %3301 = vmatprep.subr.bf16.mxu0 %v2470
    %3302 = vmatpush1.bf16.msra.mxu0 %v2469
    %3303 = vmatprep.subr.bf16.mxu0 %v2478
    %3304 = vmatpush1.bf16.msra.mxu0 %v2477
    %3305 = vmatprep.subr.bf16.mxu0 %v2486
    %3306 = vmatpush1.bf16.msra.mxu0 %v2485
    %3307 = vmatprep.subr.bf16.mxu0 %v2494
    %3308 = vmatpush1.bf16.msra.mxu0 %v2493
    %3309 = vmatprep.subr.bf16.mxu0 %v2502
    %3310 = vmatpush1.bf16.msra.mxu0 %v2501
    %3311 = vmatprep.subr.bf16.mxu0 %v2510
    %3312 = vmatpush1.bf16.msra.mxu0 %v2509
    %3313 = vmatprep.subr.bf16.mxu0 %v2518
    %3314 = vmatpush1.bf16.msra.mxu0 %v2517
    %3315 = vmatprep.subr.bf16.mxu0 %v2526
    %3316 = vmatpush1.bf16.msra.mxu0 %v2525
    %3317 = vmatprep.subr.bf16.mxu0 %v2534
    %3318 = vmatpush1.bf16.msra.mxu0 %v2533
    %3319 = vmatprep.subr.bf16.mxu0 %v2542
    %3320 = vmatpush1.bf16.msra.mxu0 %v2541
    %3321 = vmatprep.subr.bf16.mxu0 %v2550
    %3322 = vmatpush1.bf16.msra.mxu0 %v2549
    %3323 = vmatprep.subr.bf16.mxu0 %v2558
    %3324 = vmatpush1.bf16.msra.mxu0 %v2557
    %3325 = vmatprep.subr.bf16.mxu0 %v2566
    %3326 = vmatpush1.bf16.msra.mxu0 %v2565
    %3327 = vmatprep.mubr.bf16.mxu0 %v96
    %3328 = vmatmul.mubr.bf16.gmra.mrb[0].mxu0 %v95
    %v3329 = vpop.f32.mrb[0].mxu0
    %v3330 = vadd.f32 %v3289, %v3329
    %v3331 = vpop.f32.mrb[0].mxu0
    %v3332 = vadd.f32 %v3291, %v3331
    %v3333 = vpop.f32.mrb[0].mxu0
    %v3334 = vpop.f32.mrb[0].mxu0
    %3335 = vdwg.mxu0
    %3336 = vmatprep.subr.bf16.mxu0 %v2574
    %3337 = vmatpush1.bf16.msra.mxu0 %v2573
    %3338 = vmatprep.subr.bf16.mxu0 %v2582
    %3339 = vmatpush1.bf16.msra.mxu0 %v2581
    %3340 = vmatprep.subr.bf16.mxu0 %v2590
    %3341 = vmatpush1.bf16.msra.mxu0 %v2589
    %3342 = vmatprep.subr.bf16.mxu0 %v2598
    %3343 = vmatpush1.bf16.msra.mxu0 %v2597
    %3344 = vmatprep.subr.bf16.mxu0 %v2606
    %3345 = vmatpush1.bf16.msra.mxu0 %v2605
    %3346 = vmatprep.subr.bf16.mxu0 %v2614
    %3347 = vmatpush1.bf16.msra.mxu0 %v2613
    %3348 = vmatprep.subr.bf16.mxu0 %v2622
    %3349 = vmatpush1.bf16.msra.mxu0 %v2621
    %3350 = vmatprep.subr.bf16.mxu0 %v2630
    %3351 = vmatpush1.bf16.msra.mxu0 %v2629
    %3352 = vmatprep.subr.bf16.mxu0 %v2638
    %3353 = vmatpush1.bf16.msra.mxu0 %v2637
    %3354 = vmatprep.subr.bf16.mxu0 %v2646
    %3355 = vmatpush1.bf16.msra.mxu0 %v2645
    %3356 = vmatprep.subr.bf16.mxu0 %v2654
    %3357 = vmatpush1.bf16.msra.mxu0 %v2653
    %3358 = vmatprep.subr.bf16.mxu0 %v2662
    %3359 = vmatpush1.bf16.msra.mxu0 %v2661
    %3360 = vmatprep.subr.bf16.mxu0 %v2670
    %3361 = vmatpush1.bf16.msra.mxu0 %v2669
    %3362 = vmatprep.subr.bf16.mxu0 %v2678
    %3363 = vmatpush1.bf16.msra.mxu0 %v2677
    %3364 = vmatprep.subr.bf16.mxu0 %v2686
    %3365 = vmatpush1.bf16.msra.mxu0 %v2685
    %3366 = vmatprep.subr.bf16.mxu0 %v2694
    %3367 = vmatpush1.bf16.msra.mxu0 %v2693
    %3368 = vmatprep.mubr.bf16.mxu0 %v98
    %3369 = vmatmul.mubr.bf16.gmra.mrb[0].mxu0 %v97
    %v3370 = vpop.f32.mrb[0].mxu0
    %v3371 = vadd.f32 %v3330, %v3370
    %v3372 = vpop.f32.mrb[0].mxu0
    %v3373 = vadd.f32 %v3332, %v3372
    %v3374 = vpop.f32.mrb[0].mxu0
    %v3375 = vpop.f32.mrb[0].mxu0
    %3376 = vdwg.mxu0
    %3377 = vmatprep.subr.bf16.mxu0 %v2192
    %3378 = vmatpush1.bf16.msra.mxu0 %v2191
    %3379 = vmatprep.subr.bf16.mxu0 %v2200
    %3380 = vmatpush1.bf16.msra.mxu0 %v2199
    %3381 = vmatprep.subr.bf16.mxu0 %v2208
    %3382 = vmatpush1.bf16.msra.mxu0 %v2207
    %3383 = vmatprep.subr.bf16.mxu0 %v2216
    %3384 = vmatpush1.bf16.msra.mxu0 %v2215
    %3385 = vmatprep.subr.bf16.mxu0 %v2224
    %3386 = vmatpush1.bf16.msra.mxu0 %v2223
    %3387 = vmatprep.subr.bf16.mxu0 %v2232
    %3388 = vmatpush1.bf16.msra.mxu0 %v2231
    %3389 = vmatprep.subr.bf16.mxu0 %v2240
    %3390 = vmatpush1.bf16.msra.mxu0 %v2239
    %3391 = vmatprep.subr.bf16.mxu0 %v2248
    %3392 = vmatpush1.bf16.msra.mxu0 %v2247
    %3393 = vmatprep.subr.bf16.mxu0 %v2256
    %3394 = vmatpush1.bf16.msra.mxu0 %v2255
    %3395 = vmatprep.subr.bf16.mxu0 %v2264
    %3396 = vmatpush1.bf16.msra.mxu0 %v2263
    %3397 = vmatprep.subr.bf16.mxu0 %v2272
    %3398 = vmatpush1.bf16.msra.mxu0 %v2271
    %3399 = vmatprep.subr.bf16.mxu0 %v2280
    %3400 = vmatpush1.bf16.msra.mxu0 %v2279
    %3401 = vmatprep.subr.bf16.mxu0 %v2288
    %3402 = vmatpush1.bf16.msra.mxu0 %v2287
    %3403 = vmatprep.subr.bf16.mxu0 %v2296
    %3404 = vmatpush1.bf16.msra.mxu0 %v2295
    %3405 = vmatprep.subr.bf16.mxu0 %v2304
    %3406 = vmatpush1.bf16.msra.mxu0 %v2303
    %3407 = vmatprep.subr.bf16.mxu0 %v2312
    %3408 = vmatpush1.bf16.msra.mxu0 %v2311
    %3409 = vmatprep.mubr.bf16.mxu0 %v92
    %3410 = vmatmul.mubr.bf16.gmra.mrb[0].mxu0 %v91
    %v3411 = vpop.f32.mrb[0].mxu0
    %v3412 = vadd.f32 %v624, %v3411
    %v3413 = vpop.f32.mrb[0].mxu0
    %v3414 = vadd.f32 %v628, %v3413
    %v3415 = vpop.f32.mrb[0].mxu0
    %v3416 = vpop.f32.mrb[0].mxu0
    %3417 = vdwg.mxu0
    %3418 = vmatprep.subr.bf16.mxu0 %v2320
    %3419 = vmatpush1.bf16.msra.mxu0 %v2319
    %3420 = vmatprep.subr.bf16.mxu0 %v2328
    %3421 = vmatpush1.bf16.msra.mxu0 %v2327
    %3422 = vmatprep.subr.bf16.mxu0 %v2336
    %3423 = vmatpush1.bf16.msra.mxu0 %v2335
    %3424 = vmatprep.subr.bf16.mxu0 %v2344
    %3425 = vmatpush1.bf16.msra.mxu0 %v2343
    %3426 = vmatprep.subr.bf16.mxu0 %v2352
    %3427 = vmatpush1.bf16.msra.mxu0 %v2351
    %3428 = vmatprep.subr.bf16.mxu0 %v2360
    %3429 = vmatpush1.bf16.msra.mxu0 %v2359
    %3430 = vmatprep.subr.bf16.mxu0 %v2368
    %3431 = vmatpush1.bf16.msra.mxu0 %v2367
    %3432 = vmatprep.subr.bf16.mxu0 %v2376
    %3433 = vmatpush1.bf16.msra.mxu0 %v2375
    %3434 = vmatprep.subr.bf16.mxu0 %v2384
    %3435 = vmatpush1.bf16.msra.mxu0 %v2383
    %3436 = vmatprep.subr.bf16.mxu0 %v2392
    %3437 = vmatpush1.bf16.msra.mxu0 %v2391
    %3438 = vmatprep.subr.bf16.mxu0 %v2400
    %3439 = vmatpush1.bf16.msra.mxu0 %v2399
    %3440 = vmatprep.subr.bf16.mxu0 %v2408
    %3441 = vmatpush1.bf16.msra.mxu0 %v2407
    %3442 = vmatprep.subr.bf16.mxu0 %v2416
    %3443 = vmatpush1.bf16.msra.mxu0 %v2415
    %3444 = vmatprep.subr.bf16.mxu0 %v2424
    %3445 = vmatpush1.bf16.msra.mxu0 %v2423
    %3446 = vmatprep.subr.bf16.mxu0 %v2432
    %3447 = vmatpush1.bf16.msra.mxu0 %v2431
    %3448 = vmatprep.subr.bf16.mxu0 %v2440
    %3449 = vmatpush1.bf16.msra.mxu0 %v2439
    %3450 = vmatprep.mubr.bf16.mxu0 %v94
    %3451 = vmatmul.mubr.bf16.gmra.mrb[0].mxu0 %v93
    %v3452 = vpop.f32.mrb[0].mxu0
    %v3453 = vadd.f32 %v3412, %v3452
    %v3454 = vpop.f32.mrb[0].mxu0
    %v3455 = vadd.f32 %v3414, %v3454
    %v3456 = vpop.f32.mrb[0].mxu0
    %v3457 = vpop.f32.mrb[0].mxu0
    %3458 = vdwg.mxu0
    %3459 = vmatprep.subr.bf16.mxu0 %v2448
    %3460 = vmatpush1.bf16.msra.mxu0 %v2447
    %3461 = vmatprep.subr.bf16.mxu0 %v2456
    %3462 = vmatpush1.bf16.msra.mxu0 %v2455
    %3463 = vmatprep.subr.bf16.mxu0 %v2464
    %3464 = vmatpush1.bf16.msra.mxu0 %v2463
    %3465 = vmatprep.subr.bf16.mxu0 %v2472
    %3466 = vmatpush1.bf16.msra.mxu0 %v2471
    %3467 = vmatprep.subr.bf16.mxu0 %v2480
    %3468 = vmatpush1.bf16.msra.mxu0 %v2479
    %3469 = vmatprep.subr.bf16.mxu0 %v2488
    %3470 = vmatpush1.bf16.msra.mxu0 %v2487
    %3471 = vmatprep.subr.bf16.mxu0 %v2496
    %3472 = vmatpush1.bf16.msra.mxu0 %v2495
    %3473 = vmatprep.subr.bf16.mxu0 %v2504
    %3474 = vmatpush1.bf16.msra.mxu0 %v2503
    %3475 = vmatprep.subr.bf16.mxu0 %v2512
    %3476 = vmatpush1.bf16.msra.mxu0 %v2511
    %3477 = vmatprep.subr.bf16.mxu0 %v2520
    %3478 = vmatpush1.bf16.msra.mxu0 %v2519
    %3479 = vmatprep.subr.bf16.mxu0 %v2528
    %3480 = vmatpush1.bf16.msra.mxu0 %v2527
    %3481 = vmatprep.subr.bf16.mxu0 %v2536
    %3482 = vmatpush1.bf16.msra.mxu0 %v2535
    %3483 = vmatprep.subr.bf16.mxu0 %v2544
    %3484 = vmatpush1.bf16.msra.mxu0 %v2543
    %3485 = vmatprep.subr.bf16.mxu0 %v2552
    %3486 = vmatpush1.bf16.msra.mxu0 %v2551
    %3487 = vmatprep.subr.bf16.mxu0 %v2560
    %3488 = vmatpush1.bf16.msra.mxu0 %v2559
    %3489 = vmatprep.subr.bf16.mxu0 %v2568
    %3490 = vmatpush1.bf16.msra.mxu0 %v2567
    %3491 = vmatprep.mubr.bf16.mxu0 %v96
    %3492 = vmatmul.mubr.bf16.gmra.mrb[0].mxu0 %v95
    %v3493 = vpop.f32.mrb[0].mxu0
    %v3494 = vadd.f32 %v3453, %v3493
    %v3495 = vpop.f32.mrb[0].mxu0
    %v3496 = vadd.f32 %v3455, %v3495
    %v3497 = vpop.f32.mrb[0].mxu0
    %v3498 = vpop.f32.mrb[0].mxu0
    %3499 = vdwg.mxu0
    %3500 = vmatprep.subr.bf16.mxu0 %v2576
    %3501 = vmatpush1.bf16.msra.mxu0 %v2575
    %3502 = vmatprep.subr.bf16.mxu0 %v2584
    %3503 = vmatpush1.bf16.msra.mxu0 %v2583
    %3504 = vmatprep.subr.bf16.mxu0 %v2592
    %3505 = vmatpush1.bf16.msra.mxu0 %v2591
    %3506 = vmatprep.subr.bf16.mxu0 %v2600
    %3507 = vmatpush1.bf16.msra.mxu0 %v2599
    %3508 = vmatprep.subr.bf16.mxu0 %v2608
    %3509 = vmatpush1.bf16.msra.mxu0 %v2607
    %3510 = vmatprep.subr.bf16.mxu0 %v2616
    %3511 = vmatpush1.bf16.msra.mxu0 %v2615
    %3512 = vmatprep.subr.bf16.mxu0 %v2624
    %3513 = vmatpush1.bf16.msra.mxu0 %v2623
    %3514 = vmatprep.subr.bf16.mxu0 %v2632
    %3515 = vmatpush1.bf16.msra.mxu0 %v2631
    %3516 = vmatprep.subr.bf16.mxu0 %v2640
    %3517 = vmatpush1.bf16.msra.mxu0 %v2639
    %3518 = vmatprep.subr.bf16.mxu0 %v2648
    %3519 = vmatpush1.bf16.msra.mxu0 %v2647
    %3520 = vmatprep.subr.bf16.mxu0 %v2656
    %3521 = vmatpush1.bf16.msra.mxu0 %v2655
    %3522 = vmatprep.subr.bf16.mxu0 %v2664
    %3523 = vmatpush1.bf16.msra.mxu0 %v2663
    %3524 = vmatprep.subr.bf16.mxu0 %v2672
    %3525 = vmatpush1.bf16.msra.mxu0 %v2671
    %3526 = vmatprep.subr.bf16.mxu0 %v2680
    %3527 = vmatpush1.bf16.msra.mxu0 %v2679
    %3528 = vmatprep.subr.bf16.mxu0 %v2688
    %3529 = vmatpush1.bf16.msra.mxu0 %v2687
    %3530 = vmatprep.subr.bf16.mxu0 %v2696
    %3531 = vmatpush1.bf16.msra.mxu0 %v2695
    %3532 = vmatprep.mubr.bf16.mxu0 %v98
    %3533 = vmatmul.mubr.bf16.gmra.mrb[0].mxu0 %v97
    %v3534 = vpop.f32.mrb[0].mxu0
    %v3535 = vadd.f32 %v3494, %v3534
    %v3536 = vpop.f32.mrb[0].mxu0
    %v3537 = vadd.f32 %v3496, %v3536
    %v3538 = vpop.f32.mrb[0].mxu0
    %v3539 = vpop.f32.mrb[0].mxu0
    %3540 = vdwg.mxu0
    %3541 = vmatprep.subr.bf16.mxu0 %v2194
    %3542 = vmatpush1.bf16.msra.mxu0 %v2193
    %3543 = vmatprep.subr.bf16.mxu0 %v2202
    %3544 = vmatpush1.bf16.msra.mxu0 %v2201
    %3545 = vmatprep.subr.bf16.mxu0 %v2210
    %3546 = vmatpush1.bf16.msra.mxu0 %v2209
    %3547 = vmatprep.subr.bf16.mxu0 %v2218
    %3548 = vmatpush1.bf16.msra.mxu0 %v2217
    %3549 = vmatprep.subr.bf16.mxu0 %v2226
    %3550 = vmatpush1.bf16.msra.mxu0 %v2225
    %3551 = vmatprep.subr.bf16.mxu0 %v2234
    %3552 = vmatpush1.bf16.msra.mxu0 %v2233
    %3553 = vmatprep.subr.bf16.mxu0 %v2242
    %3554 = vmatpush1.bf16.msra.mxu0 %v2241
    %3555 = vmatprep.subr.bf16.mxu0 %v2250
    %3556 = vmatpush1.bf16.msra.mxu0 %v2249
    %3557 = vmatprep.subr.bf16.mxu0 %v2258
    %3558 = vmatpush1.bf16.msra.mxu0 %v2257
    %3559 = vmatprep.subr.bf16.mxu0 %v2266
    %3560 = vmatpush1.bf16.msra.mxu0 %v2265
    %3561 = vmatprep.subr.bf16.mxu0 %v2274
    %3562 = vmatpush1.bf16.msra.mxu0 %v2273
    %3563 = vmatprep.subr.bf16.mxu0 %v2282
    %3564 = vmatpush1.bf16.msra.mxu0 %v2281
    %3565 = vmatprep.subr.bf16.mxu0 %v2290
    %3566 = vmatpush1.bf16.msra.mxu0 %v2289
    %3567 = vmatprep.subr.bf16.mxu0 %v2298
    %3568 = vmatpush1.bf16.msra.mxu0 %v2297
    %3569 = vmatprep.subr.bf16.mxu0 %v2306
    %3570 = vmatpush1.bf16.msra.mxu0 %v2305
    %3571 = vmatprep.subr.bf16.mxu0 %v2314
    %3572 = vmatpush1.bf16.msra.mxu0 %v2313
    %3573 = vmatprep.mubr.bf16.mxu0 %v92
    %3574 = vmatmul.mubr.bf16.gmra.mrb[0].mxu0 %v91
    %v3575 = vpop.f32.mrb[0].mxu0
    %v3576 = vadd.f32 %v632, %v3575
    %v3577 = vpop.f32.mrb[0].mxu0
    %v3578 = vadd.f32 %v636, %v3577
    %v3579 = vpop.f32.mrb[0].mxu0
    %v3580 = vpop.f32.mrb[0].mxu0
    %3581 = vdwg.mxu0
    %3582 = vmatprep.subr.bf16.mxu0 %v2322
    %3583 = vmatpush1.bf16.msra.mxu0 %v2321
    %3584 = vmatprep.subr.bf16.mxu0 %v2330
    %3585 = vmatpush1.bf16.msra.mxu0 %v2329
    %3586 = vmatprep.subr.bf16.mxu0 %v2338
    %3587 = vmatpush1.bf16.msra.mxu0 %v2337
    %3588 = vmatprep.subr.bf16.mxu0 %v2346
    %3589 = vmatpush1.bf16.msra.mxu0 %v2345
    %3590 = vmatprep.subr.bf16.mxu0 %v2354
    %3591 = vmatpush1.bf16.msra.mxu0 %v2353
    %3592 = vmatprep.subr.bf16.mxu0 %v2362
    %3593 = vmatpush1.bf16.msra.mxu0 %v2361
    %3594 = vmatprep.subr.bf16.mxu0 %v2370
    %3595 = vmatpush1.bf16.msra.mxu0 %v2369
    %3596 = vmatprep.subr.bf16.mxu0 %v2378
    %3597 = vmatpush1.bf16.msra.mxu0 %v2377
    %3598 = vmatprep.subr.bf16.mxu0 %v2386
    %3599 = vmatpush1.bf16.msra.mxu0 %v2385
    %3600 = vmatprep.subr.bf16.mxu0 %v2394
    %3601 = vmatpush1.bf16.msra.mxu0 %v2393
    %3602 = vmatprep.subr.bf16.mxu0 %v2402
    %3603 = vmatpush1.bf16.msra.mxu0 %v2401
    %3604 = vmatprep.subr.bf16.mxu0 %v2410
    %3605 = vmatpush1.bf16.msra.mxu0 %v2409
    %3606 = vmatprep.subr.bf16.mxu0 %v2418
    %3607 = vmatpush1.bf16.msra.mxu0 %v2417
    %3608 = vmatprep.subr.bf16.mxu0 %v2426
    %3609 = vmatpush1.bf16.msra.mxu0 %v2425
    %3610 = vmatprep.subr.bf16.mxu0 %v2434
    %3611 = vmatpush1.bf16.msra.mxu0 %v2433
    %3612 = vmatprep.subr.bf16.mxu0 %v2442
    %3613 = vmatpush1.bf16.msra.mxu0 %v2441
    %3614 = vmatprep.mubr.bf16.mxu0 %v94
    %3615 = vmatmul.mubr.bf16.gmra.mrb[0].mxu0 %v93
    %v3616 = vpop.f32.mrb[0].mxu0
    %v3617 = vadd.f32 %v3576, %v3616
    %v3618 = vpop.f32.mrb[0].mxu0
    %v3619 = vadd.f32 %v3578, %v3618
    %v3620 = vpop.f32.mrb[0].mxu0
    %v3621 = vpop.f32.mrb[0].mxu0
    %3622 = vdwg.mxu0
    %3623 = vmatprep.subr.bf16.mxu0 %v2450
    %3624 = vmatpush1.bf16.msra.mxu0 %v2449
    %3625 = vmatprep.subr.bf16.mxu0 %v2458
    %3626 = vmatpush1.bf16.msra.mxu0 %v2457
    %3627 = vmatprep.subr.bf16.mxu0 %v2466
    %3628 = vmatpush1.bf16.msra.mxu0 %v2465
    %3629 = vmatprep.subr.bf16.mxu0 %v2474
    %3630 = vmatpush1.bf16.msra.mxu0 %v2473
    %3631 = vmatprep.subr.bf16.mxu0 %v2482
    %3632 = vmatpush1.bf16.msra.mxu0 %v2481
    %3633 = vmatprep.subr.bf16.mxu0 %v2490
    %3634 = vmatpush1.bf16.msra.mxu0 %v2489
    %3635 = vmatprep.subr.bf16.mxu0 %v2498
    %3636 = vmatpush1.bf16.msra.mxu0 %v2497
    %3637 = vmatprep.subr.bf16.mxu0 %v2506
    %3638 = vmatpush1.bf16.msra.mxu0 %v2505
    %3639 = vmatprep.subr.bf16.mxu0 %v2514
    %3640 = vmatpush1.bf16.msra.mxu0 %v2513
    %3641 = vmatprep.subr.bf16.mxu0 %v2522
    %3642 = vmatpush1.bf16.msra.mxu0 %v2521
    %3643 = vmatprep.subr.bf16.mxu0 %v2530
    %3644 = vmatpush1.bf16.msra.mxu0 %v2529
    %3645 = vmatprep.subr.bf16.mxu0 %v2538
    %3646 = vmatpush1.bf16.msra.mxu0 %v2537
    %3647 = vmatprep.subr.bf16.mxu0 %v2546
    %3648 = vmatpush1.bf16.msra.mxu0 %v2545
    %3649 = vmatprep.subr.bf16.mxu0 %v2554
    %3650 = vmatpush1.bf16.msra.mxu0 %v2553
    %3651 = vmatprep.subr.bf16.mxu0 %v2562
    %3652 = vmatpush1.bf16.msra.mxu0 %v2561
    %3653 = vmatprep.subr.bf16.mxu0 %v2570
    %3654 = vmatpush1.bf16.msra.mxu0 %v2569
    %3655 = vmatprep.mubr.bf16.mxu0 %v96
    %3656 = vmatmul.mubr.bf16.gmra.mrb[0].mxu0 %v95
    %v3657 = vpop.f32.mrb[0].mxu0
    %v3658 = vadd.f32 %v3617, %v3657
    %v3659 = vpop.f32.mrb[0].mxu0
    %v3660 = vadd.f32 %v3619, %v3659
    %v3661 = vpop.f32.mrb[0].mxu0
    %v3662 = vpop.f32.mrb[0].mxu0
    %3663 = vdwg.mxu0
    %3664 = vmatprep.subr.bf16.mxu0 %v2578
    %3665 = vmatpush1.bf16.msra.mxu0 %v2577
    %3666 = vmatprep.subr.bf16.mxu0 %v2586
    %3667 = vmatpush1.bf16.msra.mxu0 %v2585
    %3668 = vmatprep.subr.bf16.mxu0 %v2594
    %3669 = vmatpush1.bf16.msra.mxu0 %v2593
    %3670 = vmatprep.subr.bf16.mxu0 %v2602
    %3671 = vmatpush1.bf16.msra.mxu0 %v2601
    %3672 = vmatprep.subr.bf16.mxu0 %v2610
    %3673 = vmatpush1.bf16.msra.mxu0 %v2609
    %3674 = vmatprep.subr.bf16.mxu0 %v2618
    %3675 = vmatpush1.bf16.msra.mxu0 %v2617
    %3676 = vmatprep.subr.bf16.mxu0 %v2626
    %3677 = vmatpush1.bf16.msra.mxu0 %v2625
    %3678 = vmatprep.subr.bf16.mxu0 %v2634
    %3679 = vmatpush1.bf16.msra.mxu0 %v2633
    %3680 = vmatprep.subr.bf16.mxu0 %v2642
    %3681 = vmatpush1.bf16.msra.mxu0 %v2641
    %3682 = vmatprep.subr.bf16.mxu0 %v2650
    %3683 = vmatpush1.bf16.msra.mxu0 %v2649
    %3684 = vmatprep.subr.bf16.mxu0 %v2658
    %3685 = vmatpush1.bf16.msra.mxu0 %v2657
    %3686 = vmatprep.subr.bf16.mxu0 %v2666
    %3687 = vmatpush1.bf16.msra.mxu0 %v2665
    %3688 = vmatprep.subr.bf16.mxu0 %v2674
    %3689 = vmatpush1.bf16.msra.mxu0 %v2673
    %3690 = vmatprep.subr.bf16.mxu0 %v2682
    %3691 = vmatpush1.bf16.msra.mxu0 %v2681
    %3692 = vmatprep.subr.bf16.mxu0 %v2690
    %3693 = vmatpush1.bf16.msra.mxu0 %v2689
    %3694 = vmatprep.subr.bf16.mxu0 %v2698
    %3695 = vmatpush1.bf16.msra.mxu0 %v2697
    %3696 = vmatprep.mubr.bf16.mxu0 %v98
    %3697 = vmatmul.mubr.bf16.gmra.mrb[0].mxu0 %v97
    %v3698 = vpop.f32.mrb[0].mxu0
    %v3699 = vadd.f32 %v3658, %v3698
    %v3700 = vpop.f32.mrb[0].mxu0
    %v3701 = vadd.f32 %v3660, %v3700
    %v3702 = vpop.f32.mrb[0].mxu0
    %v3703 = vpop.f32.mrb[0].mxu0
    %3704 = vdwg.mxu0
    %3705 = vmatprep.subr.bf16.mxu0 %v2196
    %3706 = vmatpush1.bf16.msra.mxu0 %v2195
    %3707 = vmatprep.subr.bf16.mxu0 %v2204
    %3708 = vmatpush1.bf16.msra.mxu0 %v2203
    %3709 = vmatprep.subr.bf16.mxu0 %v2212
    %3710 = vmatpush1.bf16.msra.mxu0 %v2211
    %3711 = vmatprep.subr.bf16.mxu0 %v2220
    %3712 = vmatpush1.bf16.msra.mxu0 %v2219
    %3713 = vmatprep.subr.bf16.mxu0 %v2228
    %3714 = vmatpush1.bf16.msra.mxu0 %v2227
    %3715 = vmatprep.subr.bf16.mxu0 %v2236
    %3716 = vmatpush1.bf16.msra.mxu0 %v2235
    %3717 = vmatprep.subr.bf16.mxu0 %v2244
    %3718 = vmatpush1.bf16.msra.mxu0 %v2243
    %3719 = vmatprep.subr.bf16.mxu0 %v2252
    %3720 = vmatpush1.bf16.msra.mxu0 %v2251
    %3721 = vmatprep.subr.bf16.mxu0 %v2260
    %3722 = vmatpush1.bf16.msra.mxu0 %v2259
    %3723 = vmatprep.subr.bf16.mxu0 %v2268
    %3724 = vmatpush1.bf16.msra.mxu0 %v2267
    %3725 = vmatprep.subr.bf16.mxu0 %v2276
    %3726 = vmatpush1.bf16.msra.mxu0 %v2275
    %3727 = vmatprep.subr.bf16.mxu0 %v2284
    %3728 = vmatpush1.bf16.msra.mxu0 %v2283
    %3729 = vmatprep.subr.bf16.mxu0 %v2292
    %3730 = vmatpush1.bf16.msra.mxu0 %v2291
    %3731 = vmatprep.subr.bf16.mxu0 %v2300
    %3732 = vmatpush1.bf16.msra.mxu0 %v2299
    %3733 = vmatprep.subr.bf16.mxu0 %v2308
    %3734 = vmatpush1.bf16.msra.mxu0 %v2307
    %3735 = vmatprep.subr.bf16.mxu0 %v2316
    %3736 = vmatpush1.bf16.msra.mxu0 %v2315
    %3737 = vmatprep.mubr.bf16.mxu0 %v92
    %3738 = vmatmul.mubr.bf16.gmra.mrb[0].mxu0 %v91
    %v3739 = vpop.f32.mrb[0].mxu0
    %v3740 = vadd.f32 %v640, %v3739
    %v3741 = vpop.f32.mrb[0].mxu0
    %v3742 = vadd.f32 %v644, %v3741
    %v3743 = vpop.f32.mrb[0].mxu0
    %v3744 = vpop.f32.mrb[0].mxu0
    %3745 = vdwg.mxu0
    %3746 = vmatprep.subr.bf16.mxu0 %v2324
    %3747 = vmatpush1.bf16.msra.mxu0 %v2323
    %3748 = vmatprep.subr.bf16.mxu0 %v2332
    %3749 = vmatpush1.bf16.msra.mxu0 %v2331
    %3750 = vmatprep.subr.bf16.mxu0 %v2340
    %3751 = vmatpush1.bf16.msra.mxu0 %v2339
    %3752 = vmatprep.subr.bf16.mxu0 %v2348
    %3753 = vmatpush1.bf16.msra.mxu0 %v2347
    %3754 = vmatprep.subr.bf16.mxu0 %v2356
    %3755 = vmatpush1.bf16.msra.mxu0 %v2355
    %3756 = vmatprep.subr.bf16.mxu0 %v2364
    %3757 = vmatpush1.bf16.msra.mxu0 %v2363
    %3758 = vmatprep.subr.bf16.mxu0 %v2372
    %3759 = vmatpush1.bf16.msra.mxu0 %v2371
    %3760 = vmatprep.subr.bf16.mxu0 %v2380
    %3761 = vmatpush1.bf16.msra.mxu0 %v2379
    %3762 = vmatprep.subr.bf16.mxu0 %v2388
    %3763 = vmatpush1.bf16.msra.mxu0 %v2387
    %3764 = vmatprep.subr.bf16.mxu0 %v2396
    %3765 = vmatpush1.bf16.msra.mxu0 %v2395
    %3766 = vmatprep.subr.bf16.mxu0 %v2404
    %3767 = vmatpush1.bf16.msra.mxu0 %v2403
    %3768 = vmatprep.subr.bf16.mxu0 %v2412
    %3769 = vmatpush1.bf16.msra.mxu0 %v2411
    %3770 = vmatprep.subr.bf16.mxu0 %v2420
    %3771 = vmatpush1.bf16.msra.mxu0 %v2419
    %3772 = vmatprep.subr.bf16.mxu0 %v2428
    %3773 = vmatpush1.bf16.msra.mxu0 %v2427
    %3774 = vmatprep.subr.bf16.mxu0 %v2436
    %3775 = vmatpush1.bf16.msra.mxu0 %v2435
    %3776 = vmatprep.subr.bf16.mxu0 %v2444
    %3777 = vmatpush1.bf16.msra.mxu0 %v2443
    %3778 = vmatprep.mubr.bf16.mxu0 %v94
    %3779 = vmatmul.mubr.bf16.gmra.mrb[0].mxu0 %v93
    %v3780 = vpop.f32.mrb[0].mxu0
    %v3781 = vadd.f32 %v3740, %v3780
    %v3782 = vpop.f32.mrb[0].mxu0
    %v3783 = vadd.f32 %v3742, %v3782
    %v3784 = vpop.f32.mrb[0].mxu0
    %v3785 = vpop.f32.mrb[0].mxu0
    %3786 = vdwg.mxu0
    %3787 = vmatprep.subr.bf16.mxu0 %v2452
    %3788 = vmatpush1.bf16.msra.mxu0 %v2451
    %3789 = vmatprep.subr.bf16.mxu0 %v2460
    %3790 = vmatpush1.bf16.msra.mxu0 %v2459
    %3791 = vmatprep.subr.bf16.mxu0 %v2468
    %3792 = vmatpush1.bf16.msra.mxu0 %v2467
    %3793 = vmatprep.subr.bf16.mxu0 %v2476
    %3794 = vmatpush1.bf16.msra.mxu0 %v2475
    %3795 = vmatprep.subr.bf16.mxu0 %v2484
    %3796 = vmatpush1.bf16.msra.mxu0 %v2483
    %3797 = vmatprep.subr.bf16.mxu0 %v2492
    %3798 = vmatpush1.bf16.msra.mxu0 %v2491
    %3799 = vmatprep.subr.bf16.mxu0 %v2500
    %3800 = vmatpush1.bf16.msra.mxu0 %v2499
    %3801 = vmatprep.subr.bf16.mxu0 %v2508
    %3802 = vmatpush1.bf16.msra.mxu0 %v2507
    %3803 = vmatprep.subr.bf16.mxu0 %v2516
    %3804 = vmatpush1.bf16.msra.mxu0 %v2515
    %3805 = vmatprep.subr.bf16.mxu0 %v2524
    %3806 = vmatpush1.bf16.msra.mxu0 %v2523
    %3807 = vmatprep.subr.bf16.mxu0 %v2532
    %3808 = vmatpush1.bf16.msra.mxu0 %v2531
    %3809 = vmatprep.subr.bf16.mxu0 %v2540
    %3810 = vmatpush1.bf16.msra.mxu0 %v2539
    %3811 = vmatprep.subr.bf16.mxu0 %v2548
    %3812 = vmatpush1.bf16.msra.mxu0 %v2547
    %3813 = vmatprep.subr.bf16.mxu0 %v2556
    %3814 = vmatpush1.bf16.msra.mxu0 %v2555
    %3815 = vmatprep.subr.bf16.mxu0 %v2564
    %3816 = vmatpush1.bf16.msra.mxu0 %v2563
    %3817 = vmatprep.subr.bf16.mxu0 %v2572
    %3818 = vmatpush1.bf16.msra.mxu0 %v2571
    %3819 = vmatprep.mubr.bf16.mxu0 %v96
    %3820 = vmatmul.mubr.bf16.gmra.mrb[0].mxu0 %v95
    %v3821 = vpop.f32.mrb[0].mxu0
    %v3822 = vadd.f32 %v3781, %v3821
    %v3823 = vpop.f32.mrb[0].mxu0
    %v3824 = vadd.f32 %v3783, %v3823
    %v3825 = vpop.f32.mrb[0].mxu0
    %v3826 = vpop.f32.mrb[0].mxu0
    %3827 = vdwg.mxu0
    %3828 = vmatprep.subr.bf16.mxu0 %v2580
    %3829 = vmatpush1.bf16.msra.mxu0 %v2579
    %3830 = vmatprep.subr.bf16.mxu0 %v2588
    %3831 = vmatpush1.bf16.msra.mxu0 %v2587
    %3832 = vmatprep.subr.bf16.mxu0 %v2596
    %3833 = vmatpush1.bf16.msra.mxu0 %v2595
    %3834 = vmatprep.subr.bf16.mxu0 %v2604
    %3835 = vmatpush1.bf16.msra.mxu0 %v2603
    %3836 = vmatprep.subr.bf16.mxu0 %v2612
    %3837 = vmatpush1.bf16.msra.mxu0 %v2611
    %3838 = vmatprep.subr.bf16.mxu0 %v2620
    %3839 = vmatpush1.bf16.msra.mxu0 %v2619
    %3840 = vmatprep.subr.bf16.mxu0 %v2628
    %3841 = vmatpush1.bf16.msra.mxu0 %v2627
    %3842 = vmatprep.subr.bf16.mxu0 %v2636
    %3843 = vmatpush1.bf16.msra.mxu0 %v2635
    %3844 = vmatprep.subr.bf16.mxu0 %v2644
    %3845 = vmatpush1.bf16.msra.mxu0 %v2643
    %3846 = vmatprep.subr.bf16.mxu0 %v2652
    %3847 = vmatpush1.bf16.msra.mxu0 %v2651
    %3848 = vmatprep.subr.bf16.mxu0 %v2660
    %3849 = vmatpush1.bf16.msra.mxu0 %v2659
    %3850 = vmatprep.subr.bf16.mxu0 %v2668
    %3851 = vmatpush1.bf16.msra.mxu0 %v2667
    %3852 = vmatprep.subr.bf16.mxu0 %v2676
    %3853 = vmatpush1.bf16.msra.mxu0 %v2675
    %3854 = vmatprep.subr.bf16.mxu0 %v2684
    %3855 = vmatpush1.bf16.msra.mxu0 %v2683
    %3856 = vmatprep.subr.bf16.mxu0 %v2692
    %3857 = vmatpush1.bf16.msra.mxu0 %v2691
    %3858 = vmatprep.subr.bf16.mxu0 %v2700
    %3859 = vmatpush1.bf16.msra.mxu0 %v2699
    %3860 = vmatprep.mubr.bf16.mxu0 %v98
    %3861 = vmatmul.mubr.bf16.gmra.mrb[0].mxu0 %v97
    %v3862 = vpop.f32.mrb[0].mxu0
    %v3863 = vadd.f32 %v3822, %v3862
    %v3864 = vpop.f32.mrb[0].mxu0
    %v3865 = vadd.f32 %v3824, %v3864
    %v3866 = vpop.f32.mrb[0].mxu0
    %v3867 = vpop.f32.mrb[0].mxu0
    %3868 = vdwg.mxu0
    %v3869 = vmax.f32 %v3371, 0.0
    %v3870 = vmax.f32 %v3373, 0.0
    %v3871 = vmax.f32 %v3535, 0.0
    %v3872 = vmax.f32 %v3537, 0.0
    %v3873 = vmax.f32 %v3699, 0.0
    %v3874 = vmax.f32 %v3701, 0.0
    %v3875 = vmax.f32 %v3863, 0.0
    %v3876 = vmax.f32 %v3865, 0.0
    %v3877 = vmul.f32 %v3869, %v3869
    %v3878 = vmul.f32 %v3870, %v3870
    %v3879 = vmul.f32 %v3871, %v3871
    %v3880 = vmul.f32 %v3872, %v3872
    %v3881 = vmul.f32 %v3873, %v3873
    %v3882 = vmul.f32 %v3874, %v3874
    %v3883 = vmul.f32 %v3875, %v3875
    %v3884 = vmul.f32 %v3876, %v3876
    %v3885 = vpack.c.bf16 %v3877, %v3877
    %v3886 = vpack.c.bf16 %v3878, %v3878
    %v3887 = vpack.c.bf16 %v3879, %v3879
    %v3888 = vpack.c.bf16 %v3880, %v3880
    %v3889 = vpack.c.bf16 %v3881, %v3881
    %v3890 = vpack.c.bf16 %v3882, %v3882
    %v3891 = vpack.c.bf16 %v3883, %v3883
    %v3892 = vpack.c.bf16 %v3884, %v3884
    %v3893 = vld [vmem:[#allocation8] sm:$0xff]
    %v3894 = vld [vmem:[#allocation8 + $0x8] sm:$0xff]
    %v3895 = vld [vmem:[#allocation8 + $0x10] sm:$0xff]
    %v3896 = vld [vmem:[#allocation8 + $0x18] sm:$0xff]
    %v3897 = vld [vmem:[#allocation8 + $0x20] sm:$0xff]
    %v3898 = vld [vmem:[#allocation8 + $0x28] sm:$0xff]
    %v3899 = vld [vmem:[#allocation8 + $0x30] sm:$0xff]
    %v3900 = vld [vmem:[#allocation8 + $0x38] sm:$0xff]
    %v3901 = vld [vmem:[#allocation8 + $0x40] sm:$0xff]
    %v3902 = vld [vmem:[#allocation8 + $0x48] sm:$0xff]
    %v3903 = vld [vmem:[#allocation8 + $0x50] sm:$0xff]
    %v3904 = vld [vmem:[#allocation8 + $0x58] sm:$0xff]
    %v3905 = vld [vmem:[#allocation8 + $0x60] sm:$0xff]
    %v3906 = vld [vmem:[#allocation8 + $0x68] sm:$0xff]
    %v3907 = vld [vmem:[#allocation8 + $0x70] sm:$0xff]
    %v3908 = vld [vmem:[#allocation8 + $0x78] sm:$0xff]
    %v3909 = vld [vmem:[#allocation8 + $0x80] sm:$0xff]
    %v3910 = vld [vmem:[#allocation8 + $0x88] sm:$0xff]
    %v3911 = vld [vmem:[#allocation8 + $0x90] sm:$0xff]
    %v3912 = vld [vmem:[#allocation8 + $0x98] sm:$0xff]
    %v3913 = vld [vmem:[#allocation8 + $0xa0] sm:$0xff]
    %v3914 = vld [vmem:[#allocation8 + $0xa8] sm:$0xff]
    %v3915 = vld [vmem:[#allocation8 + $0xb0] sm:$0xff]
    %v3916 = vld [vmem:[#allocation8 + $0xb8] sm:$0xff]
    %v3917 = vld [vmem:[#allocation8 + $0xc0] sm:$0xff]
    %v3918 = vld [vmem:[#allocation8 + $0xc8] sm:$0xff]
    %v3919 = vld [vmem:[#allocation8 + $0xd0] sm:$0xff]
    %v3920 = vld [vmem:[#allocation8 + $0xd8] sm:$0xff]
    %v3921 = vld [vmem:[#allocation8 + $0xe0] sm:$0xff]
    %v3922 = vld [vmem:[#allocation8 + $0xe8] sm:$0xff]
    %v3923 = vld [vmem:[#allocation8 + $0xf0] sm:$0xff]
    %v3924 = vld [vmem:[#allocation8 + $0xf8] sm:$0xff]
    %v3925 = vld [vmem:[#allocation8 + $0x100] sm:$0xff]
    %v3926 = vld [vmem:[#allocation8 + $0x108] sm:$0xff]
    %v3927 = vld [vmem:[#allocation8 + $0x110] sm:$0xff]
    %v3928 = vld [vmem:[#allocation8 + $0x118] sm:$0xff]
    %v3929 = vld [vmem:[#allocation8 + $0x120] sm:$0xff]
    %v3930 = vld [vmem:[#allocation8 + $0x128] sm:$0xff]
    %v3931 = vld [vmem:[#allocation8 + $0x130] sm:$0xff]
    %v3932 = vld [vmem:[#allocation8 + $0x138] sm:$0xff]
    %v3933 = vld [vmem:[#allocation8 + $0x140] sm:$0xff]
    %v3934 = vld [vmem:[#allocation8 + $0x148] sm:$0xff]
    %v3935 = vld [vmem:[#allocation8 + $0x150] sm:$0xff]
    %v3936 = vld [vmem:[#allocation8 + $0x158] sm:$0xff]
    %v3937 = vld [vmem:[#allocation8 + $0x160] sm:$0xff]
    %v3938 = vld [vmem:[#allocation8 + $0x168] sm:$0xff]
    %v3939 = vld [vmem:[#allocation8 + $0x170] sm:$0xff]
    %v3940 = vld [vmem:[#allocation8 + $0x178] sm:$0xff]
    %v3941 = vld [vmem:[#allocation8 + $0x180] sm:$0xff]
    %v3942 = vld [vmem:[#allocation8 + $0x188] sm:$0xff]
    %v3943 = vld [vmem:[#allocation8 + $0x190] sm:$0xff]
    %v3944 = vld [vmem:[#allocation8 + $0x198] sm:$0xff]
    %v3945 = vld [vmem:[#allocation8 + $0x1a0] sm:$0xff]
    %v3946 = vld [vmem:[#allocation8 + $0x1a8] sm:$0xff]
    %v3947 = vld [vmem:[#allocation8 + $0x1b0] sm:$0xff]
    %v3948 = vld [vmem:[#allocation8 + $0x1b8] sm:$0xff]
    %v3949 = vld [vmem:[#allocation8 + $0x1c0] sm:$0xff]
    %v3950 = vld [vmem:[#allocation8 + $0x1c8] sm:$0xff]
    %v3951 = vld [vmem:[#allocation8 + $0x1d0] sm:$0xff]
    %v3952 = vld [vmem:[#allocation8 + $0x1d8] sm:$0xff]
    %v3953 = vld [vmem:[#allocation8 + $0x1e0] sm:$0xff]
    %v3954 = vld [vmem:[#allocation8 + $0x1e8] sm:$0xff]
    %v3955 = vld [vmem:[#allocation8 + $0x1f0] sm:$0xff]
    %v3956 = vld [vmem:[#allocation8 + $0x1f8] sm:$0xff]
    %v3957 = vld [vmem:[#allocation8 + $0x200] sm:$0xff]
    %v3958 = vld [vmem:[#allocation8 + $0x208] sm:$0xff]
    %v3959 = vld [vmem:[#allocation8 + $0x210] sm:$0xff]
    %v3960 = vld [vmem:[#allocation8 + $0x218] sm:$0xff]
    %v3961 = vld [vmem:[#allocation8 + $0x220] sm:$0xff]
    %v3962 = vld [vmem:[#allocation8 + $0x228] sm:$0xff]
    %v3963 = vld [vmem:[#allocation8 + $0x230] sm:$0xff]
    %v3964 = vld [vmem:[#allocation8 + $0x238] sm:$0xff]
    %v3965 = vld [vmem:[#allocation8 + $0x240] sm:$0xff]
    %v3966 = vld [vmem:[#allocation8 + $0x248] sm:$0xff]
    %v3967 = vld [vmem:[#allocation8 + $0x250] sm:$0xff]
    %v3968 = vld [vmem:[#allocation8 + $0x258] sm:$0xff]
    %v3969 = vld [vmem:[#allocation8 + $0x260] sm:$0xff]
    %v3970 = vld [vmem:[#allocation8 + $0x268] sm:$0xff]
    %v3971 = vld [vmem:[#allocation8 + $0x270] sm:$0xff]
    %v3972 = vld [vmem:[#allocation8 + $0x278] sm:$0xff]
    %v3973 = vld [vmem:[#allocation8 + $0x280] sm:$0xff]
    %v3974 = vld [vmem:[#allocation8 + $0x288] sm:$0xff]
    %v3975 = vld [vmem:[#allocation8 + $0x290] sm:$0xff]
    %v3976 = vld [vmem:[#allocation8 + $0x298] sm:$0xff]
    %v3977 = vld [vmem:[#allocation8 + $0x2a0] sm:$0xff]
    %v3978 = vld [vmem:[#allocation8 + $0x2a8] sm:$0xff]
    %v3979 = vld [vmem:[#allocation8 + $0x2b0] sm:$0xff]
    %v3980 = vld [vmem:[#allocation8 + $0x2b8] sm:$0xff]
    %v3981 = vld [vmem:[#allocation8 + $0x2c0] sm:$0xff]
    %v3982 = vld [vmem:[#allocation8 + $0x2c8] sm:$0xff]
    %v3983 = vld [vmem:[#allocation8 + $0x2d0] sm:$0xff]
    %v3984 = vld [vmem:[#allocation8 + $0x2d8] sm:$0xff]
    %v3985 = vld [vmem:[#allocation8 + $0x2e0] sm:$0xff]
    %v3986 = vld [vmem:[#allocation8 + $0x2e8] sm:$0xff]
    %v3987 = vld [vmem:[#allocation8 + $0x2f0] sm:$0xff]
    %v3988 = vld [vmem:[#allocation8 + $0x2f8] sm:$0xff]
    %v3989 = vld [vmem:[#allocation8 + $0x300] sm:$0xff]
    %v3990 = vld [vmem:[#allocation8 + $0x308] sm:$0xff]
    %v3991 = vld [vmem:[#allocation8 + $0x310] sm:$0xff]
    %v3992 = vld [vmem:[#allocation8 + $0x318] sm:$0xff]
    %v3993 = vld [vmem:[#allocation8 + $0x320] sm:$0xff]
    %v3994 = vld [vmem:[#allocation8 + $0x328] sm:$0xff]
    %v3995 = vld [vmem:[#allocation8 + $0x330] sm:$0xff]
    %v3996 = vld [vmem:[#allocation8 + $0x338] sm:$0xff]
    %v3997 = vld [vmem:[#allocation8 + $0x340] sm:$0xff]
    %v3998 = vld [vmem:[#allocation8 + $0x348] sm:$0xff]
    %v3999 = vld [vmem:[#allocation8 + $0x350] sm:$0xff]
    %v4000 = vld [vmem:[#allocation8 + $0x358] sm:$0xff]
    %v4001 = vld [vmem:[#allocation8 + $0x360] sm:$0xff]
    %v4002 = vld [vmem:[#allocation8 + $0x368] sm:$0xff]
    %v4003 = vld [vmem:[#allocation8 + $0x370] sm:$0xff]
    %v4004 = vld [vmem:[#allocation8 + $0x378] sm:$0xff]
    %v4005 = vld [vmem:[#allocation8 + $0x380] sm:$0xff]
    %v4006 = vld [vmem:[#allocation8 + $0x388] sm:$0xff]
    %v4007 = vld [vmem:[#allocation8 + $0x390] sm:$0xff]
    %v4008 = vld [vmem:[#allocation8 + $0x398] sm:$0xff]
    %v4009 = vld [vmem:[#allocation8 + $0x3a0] sm:$0xff]
    %v4010 = vld [vmem:[#allocation8 + $0x3a8] sm:$0xff]
    %v4011 = vld [vmem:[#allocation8 + $0x3b0] sm:$0xff]
    %v4012 = vld [vmem:[#allocation8 + $0x3b8] sm:$0xff]
    %v4013 = vld [vmem:[#allocation8 + $0x3c0] sm:$0xff]
    %v4014 = vld [vmem:[#allocation8 + $0x3c8] sm:$0xff]
    %v4015 = vld [vmem:[#allocation8 + $0x3d0] sm:$0xff]
    %v4016 = vld [vmem:[#allocation8 + $0x3d8] sm:$0xff]
    %v4017 = vld [vmem:[#allocation8 + $0x3e0] sm:$0xff]
    %v4018 = vld [vmem:[#allocation8 + $0x3e8] sm:$0xff]
    %v4019 = vld [vmem:[#allocation8 + $0x3f0] sm:$0xff]
    %v4020 = vld [vmem:[#allocation8 + $0x3f8] sm:$0xff]
    %v4021 = vld [vmem:[#allocation8 + $0x400] sm:$0xff]
    %v4022 = vld [vmem:[#allocation8 + $0x408] sm:$0xff]
    %v4023 = vld [vmem:[#allocation8 + $0x410] sm:$0xff]
    %v4024 = vld [vmem:[#allocation8 + $0x418] sm:$0xff]
    %v4025 = vld [vmem:[#allocation8 + $0x420] sm:$0xff]
    %v4026 = vld [vmem:[#allocation8 + $0x428] sm:$0xff]
    %v4027 = vld [vmem:[#allocation8 + $0x430] sm:$0xff]
    %v4028 = vld [vmem:[#allocation8 + $0x438] sm:$0xff]
    %v4029 = vld [vmem:[#allocation8 + $0x440] sm:$0xff]
    %v4030 = vld [vmem:[#allocation8 + $0x448] sm:$0xff]
    %v4031 = vld [vmem:[#allocation8 + $0x450] sm:$0xff]
    %v4032 = vld [vmem:[#allocation8 + $0x458] sm:$0xff]
    %v4033 = vld [vmem:[#allocation8 + $0x460] sm:$0xff]
    %v4034 = vld [vmem:[#allocation8 + $0x468] sm:$0xff]
    %v4035 = vld [vmem:[#allocation8 + $0x470] sm:$0xff]
    %v4036 = vld [vmem:[#allocation8 + $0x478] sm:$0xff]
    %v4037 = vld [vmem:[#allocation8 + $0x480] sm:$0xff]
    %v4038 = vld [vmem:[#allocation8 + $0x488] sm:$0xff]
    %v4039 = vld [vmem:[#allocation8 + $0x490] sm:$0xff]
    %v4040 = vld [vmem:[#allocation8 + $0x498] sm:$0xff]
    %v4041 = vld [vmem:[#allocation8 + $0x4a0] sm:$0xff]
    %v4042 = vld [vmem:[#allocation8 + $0x4a8] sm:$0xff]
    %v4043 = vld [vmem:[#allocation8 + $0x4b0] sm:$0xff]
    %v4044 = vld [vmem:[#allocation8 + $0x4b8] sm:$0xff]
    %v4045 = vld [vmem:[#allocation8 + $0x4c0] sm:$0xff]
    %v4046 = vld [vmem:[#allocation8 + $0x4c8] sm:$0xff]
    %v4047 = vld [vmem:[#allocation8 + $0x4d0] sm:$0xff]
    %v4048 = vld [vmem:[#allocation8 + $0x4d8] sm:$0xff]
    %v4049 = vld [vmem:[#allocation8 + $0x4e0] sm:$0xff]
    %v4050 = vld [vmem:[#allocation8 + $0x4e8] sm:$0xff]
    %v4051 = vld [vmem:[#allocation8 + $0x4f0] sm:$0xff]
    %v4052 = vld [vmem:[#allocation8 + $0x4f8] sm:$0xff]
    %v4053 = vld [vmem:[#allocation8 + $0x500] sm:$0xff]
    %v4054 = vld [vmem:[#allocation8 + $0x508] sm:$0xff]
    %v4055 = vld [vmem:[#allocation8 + $0x510] sm:$0xff]
    %v4056 = vld [vmem:[#allocation8 + $0x518] sm:$0xff]
    %v4057 = vld [vmem:[#allocation8 + $0x520] sm:$0xff]
    %v4058 = vld [vmem:[#allocation8 + $0x528] sm:$0xff]
    %v4059 = vld [vmem:[#allocation8 + $0x530] sm:$0xff]
    %v4060 = vld [vmem:[#allocation8 + $0x538] sm:$0xff]
    %v4061 = vld [vmem:[#allocation8 + $0x540] sm:$0xff]
    %v4062 = vld [vmem:[#allocation8 + $0x548] sm:$0xff]
    %v4063 = vld [vmem:[#allocation8 + $0x550] sm:$0xff]
    %v4064 = vld [vmem:[#allocation8 + $0x558] sm:$0xff]
    %v4065 = vld [vmem:[#allocation8 + $0x560] sm:$0xff]
    %v4066 = vld [vmem:[#allocation8 + $0x568] sm:$0xff]
    %v4067 = vld [vmem:[#allocation8 + $0x570] sm:$0xff]
    %v4068 = vld [vmem:[#allocation8 + $0x578] sm:$0xff]
    %v4069 = vld [vmem:[#allocation8 + $0x580] sm:$0xff]
    %v4070 = vld [vmem:[#allocation8 + $0x588] sm:$0xff]
    %v4071 = vld [vmem:[#allocation8 + $0x590] sm:$0xff]
    %v4072 = vld [vmem:[#allocation8 + $0x598] sm:$0xff]
    %v4073 = vld [vmem:[#allocation8 + $0x5a0] sm:$0xff]
    %v4074 = vld [vmem:[#allocation8 + $0x5a8] sm:$0xff]
    %v4075 = vld [vmem:[#allocation8 + $0x5b0] sm:$0xff]
    %v4076 = vld [vmem:[#allocation8 + $0x5b8] sm:$0xff]
    %v4077 = vld [vmem:[#allocation8 + $0x5c0] sm:$0xff]
    %v4078 = vld [vmem:[#allocation8 + $0x5c8] sm:$0xff]
    %v4079 = vld [vmem:[#allocation8 + $0x5d0] sm:$0xff]
    %v4080 = vld [vmem:[#allocation8 + $0x5d8] sm:$0xff]
    %v4081 = vld [vmem:[#allocation8 + $0x5e0] sm:$0xff]
    %v4082 = vld [vmem:[#allocation8 + $0x5e8] sm:$0xff]
    %v4083 = vld [vmem:[#allocation8 + $0x5f0] sm:$0xff]
    %v4084 = vld [vmem:[#allocation8 + $0x5f8] sm:$0xff]
    %v4085 = vld [vmem:[#allocation8 + $0x600] sm:$0xff]
    %v4086 = vld [vmem:[#allocation8 + $0x608] sm:$0xff]
    %v4087 = vld [vmem:[#allocation8 + $0x610] sm:$0xff]
    %v4088 = vld [vmem:[#allocation8 + $0x618] sm:$0xff]
    %v4089 = vld [vmem:[#allocation8 + $0x620] sm:$0xff]
    %v4090 = vld [vmem:[#allocation8 + $0x628] sm:$0xff]
    %v4091 = vld [vmem:[#allocation8 + $0x630] sm:$0xff]
    %v4092 = vld [vmem:[#allocation8 + $0x638] sm:$0xff]
    %v4093 = vld [vmem:[#allocation8 + $0x640] sm:$0xff]
    %v4094 = vld [vmem:[#allocation8 + $0x648] sm:$0xff]
    %v4095 = vld [vmem:[#allocation8 + $0x650] sm:$0xff]
    %v4096 = vld [vmem:[#allocation8 + $0x658] sm:$0xff]
    %v4097 = vld [vmem:[#allocation8 + $0x660] sm:$0xff]
    %v4098 = vld [vmem:[#allocation8 + $0x668] sm:$0xff]
    %v4099 = vld [vmem:[#allocation8 + $0x670] sm:$0xff]
    %v4100 = vld [vmem:[#allocation8 + $0x678] sm:$0xff]
    %v4101 = vld [vmem:[#allocation8 + $0x680] sm:$0xff]
    %v4102 = vld [vmem:[#allocation8 + $0x688] sm:$0xff]
    %v4103 = vld [vmem:[#allocation8 + $0x690] sm:$0xff]
    %v4104 = vld [vmem:[#allocation8 + $0x698] sm:$0xff]
    %v4105 = vld [vmem:[#allocation8 + $0x6a0] sm:$0xff]
    %v4106 = vld [vmem:[#allocation8 + $0x6a8] sm:$0xff]
    %v4107 = vld [vmem:[#allocation8 + $0x6b0] sm:$0xff]
    %v4108 = vld [vmem:[#allocation8 + $0x6b8] sm:$0xff]
    %v4109 = vld [vmem:[#allocation8 + $0x6c0] sm:$0xff]
    %v4110 = vld [vmem:[#allocation8 + $0x6c8] sm:$0xff]
    %v4111 = vld [vmem:[#allocation8 + $0x6d0] sm:$0xff]
    %v4112 = vld [vmem:[#allocation8 + $0x6d8] sm:$0xff]
    %v4113 = vld [vmem:[#allocation8 + $0x6e0] sm:$0xff]
    %v4114 = vld [vmem:[#allocation8 + $0x6e8] sm:$0xff]
    %v4115 = vld [vmem:[#allocation8 + $0x6f0] sm:$0xff]
    %v4116 = vld [vmem:[#allocation8 + $0x6f8] sm:$0xff]
    %v4117 = vld [vmem:[#allocation8 + $0x700] sm:$0xff]
    %v4118 = vld [vmem:[#allocation8 + $0x708] sm:$0xff]
    %v4119 = vld [vmem:[#allocation8 + $0x710] sm:$0xff]
    %v4120 = vld [vmem:[#allocation8 + $0x718] sm:$0xff]
    %v4121 = vld [vmem:[#allocation8 + $0x720] sm:$0xff]
    %v4122 = vld [vmem:[#allocation8 + $0x728] sm:$0xff]
    %v4123 = vld [vmem:[#allocation8 + $0x730] sm:$0xff]
    %v4124 = vld [vmem:[#allocation8 + $0x738] sm:$0xff]
    %v4125 = vld [vmem:[#allocation8 + $0x740] sm:$0xff]
    %v4126 = vld [vmem:[#allocation8 + $0x748] sm:$0xff]
    %v4127 = vld [vmem:[#allocation8 + $0x750] sm:$0xff]
    %v4128 = vld [vmem:[#allocation8 + $0x758] sm:$0xff]
    %v4129 = vld [vmem:[#allocation8 + $0x760] sm:$0xff]
    %v4130 = vld [vmem:[#allocation8 + $0x768] sm:$0xff]
    %v4131 = vld [vmem:[#allocation8 + $0x770] sm:$0xff]
    %v4132 = vld [vmem:[#allocation8 + $0x778] sm:$0xff]
    %v4133 = vld [vmem:[#allocation8 + $0x780] sm:$0xff]
    %v4134 = vld [vmem:[#allocation8 + $0x788] sm:$0xff]
    %v4135 = vld [vmem:[#allocation8 + $0x790] sm:$0xff]
    %v4136 = vld [vmem:[#allocation8 + $0x798] sm:$0xff]
    %v4137 = vld [vmem:[#allocation8 + $0x7a0] sm:$0xff]
    %v4138 = vld [vmem:[#allocation8 + $0x7a8] sm:$0xff]
    %v4139 = vld [vmem:[#allocation8 + $0x7b0] sm:$0xff]
    %v4140 = vld [vmem:[#allocation8 + $0x7b8] sm:$0xff]
    %v4141 = vld [vmem:[#allocation8 + $0x7c0] sm:$0xff]
    %v4142 = vld [vmem:[#allocation8 + $0x7c8] sm:$0xff]
    %v4143 = vld [vmem:[#allocation8 + $0x7d0] sm:$0xff]
    %v4144 = vld [vmem:[#allocation8 + $0x7d8] sm:$0xff]
    %v4145 = vld [vmem:[#allocation8 + $0x7e0] sm:$0xff]
    %v4146 = vld [vmem:[#allocation8 + $0x7e8] sm:$0xff]
    %v4147 = vld [vmem:[#allocation8 + $0x7f0] sm:$0xff]
    %v4148 = vld [vmem:[#allocation8 + $0x7f8] sm:$0xff]
    %v4149 = vld [vmem:[#allocation8 + $0x800] sm:$0xff]
    %v4150 = vld [vmem:[#allocation8 + $0x808] sm:$0xff]
    %v4151 = vld [vmem:[#allocation8 + $0x810] sm:$0xff]
    %v4152 = vld [vmem:[#allocation8 + $0x818] sm:$0xff]
    %v4153 = vld [vmem:[#allocation8 + $0x820] sm:$0xff]
    %v4154 = vld [vmem:[#allocation8 + $0x828] sm:$0xff]
    %v4155 = vld [vmem:[#allocation8 + $0x830] sm:$0xff]
    %v4156 = vld [vmem:[#allocation8 + $0x838] sm:$0xff]
    %v4157 = vld [vmem:[#allocation8 + $0x840] sm:$0xff]
    %v4158 = vld [vmem:[#allocation8 + $0x848] sm:$0xff]
    %v4159 = vld [vmem:[#allocation8 + $0x850] sm:$0xff]
    %v4160 = vld [vmem:[#allocation8 + $0x858] sm:$0xff]
    %v4161 = vld [vmem:[#allocation8 + $0x860] sm:$0xff]
    %v4162 = vld [vmem:[#allocation8 + $0x868] sm:$0xff]
    %v4163 = vld [vmem:[#allocation8 + $0x870] sm:$0xff]
    %v4164 = vld [vmem:[#allocation8 + $0x878] sm:$0xff]
    %v4165 = vld [vmem:[#allocation8 + $0x880] sm:$0xff]
    %v4166 = vld [vmem:[#allocation8 + $0x888] sm:$0xff]
    %v4167 = vld [vmem:[#allocation8 + $0x890] sm:$0xff]
    %v4168 = vld [vmem:[#allocation8 + $0x898] sm:$0xff]
    %v4169 = vld [vmem:[#allocation8 + $0x8a0] sm:$0xff]
    %v4170 = vld [vmem:[#allocation8 + $0x8a8] sm:$0xff]
    %v4171 = vld [vmem:[#allocation8 + $0x8b0] sm:$0xff]
    %v4172 = vld [vmem:[#allocation8 + $0x8b8] sm:$0xff]
    %v4173 = vld [vmem:[#allocation8 + $0x8c0] sm:$0xff]
    %v4174 = vld [vmem:[#allocation8 + $0x8c8] sm:$0xff]
    %v4175 = vld [vmem:[#allocation8 + $0x8d0] sm:$0xff]
    %v4176 = vld [vmem:[#allocation8 + $0x8d8] sm:$0xff]
    %v4177 = vld [vmem:[#allocation8 + $0x8e0] sm:$0xff]
    %v4178 = vld [vmem:[#allocation8 + $0x8e8] sm:$0xff]
    %v4179 = vld [vmem:[#allocation8 + $0x8f0] sm:$0xff]
    %v4180 = vld [vmem:[#allocation8 + $0x8f8] sm:$0xff]
    %v4181 = vld [vmem:[#allocation8 + $0x900] sm:$0xff]
    %v4182 = vld [vmem:[#allocation8 + $0x908] sm:$0xff]
    %v4183 = vld [vmem:[#allocation8 + $0x910] sm:$0xff]
    %v4184 = vld [vmem:[#allocation8 + $0x918] sm:$0xff]
    %v4185 = vld [vmem:[#allocation8 + $0x920] sm:$0xff]
    %v4186 = vld [vmem:[#allocation8 + $0x928] sm:$0xff]
    %v4187 = vld [vmem:[#allocation8 + $0x930] sm:$0xff]
    %v4188 = vld [vmem:[#allocation8 + $0x938] sm:$0xff]
    %v4189 = vld [vmem:[#allocation8 + $0x940] sm:$0xff]
    %v4190 = vld [vmem:[#allocation8 + $0x948] sm:$0xff]
    %v4191 = vld [vmem:[#allocation8 + $0x950] sm:$0xff]
    %v4192 = vld [vmem:[#allocation8 + $0x958] sm:$0xff]
    %v4193 = vld [vmem:[#allocation8 + $0x960] sm:$0xff]
    %v4194 = vld [vmem:[#allocation8 + $0x968] sm:$0xff]
    %v4195 = vld [vmem:[#allocation8 + $0x970] sm:$0xff]
    %v4196 = vld [vmem:[#allocation8 + $0x978] sm:$0xff]
    %v4197 = vld [vmem:[#allocation8 + $0x980] sm:$0xff]
    %v4198 = vld [vmem:[#allocation8 + $0x988] sm:$0xff]
    %v4199 = vld [vmem:[#allocation8 + $0x990] sm:$0xff]
    %v4200 = vld [vmem:[#allocation8 + $0x998] sm:$0xff]
    %v4201 = vld [vmem:[#allocation8 + $0x9a0] sm:$0xff]
    %v4202 = vld [vmem:[#allocation8 + $0x9a8] sm:$0xff]
    %v4203 = vld [vmem:[#allocation8 + $0x9b0] sm:$0xff]
    %v4204 = vld [vmem:[#allocation8 + $0x9b8] sm:$0xff]
    %v4205 = vld [vmem:[#allocation8 + $0x9c0] sm:$0xff]
    %v4206 = vld [vmem:[#allocation8 + $0x9c8] sm:$0xff]
    %v4207 = vld [vmem:[#allocation8 + $0x9d0] sm:$0xff]
    %v4208 = vld [vmem:[#allocation8 + $0x9d8] sm:$0xff]
    %v4209 = vld [vmem:[#allocation8 + $0x9e0] sm:$0xff]
    %v4210 = vld [vmem:[#allocation8 + $0x9e8] sm:$0xff]
    %v4211 = vld [vmem:[#allocation8 + $0x9f0] sm:$0xff]
    %v4212 = vld [vmem:[#allocation8 + $0x9f8] sm:$0xff]
    %v4213 = vld [vmem:[#allocation8 + $0xa00] sm:$0xff]
    %v4214 = vld [vmem:[#allocation8 + $0xa08] sm:$0xff]
    %v4215 = vld [vmem:[#allocation8 + $0xa10] sm:$0xff]
    %v4216 = vld [vmem:[#allocation8 + $0xa18] sm:$0xff]
    %v4217 = vld [vmem:[#allocation8 + $0xa20] sm:$0xff]
    %v4218 = vld [vmem:[#allocation8 + $0xa28] sm:$0xff]
    %v4219 = vld [vmem:[#allocation8 + $0xa30] sm:$0xff]
    %v4220 = vld [vmem:[#allocation8 + $0xa38] sm:$0xff]
    %v4221 = vld [vmem:[#allocation8 + $0xa40] sm:$0xff]
    %v4222 = vld [vmem:[#allocation8 + $0xa48] sm:$0xff]
    %v4223 = vld [vmem:[#allocation8 + $0xa50] sm:$0xff]
    %v4224 = vld [vmem:[#allocation8 + $0xa58] sm:$0xff]
    %v4225 = vld [vmem:[#allocation8 + $0xa60] sm:$0xff]
    %v4226 = vld [vmem:[#allocation8 + $0xa68] sm:$0xff]
    %v4227 = vld [vmem:[#allocation8 + $0xa70] sm:$0xff]
    %v4228 = vld [vmem:[#allocation8 + $0xa78] sm:$0xff]
    %v4229 = vld [vmem:[#allocation8 + $0xa80] sm:$0xff]
    %v4230 = vld [vmem:[#allocation8 + $0xa88] sm:$0xff]
    %v4231 = vld [vmem:[#allocation8 + $0xa90] sm:$0xff]
    %v4232 = vld [vmem:[#allocation8 + $0xa98] sm:$0xff]
    %v4233 = vld [vmem:[#allocation8 + $0xaa0] sm:$0xff]
    %v4234 = vld [vmem:[#allocation8 + $0xaa8] sm:$0xff]
    %v4235 = vld [vmem:[#allocation8 + $0xab0] sm:$0xff]
    %v4236 = vld [vmem:[#allocation8 + $0xab8] sm:$0xff]
    %v4237 = vld [vmem:[#allocation8 + $0xac0] sm:$0xff]
    %v4238 = vld [vmem:[#allocation8 + $0xac8] sm:$0xff]
    %v4239 = vld [vmem:[#allocation8 + $0xad0] sm:$0xff]
    %v4240 = vld [vmem:[#allocation8 + $0xad8] sm:$0xff]
    %v4241 = vld [vmem:[#allocation8 + $0xae0] sm:$0xff]
    %v4242 = vld [vmem:[#allocation8 + $0xae8] sm:$0xff]
    %v4243 = vld [vmem:[#allocation8 + $0xaf0] sm:$0xff]
    %v4244 = vld [vmem:[#allocation8 + $0xaf8] sm:$0xff]
    %v4245 = vld [vmem:[#allocation8 + $0xb00] sm:$0xff]
    %v4246 = vld [vmem:[#allocation8 + $0xb08] sm:$0xff]
    %v4247 = vld [vmem:[#allocation8 + $0xb10] sm:$0xff]
    %v4248 = vld [vmem:[#allocation8 + $0xb18] sm:$0xff]
    %v4249 = vld [vmem:[#allocation8 + $0xb20] sm:$0xff]
    %v4250 = vld [vmem:[#allocation8 + $0xb28] sm:$0xff]
    %v4251 = vld [vmem:[#allocation8 + $0xb30] sm:$0xff]
    %v4252 = vld [vmem:[#allocation8 + $0xb38] sm:$0xff]
    %v4253 = vld [vmem:[#allocation8 + $0xb40] sm:$0xff]
    %v4254 = vld [vmem:[#allocation8 + $0xb48] sm:$0xff]
    %v4255 = vld [vmem:[#allocation8 + $0xb50] sm:$0xff]
    %v4256 = vld [vmem:[#allocation8 + $0xb58] sm:$0xff]
    %v4257 = vld [vmem:[#allocation8 + $0xb60] sm:$0xff]
    %v4258 = vld [vmem:[#allocation8 + $0xb68] sm:$0xff]
    %v4259 = vld [vmem:[#allocation8 + $0xb70] sm:$0xff]
    %v4260 = vld [vmem:[#allocation8 + $0xb78] sm:$0xff]
    %v4261 = vld [vmem:[#allocation8 + $0xb80] sm:$0xff]
    %v4262 = vld [vmem:[#allocation8 + $0xb88] sm:$0xff]
    %v4263 = vld [vmem:[#allocation8 + $0xb90] sm:$0xff]
    %v4264 = vld [vmem:[#allocation8 + $0xb98] sm:$0xff]
    %v4265 = vld [vmem:[#allocation8 + $0xba0] sm:$0xff]
    %v4266 = vld [vmem:[#allocation8 + $0xba8] sm:$0xff]
    %v4267 = vld [vmem:[#allocation8 + $0xbb0] sm:$0xff]
    %v4268 = vld [vmem:[#allocation8 + $0xbb8] sm:$0xff]
    %v4269 = vld [vmem:[#allocation8 + $0xbc0] sm:$0xff]
    %v4270 = vld [vmem:[#allocation8 + $0xbc8] sm:$0xff]
    %v4271 = vld [vmem:[#allocation8 + $0xbd0] sm:$0xff]
    %v4272 = vld [vmem:[#allocation8 + $0xbd8] sm:$0xff]
    %v4273 = vld [vmem:[#allocation8 + $0xbe0] sm:$0xff]
    %v4274 = vld [vmem:[#allocation8 + $0xbe8] sm:$0xff]
    %v4275 = vld [vmem:[#allocation8 + $0xbf0] sm:$0xff]
    %v4276 = vld [vmem:[#allocation8 + $0xbf8] sm:$0xff]
    %v4277 = vld [vmem:[#allocation8 + $0xc00] sm:$0xff]
    %v4278 = vld [vmem:[#allocation8 + $0xc08] sm:$0xff]
    %v4279 = vld [vmem:[#allocation8 + $0xc10] sm:$0xff]
    %v4280 = vld [vmem:[#allocation8 + $0xc18] sm:$0xff]
    %v4281 = vld [vmem:[#allocation8 + $0xc20] sm:$0xff]
    %v4282 = vld [vmem:[#allocation8 + $0xc28] sm:$0xff]
    %v4283 = vld [vmem:[#allocation8 + $0xc30] sm:$0xff]
    %v4284 = vld [vmem:[#allocation8 + $0xc38] sm:$0xff]
    %v4285 = vld [vmem:[#allocation8 + $0xc40] sm:$0xff]
    %v4286 = vld [vmem:[#allocation8 + $0xc48] sm:$0xff]
    %v4287 = vld [vmem:[#allocation8 + $0xc50] sm:$0xff]
    %v4288 = vld [vmem:[#allocation8 + $0xc58] sm:$0xff]
    %v4289 = vld [vmem:[#allocation8 + $0xc60] sm:$0xff]
    %v4290 = vld [vmem:[#allocation8 + $0xc68] sm:$0xff]
    %v4291 = vld [vmem:[#allocation8 + $0xc70] sm:$0xff]
    %v4292 = vld [vmem:[#allocation8 + $0xc78] sm:$0xff]
    %v4293 = vld [vmem:[#allocation8 + $0xc80] sm:$0xff]
    %v4294 = vld [vmem:[#allocation8 + $0xc88] sm:$0xff]
    %v4295 = vld [vmem:[#allocation8 + $0xc90] sm:$0xff]
    %v4296 = vld [vmem:[#allocation8 + $0xc98] sm:$0xff]
    %v4297 = vld [vmem:[#allocation8 + $0xca0] sm:$0xff]
    %v4298 = vld [vmem:[#allocation8 + $0xca8] sm:$0xff]
    %v4299 = vld [vmem:[#allocation8 + $0xcb0] sm:$0xff]
    %v4300 = vld [vmem:[#allocation8 + $0xcb8] sm:$0xff]
    %v4301 = vld [vmem:[#allocation8 + $0xcc0] sm:$0xff]
    %v4302 = vld [vmem:[#allocation8 + $0xcc8] sm:$0xff]
    %v4303 = vld [vmem:[#allocation8 + $0xcd0] sm:$0xff]
    %v4304 = vld [vmem:[#allocation8 + $0xcd8] sm:$0xff]
    %v4305 = vld [vmem:[#allocation8 + $0xce0] sm:$0xff]
    %v4306 = vld [vmem:[#allocation8 + $0xce8] sm:$0xff]
    %v4307 = vld [vmem:[#allocation8 + $0xcf0] sm:$0xff]
    %v4308 = vld [vmem:[#allocation8 + $0xcf8] sm:$0xff]
    %v4309 = vld [vmem:[#allocation8 + $0xd00] sm:$0xff]
    %v4310 = vld [vmem:[#allocation8 + $0xd08] sm:$0xff]
    %v4311 = vld [vmem:[#allocation8 + $0xd10] sm:$0xff]
    %v4312 = vld [vmem:[#allocation8 + $0xd18] sm:$0xff]
    %v4313 = vld [vmem:[#allocation8 + $0xd20] sm:$0xff]
    %v4314 = vld [vmem:[#allocation8 + $0xd28] sm:$0xff]
    %v4315 = vld [vmem:[#allocation8 + $0xd30] sm:$0xff]
    %v4316 = vld [vmem:[#allocation8 + $0xd38] sm:$0xff]
    %v4317 = vld [vmem:[#allocation8 + $0xd40] sm:$0xff]
    %v4318 = vld [vmem:[#allocation8 + $0xd48] sm:$0xff]
    %v4319 = vld [vmem:[#allocation8 + $0xd50] sm:$0xff]
    %v4320 = vld [vmem:[#allocation8 + $0xd58] sm:$0xff]
    %v4321 = vld [vmem:[#allocation8 + $0xd60] sm:$0xff]
    %v4322 = vld [vmem:[#allocation8 + $0xd68] sm:$0xff]
    %v4323 = vld [vmem:[#allocation8 + $0xd70] sm:$0xff]
    %v4324 = vld [vmem:[#allocation8 + $0xd78] sm:$0xff]
    %v4325 = vld [vmem:[#allocation8 + $0xd80] sm:$0xff]
    %v4326 = vld [vmem:[#allocation8 + $0xd88] sm:$0xff]
    %v4327 = vld [vmem:[#allocation8 + $0xd90] sm:$0xff]
    %v4328 = vld [vmem:[#allocation8 + $0xd98] sm:$0xff]
    %v4329 = vld [vmem:[#allocation8 + $0xda0] sm:$0xff]
    %v4330 = vld [vmem:[#allocation8 + $0xda8] sm:$0xff]
    %v4331 = vld [vmem:[#allocation8 + $0xdb0] sm:$0xff]
    %v4332 = vld [vmem:[#allocation8 + $0xdb8] sm:$0xff]
    %v4333 = vld [vmem:[#allocation8 + $0xdc0] sm:$0xff]
    %v4334 = vld [vmem:[#allocation8 + $0xdc8] sm:$0xff]
    %v4335 = vld [vmem:[#allocation8 + $0xdd0] sm:$0xff]
    %v4336 = vld [vmem:[#allocation8 + $0xdd8] sm:$0xff]
    %v4337 = vld [vmem:[#allocation8 + $0xde0] sm:$0xff]
    %v4338 = vld [vmem:[#allocation8 + $0xde8] sm:$0xff]
    %v4339 = vld [vmem:[#allocation8 + $0xdf0] sm:$0xff]
    %v4340 = vld [vmem:[#allocation8 + $0xdf8] sm:$0xff]
    %v4341 = vld [vmem:[#allocation8 + $0xe00] sm:$0xff]
    %v4342 = vld [vmem:[#allocation8 + $0xe08] sm:$0xff]
    %v4343 = vld [vmem:[#allocation8 + $0xe10] sm:$0xff]
    %v4344 = vld [vmem:[#allocation8 + $0xe18] sm:$0xff]
    %v4345 = vld [vmem:[#allocation8 + $0xe20] sm:$0xff]
    %v4346 = vld [vmem:[#allocation8 + $0xe28] sm:$0xff]
    %v4347 = vld [vmem:[#allocation8 + $0xe30] sm:$0xff]
    %v4348 = vld [vmem:[#allocation8 + $0xe38] sm:$0xff]
    %v4349 = vld [vmem:[#allocation8 + $0xe40] sm:$0xff]
    %v4350 = vld [vmem:[#allocation8 + $0xe48] sm:$0xff]
    %v4351 = vld [vmem:[#allocation8 + $0xe50] sm:$0xff]
    %v4352 = vld [vmem:[#allocation8 + $0xe58] sm:$0xff]
    %v4353 = vld [vmem:[#allocation8 + $0xe60] sm:$0xff]
    %v4354 = vld [vmem:[#allocation8 + $0xe68] sm:$0xff]
    %v4355 = vld [vmem:[#allocation8 + $0xe70] sm:$0xff]
    %v4356 = vld [vmem:[#allocation8 + $0xe78] sm:$0xff]
    %v4357 = vld [vmem:[#allocation8 + $0xe80] sm:$0xff]
    %v4358 = vld [vmem:[#allocation8 + $0xe88] sm:$0xff]
    %v4359 = vld [vmem:[#allocation8 + $0xe90] sm:$0xff]
    %v4360 = vld [vmem:[#allocation8 + $0xe98] sm:$0xff]
    %v4361 = vld [vmem:[#allocation8 + $0xea0] sm:$0xff]
    %v4362 = vld [vmem:[#allocation8 + $0xea8] sm:$0xff]
    %v4363 = vld [vmem:[#allocation8 + $0xeb0] sm:$0xff]
    %v4364 = vld [vmem:[#allocation8 + $0xeb8] sm:$0xff]
    %v4365 = vld [vmem:[#allocation8 + $0xec0] sm:$0xff]
    %v4366 = vld [vmem:[#allocation8 + $0xec8] sm:$0xff]
    %v4367 = vld [vmem:[#allocation8 + $0xed0] sm:$0xff]
    %v4368 = vld [vmem:[#allocation8 + $0xed8] sm:$0xff]
    %v4369 = vld [vmem:[#allocation8 + $0xee0] sm:$0xff]
    %v4370 = vld [vmem:[#allocation8 + $0xee8] sm:$0xff]
    %v4371 = vld [vmem:[#allocation8 + $0xef0] sm:$0xff]
    %v4372 = vld [vmem:[#allocation8 + $0xef8] sm:$0xff]
    %v4373 = vld [vmem:[#allocation8 + $0xf00] sm:$0xff]
    %v4374 = vld [vmem:[#allocation8 + $0xf08] sm:$0xff]
    %v4375 = vld [vmem:[#allocation8 + $0xf10] sm:$0xff]
    %v4376 = vld [vmem:[#allocation8 + $0xf18] sm:$0xff]
    %v4377 = vld [vmem:[#allocation8 + $0xf20] sm:$0xff]
    %v4378 = vld [vmem:[#allocation8 + $0xf28] sm:$0xff]
    %v4379 = vld [vmem:[#allocation8 + $0xf30] sm:$0xff]
    %v4380 = vld [vmem:[#allocation8 + $0xf38] sm:$0xff]
    %v4381 = vld [vmem:[#allocation8 + $0xf40] sm:$0xff]
    %v4382 = vld [vmem:[#allocation8 + $0xf48] sm:$0xff]
    %v4383 = vld [vmem:[#allocation8 + $0xf50] sm:$0xff]
    %v4384 = vld [vmem:[#allocation8 + $0xf58] sm:$0xff]
    %v4385 = vld [vmem:[#allocation8 + $0xf60] sm:$0xff]
    %v4386 = vld [vmem:[#allocation8 + $0xf68] sm:$0xff]
    %v4387 = vld [vmem:[#allocation8 + $0xf70] sm:$0xff]
    %v4388 = vld [vmem:[#allocation8 + $0xf78] sm:$0xff]
    %v4389 = vld [vmem:[#allocation8 + $0xf80] sm:$0xff]
    %v4390 = vld [vmem:[#allocation8 + $0xf88] sm:$0xff]
    %v4391 = vld [vmem:[#allocation8 + $0xf90] sm:$0xff]
    %v4392 = vld [vmem:[#allocation8 + $0xf98] sm:$0xff]
    %v4393 = vld [vmem:[#allocation8 + $0xfa0] sm:$0xff]
    %v4394 = vld [vmem:[#allocation8 + $0xfa8] sm:$0xff]
    %v4395 = vld [vmem:[#allocation8 + $0xfb0] sm:$0xff]
    %v4396 = vld [vmem:[#allocation8 + $0xfb8] sm:$0xff]
    %v4397 = vld [vmem:[#allocation8 + $0xfc0] sm:$0xff]
    %v4398 = vld [vmem:[#allocation8 + $0xfc8] sm:$0xff]
    %v4399 = vld [vmem:[#allocation8 + $0xfd0] sm:$0xff]
    %v4400 = vld [vmem:[#allocation8 + $0xfd8] sm:$0xff]
    %v4401 = vld [vmem:[#allocation8 + $0xfe0] sm:$0xff]
    %v4402 = vld [vmem:[#allocation8 + $0xfe8] sm:$0xff]
    %v4403 = vld [vmem:[#allocation8 + $0xff0] sm:$0xff]
    %v4404 = vld [vmem:[#allocation8 + $0xff8] sm:$0xff]
    %v4405 = vld [vmem:[#allocation10] sm:$0xff]
    %v4407 = vlaneseq
    %v4408 = vshrl.u32 %v4407, 7
    %v4409 = vsub.s32 0, %v4408
    %v4410 = vrot.slane %v4405, %v4409
    %v4411 = vlaneseq
    %v4412 = vshrl.u32 %v4411, 7
    %v4413 = vsub.s32 1, %v4412
    %v4414 = vrot.slane %v4405, %v4413
    %v4415 = vlaneseq
    %v4416 = vshrl.u32 %v4415, 7
    %v4417 = vsub.s32 2, %v4416
    %v4418 = vrot.slane %v4405, %v4417
    %v4419 = vlaneseq
    %v4420 = vshrl.u32 %v4419, 7
    %v4421 = vsub.s32 3, %v4420
    %v4422 = vrot.slane %v4405, %v4421
    %v4423 = vlaneseq
    %v4424 = vshrl.u32 %v4423, 7
    %v4425 = vsub.s32 4, %v4424
    %v4426 = vrot.slane %v4405, %v4425
    %v4427 = vlaneseq
    %v4428 = vshrl.u32 %v4427, 7
    %v4429 = vsub.s32 5, %v4428
    %v4430 = vrot.slane %v4405, %v4429
    %v4431 = vlaneseq
    %v4432 = vshrl.u32 %v4431, 7
    %v4433 = vsub.s32 6, %v4432
    %v4434 = vrot.slane %v4405, %v4433
    %v4435 = vlaneseq
    %v4436 = vshrl.u32 %v4435, 7
    %v4437 = vsub.s32 7, %v4436
    %v4438 = vrot.slane %v4405, %v4437
    %v4959 = vunpack.c.l.b16 %v3893
    %v4960 = vunpack.c.h.b16 %v3893
    %v4961 = vunpack.c.l.b16 %v3894
    %v4962 = vunpack.c.h.b16 %v3894
    %v4963 = vunpack.c.l.b16 %v3895
    %v4964 = vunpack.c.h.b16 %v3895
    %v4965 = vunpack.c.l.b16 %v3896
    %v4966 = vunpack.c.h.b16 %v3896
    %v4967 = vunpack.c.l.b16 %v3897
    %v4968 = vunpack.c.h.b16 %v3897
    %v4969 = vunpack.c.l.b16 %v3898
    %v4970 = vunpack.c.h.b16 %v3898
    %v4971 = vunpack.c.l.b16 %v3899
    %v4972 = vunpack.c.h.b16 %v3899
    %v4973 = vunpack.c.l.b16 %v3900
    %v4974 = vunpack.c.h.b16 %v3900
    %v4975 = vunpack.c.l.b16 %v3901
    %v4976 = vunpack.c.h.b16 %v3901
    %v4977 = vunpack.c.l.b16 %v3902
    %v4978 = vunpack.c.h.b16 %v3902
    %v4979 = vunpack.c.l.b16 %v3903
    %v4980 = vunpack.c.h.b16 %v3903
    %v4981 = vunpack.c.l.b16 %v3904
    %v4982 = vunpack.c.h.b16 %v3904
    %v4983 = vunpack.c.l.b16 %v3905
    %v4984 = vunpack.c.h.b16 %v3905
    %v4985 = vunpack.c.l.b16 %v3906
    %v4986 = vunpack.c.h.b16 %v3906
    %v4987 = vunpack.c.l.b16 %v3907
    %v4988 = vunpack.c.h.b16 %v3907
    %v4989 = vunpack.c.l.b16 %v3908
    %v4990 = vunpack.c.h.b16 %v3908
    %v4991 = vunpack.c.l.b16 %v3909
    %v4992 = vunpack.c.h.b16 %v3909
    %v4993 = vunpack.c.l.b16 %v3910
    %v4994 = vunpack.c.h.b16 %v3910
    %v4995 = vunpack.c.l.b16 %v3911
    %v4996 = vunpack.c.h.b16 %v3911
    %v4997 = vunpack.c.l.b16 %v3912
    %v4998 = vunpack.c.h.b16 %v3912
    %v4999 = vunpack.c.l.b16 %v3913
    %v5000 = vunpack.c.h.b16 %v3913
    %v5001 = vunpack.c.l.b16 %v3914
    %v5002 = vunpack.c.h.b16 %v3914
    %v5003 = vunpack.c.l.b16 %v3915
    %v5004 = vunpack.c.h.b16 %v3915
    %v5005 = vunpack.c.l.b16 %v3916
    %v5006 = vunpack.c.h.b16 %v3916
    %v5007 = vunpack.c.l.b16 %v3917
    %v5008 = vunpack.c.h.b16 %v3917
    %v5009 = vunpack.c.l.b16 %v3918
    %v5010 = vunpack.c.h.b16 %v3918
    %v5011 = vunpack.c.l.b16 %v3919
    %v5012 = vunpack.c.h.b16 %v3919
    %v5013 = vunpack.c.l.b16 %v3920
    %v5014 = vunpack.c.h.b16 %v3920
    %v5015 = vunpack.c.l.b16 %v3921
    %v5016 = vunpack.c.h.b16 %v3921
    %v5017 = vunpack.c.l.b16 %v3922
    %v5018 = vunpack.c.h.b16 %v3922
    %v5019 = vunpack.c.l.b16 %v3923
    %v5020 = vunpack.c.h.b16 %v3923
    %v5021 = vunpack.c.l.b16 %v3924
    %v5022 = vunpack.c.h.b16 %v3924
    %v5023 = vunpack.c.l.b16 %v3925
    %v5024 = vunpack.c.h.b16 %v3925
    %v5025 = vunpack.c.l.b16 %v3926
    %v5026 = vunpack.c.h.b16 %v3926
    %v5027 = vunpack.c.l.b16 %v3927
    %v5028 = vunpack.c.h.b16 %v3927
    %v5029 = vunpack.c.l.b16 %v3928
    %v5030 = vunpack.c.h.b16 %v3928
    %v5031 = vunpack.c.l.b16 %v3929
    %v5032 = vunpack.c.h.b16 %v3929
    %v5033 = vunpack.c.l.b16 %v3930
    %v5034 = vunpack.c.h.b16 %v3930
    %v5035 = vunpack.c.l.b16 %v3931
    %v5036 = vunpack.c.h.b16 %v3931
    %v5037 = vunpack.c.l.b16 %v3932
    %v5038 = vunpack.c.h.b16 %v3932
    %v5039 = vunpack.c.l.b16 %v3933
    %v5040 = vunpack.c.h.b16 %v3933
    %v5041 = vunpack.c.l.b16 %v3934
    %v5042 = vunpack.c.h.b16 %v3934
    %v5043 = vunpack.c.l.b16 %v3935
    %v5044 = vunpack.c.h.b16 %v3935
    %v5045 = vunpack.c.l.b16 %v3936
    %v5046 = vunpack.c.h.b16 %v3936
    %v5047 = vunpack.c.l.b16 %v3937
    %v5048 = vunpack.c.h.b16 %v3937
    %v5049 = vunpack.c.l.b16 %v3938
    %v5050 = vunpack.c.h.b16 %v3938
    %v5051 = vunpack.c.l.b16 %v3939
    %v5052 = vunpack.c.h.b16 %v3939
    %v5053 = vunpack.c.l.b16 %v3940
    %v5054 = vunpack.c.h.b16 %v3940
    %v5055 = vunpack.c.l.b16 %v3941
    %v5056 = vunpack.c.h.b16 %v3941
    %v5057 = vunpack.c.l.b16 %v3942
    %v5058 = vunpack.c.h.b16 %v3942
    %v5059 = vunpack.c.l.b16 %v3943
    %v5060 = vunpack.c.h.b16 %v3943
    %v5061 = vunpack.c.l.b16 %v3944
    %v5062 = vunpack.c.h.b16 %v3944
    %v5063 = vunpack.c.l.b16 %v3945
    %v5064 = vunpack.c.h.b16 %v3945
    %v5065 = vunpack.c.l.b16 %v3946
    %v5066 = vunpack.c.h.b16 %v3946
    %v5067 = vunpack.c.l.b16 %v3947
    %v5068 = vunpack.c.h.b16 %v3947
    %v5069 = vunpack.c.l.b16 %v3948
    %v5070 = vunpack.c.h.b16 %v3948
    %v5071 = vunpack.c.l.b16 %v3949
    %v5072 = vunpack.c.h.b16 %v3949
    %v5073 = vunpack.c.l.b16 %v3950
    %v5074 = vunpack.c.h.b16 %v3950
    %v5075 = vunpack.c.l.b16 %v3951
    %v5076 = vunpack.c.h.b16 %v3951
    %v5077 = vunpack.c.l.b16 %v3952
    %v5078 = vunpack.c.h.b16 %v3952
    %v5079 = vunpack.c.l.b16 %v3953
    %v5080 = vunpack.c.h.b16 %v3953
    %v5081 = vunpack.c.l.b16 %v3954
    %v5082 = vunpack.c.h.b16 %v3954
    %v5083 = vunpack.c.l.b16 %v3955
    %v5084 = vunpack.c.h.b16 %v3955
    %v5085 = vunpack.c.l.b16 %v3956
    %v5086 = vunpack.c.h.b16 %v3956
    %v5087 = vunpack.c.l.b16 %v3957
    %v5088 = vunpack.c.h.b16 %v3957
    %v5089 = vunpack.c.l.b16 %v3958
    %v5090 = vunpack.c.h.b16 %v3958
    %v5091 = vunpack.c.l.b16 %v3959
    %v5092 = vunpack.c.h.b16 %v3959
    %v5093 = vunpack.c.l.b16 %v3960
    %v5094 = vunpack.c.h.b16 %v3960
    %v5095 = vunpack.c.l.b16 %v3961
    %v5096 = vunpack.c.h.b16 %v3961
    %v5097 = vunpack.c.l.b16 %v3962
    %v5098 = vunpack.c.h.b16 %v3962
    %v5099 = vunpack.c.l.b16 %v3963
    %v5100 = vunpack.c.h.b16 %v3963
    %v5101 = vunpack.c.l.b16 %v3964
    %v5102 = vunpack.c.h.b16 %v3964
    %v5103 = vunpack.c.l.b16 %v3965
    %v5104 = vunpack.c.h.b16 %v3965
    %v5105 = vunpack.c.l.b16 %v3966
    %v5106 = vunpack.c.h.b16 %v3966
    %v5107 = vunpack.c.l.b16 %v3967
    %v5108 = vunpack.c.h.b16 %v3967
    %v5109 = vunpack.c.l.b16 %v3968
    %v5110 = vunpack.c.h.b16 %v3968
    %v5111 = vunpack.c.l.b16 %v3969
    %v5112 = vunpack.c.h.b16 %v3969
    %v5113 = vunpack.c.l.b16 %v3970
    %v5114 = vunpack.c.h.b16 %v3970
    %v5115 = vunpack.c.l.b16 %v3971
    %v5116 = vunpack.c.h.b16 %v3971
    %v5117 = vunpack.c.l.b16 %v3972
    %v5118 = vunpack.c.h.b16 %v3972
    %v5119 = vunpack.c.l.b16 %v3973
    %v5120 = vunpack.c.h.b16 %v3973
    %v5121 = vunpack.c.l.b16 %v3974
    %v5122 = vunpack.c.h.b16 %v3974
    %v5123 = vunpack.c.l.b16 %v3975
    %v5124 = vunpack.c.h.b16 %v3975
    %v5125 = vunpack.c.l.b16 %v3976
    %v5126 = vunpack.c.h.b16 %v3976
    %v5127 = vunpack.c.l.b16 %v3977
    %v5128 = vunpack.c.h.b16 %v3977
    %v5129 = vunpack.c.l.b16 %v3978
    %v5130 = vunpack.c.h.b16 %v3978
    %v5131 = vunpack.c.l.b16 %v3979
    %v5132 = vunpack.c.h.b16 %v3979
    %v5133 = vunpack.c.l.b16 %v3980
    %v5134 = vunpack.c.h.b16 %v3980
    %v5135 = vunpack.c.l.b16 %v3981
    %v5136 = vunpack.c.h.b16 %v3981
    %v5137 = vunpack.c.l.b16 %v3982
    %v5138 = vunpack.c.h.b16 %v3982
    %v5139 = vunpack.c.l.b16 %v3983
    %v5140 = vunpack.c.h.b16 %v3983
    %v5141 = vunpack.c.l.b16 %v3984
    %v5142 = vunpack.c.h.b16 %v3984
    %v5143 = vunpack.c.l.b16 %v3985
    %v5144 = vunpack.c.h.b16 %v3985
    %v5145 = vunpack.c.l.b16 %v3986
    %v5146 = vunpack.c.h.b16 %v3986
    %v5147 = vunpack.c.l.b16 %v3987
    %v5148 = vunpack.c.h.b16 %v3987
    %v5149 = vunpack.c.l.b16 %v3988
    %v5150 = vunpack.c.h.b16 %v3988
    %v5151 = vunpack.c.l.b16 %v3989
    %v5152 = vunpack.c.h.b16 %v3989
    %v5153 = vunpack.c.l.b16 %v3990
    %v5154 = vunpack.c.h.b16 %v3990
    %v5155 = vunpack.c.l.b16 %v3991
    %v5156 = vunpack.c.h.b16 %v3991
    %v5157 = vunpack.c.l.b16 %v3992
    %v5158 = vunpack.c.h.b16 %v3992
    %v5159 = vunpack.c.l.b16 %v3993
    %v5160 = vunpack.c.h.b16 %v3993
    %v5161 = vunpack.c.l.b16 %v3994
    %v5162 = vunpack.c.h.b16 %v3994
    %v5163 = vunpack.c.l.b16 %v3995
    %v5164 = vunpack.c.h.b16 %v3995
    %v5165 = vunpack.c.l.b16 %v3996
    %v5166 = vunpack.c.h.b16 %v3996
    %v5167 = vunpack.c.l.b16 %v3997
    %v5168 = vunpack.c.h.b16 %v3997
    %v5169 = vunpack.c.l.b16 %v3998
    %v5170 = vunpack.c.h.b16 %v3998
    %v5171 = vunpack.c.l.b16 %v3999
    %v5172 = vunpack.c.h.b16 %v3999
    %v5173 = vunpack.c.l.b16 %v4000
    %v5174 = vunpack.c.h.b16 %v4000
    %v5175 = vunpack.c.l.b16 %v4001
    %v5176 = vunpack.c.h.b16 %v4001
    %v5177 = vunpack.c.l.b16 %v4002
    %v5178 = vunpack.c.h.b16 %v4002
    %v5179 = vunpack.c.l.b16 %v4003
    %v5180 = vunpack.c.h.b16 %v4003
    %v5181 = vunpack.c.l.b16 %v4004
    %v5182 = vunpack.c.h.b16 %v4004
    %v5183 = vunpack.c.l.b16 %v4005
    %v5184 = vunpack.c.h.b16 %v4005
    %v5185 = vunpack.c.l.b16 %v4006
    %v5186 = vunpack.c.h.b16 %v4006
    %v5187 = vunpack.c.l.b16 %v4007
    %v5188 = vunpack.c.h.b16 %v4007
    %v5189 = vunpack.c.l.b16 %v4008
    %v5190 = vunpack.c.h.b16 %v4008
    %v5191 = vunpack.c.l.b16 %v4009
    %v5192 = vunpack.c.h.b16 %v4009
    %v5193 = vunpack.c.l.b16 %v4010
    %v5194 = vunpack.c.h.b16 %v4010
    %v5195 = vunpack.c.l.b16 %v4011
    %v5196 = vunpack.c.h.b16 %v4011
    %v5197 = vunpack.c.l.b16 %v4012
    %v5198 = vunpack.c.h.b16 %v4012
    %v5199 = vunpack.c.l.b16 %v4013
    %v5200 = vunpack.c.h.b16 %v4013
    %v5201 = vunpack.c.l.b16 %v4014
    %v5202 = vunpack.c.h.b16 %v4014
    %v5203 = vunpack.c.l.b16 %v4015
    %v5204 = vunpack.c.h.b16 %v4015
    %v5205 = vunpack.c.l.b16 %v4016
    %v5206 = vunpack.c.h.b16 %v4016
    %v5207 = vunpack.c.l.b16 %v4017
    %v5208 = vunpack.c.h.b16 %v4017
    %v5209 = vunpack.c.l.b16 %v4018
    %v5210 = vunpack.c.h.b16 %v4018
    %v5211 = vunpack.c.l.b16 %v4019
    %v5212 = vunpack.c.h.b16 %v4019
    %v5213 = vunpack.c.l.b16 %v4020
    %v5214 = vunpack.c.h.b16 %v4020
    %v5215 = vunpack.c.l.b16 %v4021
    %v5216 = vunpack.c.h.b16 %v4021
    %v5217 = vunpack.c.l.b16 %v4022
    %v5218 = vunpack.c.h.b16 %v4022
    %v5219 = vunpack.c.l.b16 %v4023
    %v5220 = vunpack.c.h.b16 %v4023
    %v5221 = vunpack.c.l.b16 %v4024
    %v5222 = vunpack.c.h.b16 %v4024
    %v5223 = vunpack.c.l.b16 %v4025
    %v5224 = vunpack.c.h.b16 %v4025
    %v5225 = vunpack.c.l.b16 %v4026
    %v5226 = vunpack.c.h.b16 %v4026
    %v5227 = vunpack.c.l.b16 %v4027
    %v5228 = vunpack.c.h.b16 %v4027
    %v5229 = vunpack.c.l.b16 %v4028
    %v5230 = vunpack.c.h.b16 %v4028
    %v5231 = vunpack.c.l.b16 %v4029
    %v5232 = vunpack.c.h.b16 %v4029
    %v5233 = vunpack.c.l.b16 %v4030
    %v5234 = vunpack.c.h.b16 %v4030
    %v5235 = vunpack.c.l.b16 %v4031
    %v5236 = vunpack.c.h.b16 %v4031
    %v5237 = vunpack.c.l.b16 %v4032
    %v5238 = vunpack.c.h.b16 %v4032
    %v5239 = vunpack.c.l.b16 %v4033
    %v5240 = vunpack.c.h.b16 %v4033
    %v5241 = vunpack.c.l.b16 %v4034
    %v5242 = vunpack.c.h.b16 %v4034
    %v5243 = vunpack.c.l.b16 %v4035
    %v5244 = vunpack.c.h.b16 %v4035
    %v5245 = vunpack.c.l.b16 %v4036
    %v5246 = vunpack.c.h.b16 %v4036
    %v5247 = vunpack.c.l.b16 %v4037
    %v5248 = vunpack.c.h.b16 %v4037
    %v5249 = vunpack.c.l.b16 %v4038
    %v5250 = vunpack.c.h.b16 %v4038
    %v5251 = vunpack.c.l.b16 %v4039
    %v5252 = vunpack.c.h.b16 %v4039
    %v5253 = vunpack.c.l.b16 %v4040
    %v5254 = vunpack.c.h.b16 %v4040
    %v5255 = vunpack.c.l.b16 %v4041
    %v5256 = vunpack.c.h.b16 %v4041
    %v5257 = vunpack.c.l.b16 %v4042
    %v5258 = vunpack.c.h.b16 %v4042
    %v5259 = vunpack.c.l.b16 %v4043
    %v5260 = vunpack.c.h.b16 %v4043
    %v5261 = vunpack.c.l.b16 %v4044
    %v5262 = vunpack.c.h.b16 %v4044
    %v5263 = vunpack.c.l.b16 %v4045
    %v5264 = vunpack.c.h.b16 %v4045
    %v5265 = vunpack.c.l.b16 %v4046
    %v5266 = vunpack.c.h.b16 %v4046
    %v5267 = vunpack.c.l.b16 %v4047
    %v5268 = vunpack.c.h.b16 %v4047
    %v5269 = vunpack.c.l.b16 %v4048
    %v5270 = vunpack.c.h.b16 %v4048
    %v5271 = vunpack.c.l.b16 %v4049
    %v5272 = vunpack.c.h.b16 %v4049
    %v5273 = vunpack.c.l.b16 %v4050
    %v5274 = vunpack.c.h.b16 %v4050
    %v5275 = vunpack.c.l.b16 %v4051
    %v5276 = vunpack.c.h.b16 %v4051
    %v5277 = vunpack.c.l.b16 %v4052
    %v5278 = vunpack.c.h.b16 %v4052
    %v5279 = vunpack.c.l.b16 %v4053
    %v5280 = vunpack.c.h.b16 %v4053
    %v5281 = vunpack.c.l.b16 %v4054
    %v5282 = vunpack.c.h.b16 %v4054
    %v5283 = vunpack.c.l.b16 %v4055
    %v5284 = vunpack.c.h.b16 %v4055
    %v5285 = vunpack.c.l.b16 %v4056
    %v5286 = vunpack.c.h.b16 %v4056
    %v5287 = vunpack.c.l.b16 %v4057
    %v5288 = vunpack.c.h.b16 %v4057
    %v5289 = vunpack.c.l.b16 %v4058
    %v5290 = vunpack.c.h.b16 %v4058
    %v5291 = vunpack.c.l.b16 %v4059
    %v5292 = vunpack.c.h.b16 %v4059
    %v5293 = vunpack.c.l.b16 %v4060
    %v5294 = vunpack.c.h.b16 %v4060
    %v5295 = vunpack.c.l.b16 %v4061
    %v5296 = vunpack.c.h.b16 %v4061
    %v5297 = vunpack.c.l.b16 %v4062
    %v5298 = vunpack.c.h.b16 %v4062
    %v5299 = vunpack.c.l.b16 %v4063
    %v5300 = vunpack.c.h.b16 %v4063
    %v5301 = vunpack.c.l.b16 %v4064
    %v5302 = vunpack.c.h.b16 %v4064
    %v5303 = vunpack.c.l.b16 %v4065
    %v5304 = vunpack.c.h.b16 %v4065
    %v5305 = vunpack.c.l.b16 %v4066
    %v5306 = vunpack.c.h.b16 %v4066
    %v5307 = vunpack.c.l.b16 %v4067
    %v5308 = vunpack.c.h.b16 %v4067
    %v5309 = vunpack.c.l.b16 %v4068
    %v5310 = vunpack.c.h.b16 %v4068
    %v5311 = vunpack.c.l.b16 %v4069
    %v5312 = vunpack.c.h.b16 %v4069
    %v5313 = vunpack.c.l.b16 %v4070
    %v5314 = vunpack.c.h.b16 %v4070
    %v5315 = vunpack.c.l.b16 %v4071
    %v5316 = vunpack.c.h.b16 %v4071
    %v5317 = vunpack.c.l.b16 %v4072
    %v5318 = vunpack.c.h.b16 %v4072
    %v5319 = vunpack.c.l.b16 %v4073
    %v5320 = vunpack.c.h.b16 %v4073
    %v5321 = vunpack.c.l.b16 %v4074
    %v5322 = vunpack.c.h.b16 %v4074
    %v5323 = vunpack.c.l.b16 %v4075
    %v5324 = vunpack.c.h.b16 %v4075
    %v5325 = vunpack.c.l.b16 %v4076
    %v5326 = vunpack.c.h.b16 %v4076
    %v5327 = vunpack.c.l.b16 %v4077
    %v5328 = vunpack.c.h.b16 %v4077
    %v5329 = vunpack.c.l.b16 %v4078
    %v5330 = vunpack.c.h.b16 %v4078
    %v5331 = vunpack.c.l.b16 %v4079
    %v5332 = vunpack.c.h.b16 %v4079
    %v5333 = vunpack.c.l.b16 %v4080
    %v5334 = vunpack.c.h.b16 %v4080
    %v5335 = vunpack.c.l.b16 %v4081
    %v5336 = vunpack.c.h.b16 %v4081
    %v5337 = vunpack.c.l.b16 %v4082
    %v5338 = vunpack.c.h.b16 %v4082
    %v5339 = vunpack.c.l.b16 %v4083
    %v5340 = vunpack.c.h.b16 %v4083
    %v5341 = vunpack.c.l.b16 %v4084
    %v5342 = vunpack.c.h.b16 %v4084
    %v5343 = vunpack.c.l.b16 %v4085
    %v5344 = vunpack.c.h.b16 %v4085
    %v5345 = vunpack.c.l.b16 %v4086
    %v5346 = vunpack.c.h.b16 %v4086
    %v5347 = vunpack.c.l.b16 %v4087
    %v5348 = vunpack.c.h.b16 %v4087
    %v5349 = vunpack.c.l.b16 %v4088
    %v5350 = vunpack.c.h.b16 %v4088
    %v5351 = vunpack.c.l.b16 %v4089
    %v5352 = vunpack.c.h.b16 %v4089
    %v5353 = vunpack.c.l.b16 %v4090
    %v5354 = vunpack.c.h.b16 %v4090
    %v5355 = vunpack.c.l.b16 %v4091
    %v5356 = vunpack.c.h.b16 %v4091
    %v5357 = vunpack.c.l.b16 %v4092
    %v5358 = vunpack.c.h.b16 %v4092
    %v5359 = vunpack.c.l.b16 %v4093
    %v5360 = vunpack.c.h.b16 %v4093
    %v5361 = vunpack.c.l.b16 %v4094
    %v5362 = vunpack.c.h.b16 %v4094
    %v5363 = vunpack.c.l.b16 %v4095
    %v5364 = vunpack.c.h.b16 %v4095
    %v5365 = vunpack.c.l.b16 %v4096
    %v5366 = vunpack.c.h.b16 %v4096
    %v5367 = vunpack.c.l.b16 %v4097
    %v5368 = vunpack.c.h.b16 %v4097
    %v5369 = vunpack.c.l.b16 %v4098
    %v5370 = vunpack.c.h.b16 %v4098
    %v5371 = vunpack.c.l.b16 %v4099
    %v5372 = vunpack.c.h.b16 %v4099
    %v5373 = vunpack.c.l.b16 %v4100
    %v5374 = vunpack.c.h.b16 %v4100
    %v5375 = vunpack.c.l.b16 %v4101
    %v5376 = vunpack.c.h.b16 %v4101
    %v5377 = vunpack.c.l.b16 %v4102
    %v5378 = vunpack.c.h.b16 %v4102
    %v5379 = vunpack.c.l.b16 %v4103
    %v5380 = vunpack.c.h.b16 %v4103
    %v5381 = vunpack.c.l.b16 %v4104
    %v5382 = vunpack.c.h.b16 %v4104
    %v5383 = vunpack.c.l.b16 %v4105
    %v5384 = vunpack.c.h.b16 %v4105
    %v5385 = vunpack.c.l.b16 %v4106
    %v5386 = vunpack.c.h.b16 %v4106
    %v5387 = vunpack.c.l.b16 %v4107
    %v5388 = vunpack.c.h.b16 %v4107
    %v5389 = vunpack.c.l.b16 %v4108
    %v5390 = vunpack.c.h.b16 %v4108
    %v5391 = vunpack.c.l.b16 %v4109
    %v5392 = vunpack.c.h.b16 %v4109
    %v5393 = vunpack.c.l.b16 %v4110
    %v5394 = vunpack.c.h.b16 %v4110
    %v5395 = vunpack.c.l.b16 %v4111
    %v5396 = vunpack.c.h.b16 %v4111
    %v5397 = vunpack.c.l.b16 %v4112
    %v5398 = vunpack.c.h.b16 %v4112
    %v5399 = vunpack.c.l.b16 %v4113
    %v5400 = vunpack.c.h.b16 %v4113
    %v5401 = vunpack.c.l.b16 %v4114
    %v5402 = vunpack.c.h.b16 %v4114
    %v5403 = vunpack.c.l.b16 %v4115
    %v5404 = vunpack.c.h.b16 %v4115
    %v5405 = vunpack.c.l.b16 %v4116
    %v5406 = vunpack.c.h.b16 %v4116
    %v5407 = vunpack.c.l.b16 %v4117
    %v5408 = vunpack.c.h.b16 %v4117
    %v5409 = vunpack.c.l.b16 %v4118
    %v5410 = vunpack.c.h.b16 %v4118
    %v5411 = vunpack.c.l.b16 %v4119
    %v5412 = vunpack.c.h.b16 %v4119
    %v5413 = vunpack.c.l.b16 %v4120
    %v5414 = vunpack.c.h.b16 %v4120
    %v5415 = vunpack.c.l.b16 %v4121
    %v5416 = vunpack.c.h.b16 %v4121
    %v5417 = vunpack.c.l.b16 %v4122
    %v5418 = vunpack.c.h.b16 %v4122
    %v5419 = vunpack.c.l.b16 %v4123
    %v5420 = vunpack.c.h.b16 %v4123
    %v5421 = vunpack.c.l.b16 %v4124
    %v5422 = vunpack.c.h.b16 %v4124
    %v5423 = vunpack.c.l.b16 %v4125
    %v5424 = vunpack.c.h.b16 %v4125
    %v5425 = vunpack.c.l.b16 %v4126
    %v5426 = vunpack.c.h.b16 %v4126
    %v5427 = vunpack.c.l.b16 %v4127
    %v5428 = vunpack.c.h.b16 %v4127
    %v5429 = vunpack.c.l.b16 %v4128
    %v5430 = vunpack.c.h.b16 %v4128
    %v5431 = vunpack.c.l.b16 %v4129
    %v5432 = vunpack.c.h.b16 %v4129
    %v5433 = vunpack.c.l.b16 %v4130
    %v5434 = vunpack.c.h.b16 %v4130
    %v5435 = vunpack.c.l.b16 %v4131
    %v5436 = vunpack.c.h.b16 %v4131
    %v5437 = vunpack.c.l.b16 %v4132
    %v5438 = vunpack.c.h.b16 %v4132
    %v5439 = vunpack.c.l.b16 %v4133
    %v5440 = vunpack.c.h.b16 %v4133
    %v5441 = vunpack.c.l.b16 %v4134
    %v5442 = vunpack.c.h.b16 %v4134
    %v5443 = vunpack.c.l.b16 %v4135
    %v5444 = vunpack.c.h.b16 %v4135
    %v5445 = vunpack.c.l.b16 %v4136
    %v5446 = vunpack.c.h.b16 %v4136
    %v5447 = vunpack.c.l.b16 %v4137
    %v5448 = vunpack.c.h.b16 %v4137
    %v5449 = vunpack.c.l.b16 %v4138
    %v5450 = vunpack.c.h.b16 %v4138
    %v5451 = vunpack.c.l.b16 %v4139
    %v5452 = vunpack.c.h.b16 %v4139
    %v5453 = vunpack.c.l.b16 %v4140
    %v5454 = vunpack.c.h.b16 %v4140
    %v5455 = vunpack.c.l.b16 %v4141
    %v5456 = vunpack.c.h.b16 %v4141
    %v5457 = vunpack.c.l.b16 %v4142
    %v5458 = vunpack.c.h.b16 %v4142
    %v5459 = vunpack.c.l.b16 %v4143
    %v5460 = vunpack.c.h.b16 %v4143
    %v5461 = vunpack.c.l.b16 %v4144
    %v5462 = vunpack.c.h.b16 %v4144
    %v5463 = vunpack.c.l.b16 %v4145
    %v5464 = vunpack.c.h.b16 %v4145
    %v5465 = vunpack.c.l.b16 %v4146
    %v5466 = vunpack.c.h.b16 %v4146
    %v5467 = vunpack.c.l.b16 %v4147
    %v5468 = vunpack.c.h.b16 %v4147
    %v5469 = vunpack.c.l.b16 %v4148
    %v5470 = vunpack.c.h.b16 %v4148
    %v5471 = vunpack.c.l.b16 %v4149
    %v5472 = vunpack.c.h.b16 %v4149
    %v5473 = vunpack.c.l.b16 %v4150
    %v5474 = vunpack.c.h.b16 %v4150
    %v5475 = vunpack.c.l.b16 %v4151
    %v5476 = vunpack.c.h.b16 %v4151
    %v5477 = vunpack.c.l.b16 %v4152
    %v5478 = vunpack.c.h.b16 %v4152
    %v5479 = vunpack.c.l.b16 %v4153
    %v5480 = vunpack.c.h.b16 %v4153
    %v5481 = vunpack.c.l.b16 %v4154
    %v5482 = vunpack.c.h.b16 %v4154
    %v5483 = vunpack.c.l.b16 %v4155
    %v5484 = vunpack.c.h.b16 %v4155
    %v5485 = vunpack.c.l.b16 %v4156
    %v5486 = vunpack.c.h.b16 %v4156
    %v5487 = vunpack.c.l.b16 %v4157
    %v5488 = vunpack.c.h.b16 %v4157
    %v5489 = vunpack.c.l.b16 %v4158
    %v5490 = vunpack.c.h.b16 %v4158
    %v5491 = vunpack.c.l.b16 %v4159
    %v5492 = vunpack.c.h.b16 %v4159
    %v5493 = vunpack.c.l.b16 %v4160
    %v5494 = vunpack.c.h.b16 %v4160
    %v5495 = vunpack.c.l.b16 %v4161
    %v5496 = vunpack.c.h.b16 %v4161
    %v5497 = vunpack.c.l.b16 %v4162
    %v5498 = vunpack.c.h.b16 %v4162
    %v5499 = vunpack.c.l.b16 %v4163
    %v5500 = vunpack.c.h.b16 %v4163
    %v5501 = vunpack.c.l.b16 %v4164
    %v5502 = vunpack.c.h.b16 %v4164
    %v5503 = vunpack.c.l.b16 %v4165
    %v5504 = vunpack.c.h.b16 %v4165
    %v5505 = vunpack.c.l.b16 %v4166
    %v5506 = vunpack.c.h.b16 %v4166
    %v5507 = vunpack.c.l.b16 %v4167
    %v5508 = vunpack.c.h.b16 %v4167
    %v5509 = vunpack.c.l.b16 %v4168
    %v5510 = vunpack.c.h.b16 %v4168
    %v5511 = vunpack.c.l.b16 %v4169
    %v5512 = vunpack.c.h.b16 %v4169
    %v5513 = vunpack.c.l.b16 %v4170
    %v5514 = vunpack.c.h.b16 %v4170
    %v5515 = vunpack.c.l.b16 %v4171
    %v5516 = vunpack.c.h.b16 %v4171
    %v5517 = vunpack.c.l.b16 %v4172
    %v5518 = vunpack.c.h.b16 %v4172
    %v5519 = vunpack.c.l.b16 %v4173
    %v5520 = vunpack.c.h.b16 %v4173
    %v5521 = vunpack.c.l.b16 %v4174
    %v5522 = vunpack.c.h.b16 %v4174
    %v5523 = vunpack.c.l.b16 %v4175
    %v5524 = vunpack.c.h.b16 %v4175
    %v5525 = vunpack.c.l.b16 %v4176
    %v5526 = vunpack.c.h.b16 %v4176
    %v5527 = vunpack.c.l.b16 %v4177
    %v5528 = vunpack.c.h.b16 %v4177
    %v5529 = vunpack.c.l.b16 %v4178
    %v5530 = vunpack.c.h.b16 %v4178
    %v5531 = vunpack.c.l.b16 %v4179
    %v5532 = vunpack.c.h.b16 %v4179
    %v5533 = vunpack.c.l.b16 %v4180
    %v5534 = vunpack.c.h.b16 %v4180
    %v5535 = vunpack.c.l.b16 %v4181
    %v5536 = vunpack.c.h.b16 %v4181
    %v5537 = vunpack.c.l.b16 %v4182
    %v5538 = vunpack.c.h.b16 %v4182
    %v5539 = vunpack.c.l.b16 %v4183
    %v5540 = vunpack.c.h.b16 %v4183
    %v5541 = vunpack.c.l.b16 %v4184
    %v5542 = vunpack.c.h.b16 %v4184
    %v5543 = vunpack.c.l.b16 %v4185
    %v5544 = vunpack.c.h.b16 %v4185
    %v5545 = vunpack.c.l.b16 %v4186
    %v5546 = vunpack.c.h.b16 %v4186
    %v5547 = vunpack.c.l.b16 %v4187
    %v5548 = vunpack.c.h.b16 %v4187
    %v5549 = vunpack.c.l.b16 %v4188
    %v5550 = vunpack.c.h.b16 %v4188
    %v5551 = vunpack.c.l.b16 %v4189
    %v5552 = vunpack.c.h.b16 %v4189
    %v5553 = vunpack.c.l.b16 %v4190
    %v5554 = vunpack.c.h.b16 %v4190
    %v5555 = vunpack.c.l.b16 %v4191
    %v5556 = vunpack.c.h.b16 %v4191
    %v5557 = vunpack.c.l.b16 %v4192
    %v5558 = vunpack.c.h.b16 %v4192
    %v5559 = vunpack.c.l.b16 %v4193
    %v5560 = vunpack.c.h.b16 %v4193
    %v5561 = vunpack.c.l.b16 %v4194
    %v5562 = vunpack.c.h.b16 %v4194
    %v5563 = vunpack.c.l.b16 %v4195
    %v5564 = vunpack.c.h.b16 %v4195
    %v5565 = vunpack.c.l.b16 %v4196
    %v5566 = vunpack.c.h.b16 %v4196
    %v5567 = vunpack.c.l.b16 %v4197
    %v5568 = vunpack.c.h.b16 %v4197
    %v5569 = vunpack.c.l.b16 %v4198
    %v5570 = vunpack.c.h.b16 %v4198
    %v5571 = vunpack.c.l.b16 %v4199
    %v5572 = vunpack.c.h.b16 %v4199
    %v5573 = vunpack.c.l.b16 %v4200
    %v5574 = vunpack.c.h.b16 %v4200
    %v5575 = vunpack.c.l.b16 %v4201
    %v5576 = vunpack.c.h.b16 %v4201
    %v5577 = vunpack.c.l.b16 %v4202
    %v5578 = vunpack.c.h.b16 %v4202
    %v5579 = vunpack.c.l.b16 %v4203
    %v5580 = vunpack.c.h.b16 %v4203
    %v5581 = vunpack.c.l.b16 %v4204
    %v5582 = vunpack.c.h.b16 %v4204
    %v5583 = vunpack.c.l.b16 %v4205
    %v5584 = vunpack.c.h.b16 %v4205
    %v5585 = vunpack.c.l.b16 %v4206
    %v5586 = vunpack.c.h.b16 %v4206
    %v5587 = vunpack.c.l.b16 %v4207
    %v5588 = vunpack.c.h.b16 %v4207
    %v5589 = vunpack.c.l.b16 %v4208
    %v5590 = vunpack.c.h.b16 %v4208
    %v5591 = vunpack.c.l.b16 %v4209
    %v5592 = vunpack.c.h.b16 %v4209
    %v5593 = vunpack.c.l.b16 %v4210
    %v5594 = vunpack.c.h.b16 %v4210
    %v5595 = vunpack.c.l.b16 %v4211
    %v5596 = vunpack.c.h.b16 %v4211
    %v5597 = vunpack.c.l.b16 %v4212
    %v5598 = vunpack.c.h.b16 %v4212
    %v5599 = vunpack.c.l.b16 %v4213
    %v5600 = vunpack.c.h.b16 %v4213
    %v5601 = vunpack.c.l.b16 %v4214
    %v5602 = vunpack.c.h.b16 %v4214
    %v5603 = vunpack.c.l.b16 %v4215
    %v5604 = vunpack.c.h.b16 %v4215
    %v5605 = vunpack.c.l.b16 %v4216
    %v5606 = vunpack.c.h.b16 %v4216
    %v5607 = vunpack.c.l.b16 %v4217
    %v5608 = vunpack.c.h.b16 %v4217
    %v5609 = vunpack.c.l.b16 %v4218
    %v5610 = vunpack.c.h.b16 %v4218
    %v5611 = vunpack.c.l.b16 %v4219
    %v5612 = vunpack.c.h.b16 %v4219
    %v5613 = vunpack.c.l.b16 %v4220
    %v5614 = vunpack.c.h.b16 %v4220
    %v5615 = vunpack.c.l.b16 %v4221
    %v5616 = vunpack.c.h.b16 %v4221
    %v5617 = vunpack.c.l.b16 %v4222
    %v5618 = vunpack.c.h.b16 %v4222
    %v5619 = vunpack.c.l.b16 %v4223
    %v5620 = vunpack.c.h.b16 %v4223
    %v5621 = vunpack.c.l.b16 %v4224
    %v5622 = vunpack.c.h.b16 %v4224
    %v5623 = vunpack.c.l.b16 %v4225
    %v5624 = vunpack.c.h.b16 %v4225
    %v5625 = vunpack.c.l.b16 %v4226
    %v5626 = vunpack.c.h.b16 %v4226
    %v5627 = vunpack.c.l.b16 %v4227
    %v5628 = vunpack.c.h.b16 %v4227
    %v5629 = vunpack.c.l.b16 %v4228
    %v5630 = vunpack.c.h.b16 %v4228
    %v5631 = vunpack.c.l.b16 %v4229
    %v5632 = vunpack.c.h.b16 %v4229
    %v5633 = vunpack.c.l.b16 %v4230
    %v5634 = vunpack.c.h.b16 %v4230
    %v5635 = vunpack.c.l.b16 %v4231
    %v5636 = vunpack.c.h.b16 %v4231
    %v5637 = vunpack.c.l.b16 %v4232
    %v5638 = vunpack.c.h.b16 %v4232
    %v5639 = vunpack.c.l.b16 %v4233
    %v5640 = vunpack.c.h.b16 %v4233
    %v5641 = vunpack.c.l.b16 %v4234
    %v5642 = vunpack.c.h.b16 %v4234
    %v5643 = vunpack.c.l.b16 %v4235
    %v5644 = vunpack.c.h.b16 %v4235
    %v5645 = vunpack.c.l.b16 %v4236
    %v5646 = vunpack.c.h.b16 %v4236
    %v5647 = vunpack.c.l.b16 %v4237
    %v5648 = vunpack.c.h.b16 %v4237
    %v5649 = vunpack.c.l.b16 %v4238
    %v5650 = vunpack.c.h.b16 %v4238
    %v5651 = vunpack.c.l.b16 %v4239
    %v5652 = vunpack.c.h.b16 %v4239
    %v5653 = vunpack.c.l.b16 %v4240
    %v5654 = vunpack.c.h.b16 %v4240
    %v5655 = vunpack.c.l.b16 %v4241
    %v5656 = vunpack.c.h.b16 %v4241
    %v5657 = vunpack.c.l.b16 %v4242
    %v5658 = vunpack.c.h.b16 %v4242
    %v5659 = vunpack.c.l.b16 %v4243
    %v5660 = vunpack.c.h.b16 %v4243
    %v5661 = vunpack.c.l.b16 %v4244
    %v5662 = vunpack.c.h.b16 %v4244
    %v5663 = vunpack.c.l.b16 %v4245
    %v5664 = vunpack.c.h.b16 %v4245
    %v5665 = vunpack.c.l.b16 %v4246
    %v5666 = vunpack.c.h.b16 %v4246
    %v5667 = vunpack.c.l.b16 %v4247
    %v5668 = vunpack.c.h.b16 %v4247
    %v5669 = vunpack.c.l.b16 %v4248
    %v5670 = vunpack.c.h.b16 %v4248
    %v5671 = vunpack.c.l.b16 %v4249
    %v5672 = vunpack.c.h.b16 %v4249
    %v5673 = vunpack.c.l.b16 %v4250
    %v5674 = vunpack.c.h.b16 %v4250
    %v5675 = vunpack.c.l.b16 %v4251
    %v5676 = vunpack.c.h.b16 %v4251
    %v5677 = vunpack.c.l.b16 %v4252
    %v5678 = vunpack.c.h.b16 %v4252
    %v5679 = vunpack.c.l.b16 %v4253
    %v5680 = vunpack.c.h.b16 %v4253
    %v5681 = vunpack.c.l.b16 %v4254
    %v5682 = vunpack.c.h.b16 %v4254
    %v5683 = vunpack.c.l.b16 %v4255
    %v5684 = vunpack.c.h.b16 %v4255
    %v5685 = vunpack.c.l.b16 %v4256
    %v5686 = vunpack.c.h.b16 %v4256
    %v5687 = vunpack.c.l.b16 %v4257
    %v5688 = vunpack.c.h.b16 %v4257
    %v5689 = vunpack.c.l.b16 %v4258
    %v5690 = vunpack.c.h.b16 %v4258
    %v5691 = vunpack.c.l.b16 %v4259
    %v5692 = vunpack.c.h.b16 %v4259
    %v5693 = vunpack.c.l.b16 %v4260
    %v5694 = vunpack.c.h.b16 %v4260
    %v5695 = vunpack.c.l.b16 %v4261
    %v5696 = vunpack.c.h.b16 %v4261
    %v5697 = vunpack.c.l.b16 %v4262
    %v5698 = vunpack.c.h.b16 %v4262
    %v5699 = vunpack.c.l.b16 %v4263
    %v5700 = vunpack.c.h.b16 %v4263
    %v5701 = vunpack.c.l.b16 %v4264
    %v5702 = vunpack.c.h.b16 %v4264
    %v5703 = vunpack.c.l.b16 %v4265
    %v5704 = vunpack.c.h.b16 %v4265
    %v5705 = vunpack.c.l.b16 %v4266
    %v5706 = vunpack.c.h.b16 %v4266
    %v5707 = vunpack.c.l.b16 %v4267
    %v5708 = vunpack.c.h.b16 %v4267
    %v5709 = vunpack.c.l.b16 %v4268
    %v5710 = vunpack.c.h.b16 %v4268
    %v5711 = vunpack.c.l.b16 %v4269
    %v5712 = vunpack.c.h.b16 %v4269
    %v5713 = vunpack.c.l.b16 %v4270
    %v5714 = vunpack.c.h.b16 %v4270
    %v5715 = vunpack.c.l.b16 %v4271
    %v5716 = vunpack.c.h.b16 %v4271
    %v5717 = vunpack.c.l.b16 %v4272
    %v5718 = vunpack.c.h.b16 %v4272
    %v5719 = vunpack.c.l.b16 %v4273
    %v5720 = vunpack.c.h.b16 %v4273
    %v5721 = vunpack.c.l.b16 %v4274
    %v5722 = vunpack.c.h.b16 %v4274
    %v5723 = vunpack.c.l.b16 %v4275
    %v5724 = vunpack.c.h.b16 %v4275
    %v5725 = vunpack.c.l.b16 %v4276
    %v5726 = vunpack.c.h.b16 %v4276
    %v5727 = vunpack.c.l.b16 %v4277
    %v5728 = vunpack.c.h.b16 %v4277
    %v5729 = vunpack.c.l.b16 %v4278
    %v5730 = vunpack.c.h.b16 %v4278
    %v5731 = vunpack.c.l.b16 %v4279
    %v5732 = vunpack.c.h.b16 %v4279
    %v5733 = vunpack.c.l.b16 %v4280
    %v5734 = vunpack.c.h.b16 %v4280
    %v5735 = vunpack.c.l.b16 %v4281
    %v5736 = vunpack.c.h.b16 %v4281
    %v5737 = vunpack.c.l.b16 %v4282
    %v5738 = vunpack.c.h.b16 %v4282
    %v5739 = vunpack.c.l.b16 %v4283
    %v5740 = vunpack.c.h.b16 %v4283
    %v5741 = vunpack.c.l.b16 %v4284
    %v5742 = vunpack.c.h.b16 %v4284
    %v5743 = vunpack.c.l.b16 %v4285
    %v5744 = vunpack.c.h.b16 %v4285
    %v5745 = vunpack.c.l.b16 %v4286
    %v5746 = vunpack.c.h.b16 %v4286
    %v5747 = vunpack.c.l.b16 %v4287
    %v5748 = vunpack.c.h.b16 %v4287
    %v5749 = vunpack.c.l.b16 %v4288
    %v5750 = vunpack.c.h.b16 %v4288
    %v5751 = vunpack.c.l.b16 %v4289
    %v5752 = vunpack.c.h.b16 %v4289
    %v5753 = vunpack.c.l.b16 %v4290
    %v5754 = vunpack.c.h.b16 %v4290
    %v5755 = vunpack.c.l.b16 %v4291
    %v5756 = vunpack.c.h.b16 %v4291
    %v5757 = vunpack.c.l.b16 %v4292
    %v5758 = vunpack.c.h.b16 %v4292
    %v5759 = vunpack.c.l.b16 %v4293
    %v5760 = vunpack.c.h.b16 %v4293
    %v5761 = vunpack.c.l.b16 %v4294
    %v5762 = vunpack.c.h.b16 %v4294
    %v5763 = vunpack.c.l.b16 %v4295
    %v5764 = vunpack.c.h.b16 %v4295
    %v5765 = vunpack.c.l.b16 %v4296
    %v5766 = vunpack.c.h.b16 %v4296
    %v5767 = vunpack.c.l.b16 %v4297
    %v5768 = vunpack.c.h.b16 %v4297
    %v5769 = vunpack.c.l.b16 %v4298
    %v5770 = vunpack.c.h.b16 %v4298
    %v5771 = vunpack.c.l.b16 %v4299
    %v5772 = vunpack.c.h.b16 %v4299
    %v5773 = vunpack.c.l.b16 %v4300
    %v5774 = vunpack.c.h.b16 %v4300
    %v5775 = vunpack.c.l.b16 %v4301
    %v5776 = vunpack.c.h.b16 %v4301
    %v5777 = vunpack.c.l.b16 %v4302
    %v5778 = vunpack.c.h.b16 %v4302
    %v5779 = vunpack.c.l.b16 %v4303
    %v5780 = vunpack.c.h.b16 %v4303
    %v5781 = vunpack.c.l.b16 %v4304
    %v5782 = vunpack.c.h.b16 %v4304
    %v5783 = vunpack.c.l.b16 %v4305
    %v5784 = vunpack.c.h.b16 %v4305
    %v5785 = vunpack.c.l.b16 %v4306
    %v5786 = vunpack.c.h.b16 %v4306
    %v5787 = vunpack.c.l.b16 %v4307
    %v5788 = vunpack.c.h.b16 %v4307
    %v5789 = vunpack.c.l.b16 %v4308
    %v5790 = vunpack.c.h.b16 %v4308
    %v5791 = vunpack.c.l.b16 %v4309
    %v5792 = vunpack.c.h.b16 %v4309
    %v5793 = vunpack.c.l.b16 %v4310
    %v5794 = vunpack.c.h.b16 %v4310
    %v5795 = vunpack.c.l.b16 %v4311
    %v5796 = vunpack.c.h.b16 %v4311
    %v5797 = vunpack.c.l.b16 %v4312
    %v5798 = vunpack.c.h.b16 %v4312
    %v5799 = vunpack.c.l.b16 %v4313
    %v5800 = vunpack.c.h.b16 %v4313
    %v5801 = vunpack.c.l.b16 %v4314
    %v5802 = vunpack.c.h.b16 %v4314
    %v5803 = vunpack.c.l.b16 %v4315
    %v5804 = vunpack.c.h.b16 %v4315
    %v5805 = vunpack.c.l.b16 %v4316
    %v5806 = vunpack.c.h.b16 %v4316
    %v5807 = vunpack.c.l.b16 %v4317
    %v5808 = vunpack.c.h.b16 %v4317
    %v5809 = vunpack.c.l.b16 %v4318
    %v5810 = vunpack.c.h.b16 %v4318
    %v5811 = vunpack.c.l.b16 %v4319
    %v5812 = vunpack.c.h.b16 %v4319
    %v5813 = vunpack.c.l.b16 %v4320
    %v5814 = vunpack.c.h.b16 %v4320
    %v5815 = vunpack.c.l.b16 %v4321
    %v5816 = vunpack.c.h.b16 %v4321
    %v5817 = vunpack.c.l.b16 %v4322
    %v5818 = vunpack.c.h.b16 %v4322
    %v5819 = vunpack.c.l.b16 %v4323
    %v5820 = vunpack.c.h.b16 %v4323
    %v5821 = vunpack.c.l.b16 %v4324
    %v5822 = vunpack.c.h.b16 %v4324
    %v5823 = vunpack.c.l.b16 %v4325
    %v5824 = vunpack.c.h.b16 %v4325
    %v5825 = vunpack.c.l.b16 %v4326
    %v5826 = vunpack.c.h.b16 %v4326
    %v5827 = vunpack.c.l.b16 %v4327
    %v5828 = vunpack.c.h.b16 %v4327
    %v5829 = vunpack.c.l.b16 %v4328
    %v5830 = vunpack.c.h.b16 %v4328
    %v5831 = vunpack.c.l.b16 %v4329
    %v5832 = vunpack.c.h.b16 %v4329
    %v5833 = vunpack.c.l.b16 %v4330
    %v5834 = vunpack.c.h.b16 %v4330
    %v5835 = vunpack.c.l.b16 %v4331
    %v5836 = vunpack.c.h.b16 %v4331
    %v5837 = vunpack.c.l.b16 %v4332
    %v5838 = vunpack.c.h.b16 %v4332
    %v5839 = vunpack.c.l.b16 %v4333
    %v5840 = vunpack.c.h.b16 %v4333
    %v5841 = vunpack.c.l.b16 %v4334
    %v5842 = vunpack.c.h.b16 %v4334
    %v5843 = vunpack.c.l.b16 %v4335
    %v5844 = vunpack.c.h.b16 %v4335
    %v5845 = vunpack.c.l.b16 %v4336
    %v5846 = vunpack.c.h.b16 %v4336
    %v5847 = vunpack.c.l.b16 %v4337
    %v5848 = vunpack.c.h.b16 %v4337
    %v5849 = vunpack.c.l.b16 %v4338
    %v5850 = vunpack.c.h.b16 %v4338
    %v5851 = vunpack.c.l.b16 %v4339
    %v5852 = vunpack.c.h.b16 %v4339
    %v5853 = vunpack.c.l.b16 %v4340
    %v5854 = vunpack.c.h.b16 %v4340
    %v5855 = vunpack.c.l.b16 %v4341
    %v5856 = vunpack.c.h.b16 %v4341
    %v5857 = vunpack.c.l.b16 %v4342
    %v5858 = vunpack.c.h.b16 %v4342
    %v5859 = vunpack.c.l.b16 %v4343
    %v5860 = vunpack.c.h.b16 %v4343
    %v5861 = vunpack.c.l.b16 %v4344
    %v5862 = vunpack.c.h.b16 %v4344
    %v5863 = vunpack.c.l.b16 %v4345
    %v5864 = vunpack.c.h.b16 %v4345
    %v5865 = vunpack.c.l.b16 %v4346
    %v5866 = vunpack.c.h.b16 %v4346
    %v5867 = vunpack.c.l.b16 %v4347
    %v5868 = vunpack.c.h.b16 %v4347
    %v5869 = vunpack.c.l.b16 %v4348
    %v5870 = vunpack.c.h.b16 %v4348
    %v5871 = vunpack.c.l.b16 %v4349
    %v5872 = vunpack.c.h.b16 %v4349
    %v5873 = vunpack.c.l.b16 %v4350
    %v5874 = vunpack.c.h.b16 %v4350
    %v5875 = vunpack.c.l.b16 %v4351
    %v5876 = vunpack.c.h.b16 %v4351
    %v5877 = vunpack.c.l.b16 %v4352
    %v5878 = vunpack.c.h.b16 %v4352
    %v5879 = vunpack.c.l.b16 %v4353
    %v5880 = vunpack.c.h.b16 %v4353
    %v5881 = vunpack.c.l.b16 %v4354
    %v5882 = vunpack.c.h.b16 %v4354
    %v5883 = vunpack.c.l.b16 %v4355
    %v5884 = vunpack.c.h.b16 %v4355
    %v5885 = vunpack.c.l.b16 %v4356
    %v5886 = vunpack.c.h.b16 %v4356
    %v5887 = vunpack.c.l.b16 %v4357
    %v5888 = vunpack.c.h.b16 %v4357
    %v5889 = vunpack.c.l.b16 %v4358
    %v5890 = vunpack.c.h.b16 %v4358
    %v5891 = vunpack.c.l.b16 %v4359
    %v5892 = vunpack.c.h.b16 %v4359
    %v5893 = vunpack.c.l.b16 %v4360
    %v5894 = vunpack.c.h.b16 %v4360
    %v5895 = vunpack.c.l.b16 %v4361
    %v5896 = vunpack.c.h.b16 %v4361
    %v5897 = vunpack.c.l.b16 %v4362
    %v5898 = vunpack.c.h.b16 %v4362
    %v5899 = vunpack.c.l.b16 %v4363
    %v5900 = vunpack.c.h.b16 %v4363
    %v5901 = vunpack.c.l.b16 %v4364
    %v5902 = vunpack.c.h.b16 %v4364
    %v5903 = vunpack.c.l.b16 %v4365
    %v5904 = vunpack.c.h.b16 %v4365
    %v5905 = vunpack.c.l.b16 %v4366
    %v5906 = vunpack.c.h.b16 %v4366
    %v5907 = vunpack.c.l.b16 %v4367
    %v5908 = vunpack.c.h.b16 %v4367
    %v5909 = vunpack.c.l.b16 %v4368
    %v5910 = vunpack.c.h.b16 %v4368
    %v5911 = vunpack.c.l.b16 %v4369
    %v5912 = vunpack.c.h.b16 %v4369
    %v5913 = vunpack.c.l.b16 %v4370
    %v5914 = vunpack.c.h.b16 %v4370
    %v5915 = vunpack.c.l.b16 %v4371
    %v5916 = vunpack.c.h.b16 %v4371
    %v5917 = vunpack.c.l.b16 %v4372
    %v5918 = vunpack.c.h.b16 %v4372
    %v5919 = vunpack.c.l.b16 %v4373
    %v5920 = vunpack.c.h.b16 %v4373
    %v5921 = vunpack.c.l.b16 %v4374
    %v5922 = vunpack.c.h.b16 %v4374
    %v5923 = vunpack.c.l.b16 %v4375
    %v5924 = vunpack.c.h.b16 %v4375
    %v5925 = vunpack.c.l.b16 %v4376
    %v5926 = vunpack.c.h.b16 %v4376
    %v5927 = vunpack.c.l.b16 %v4377
    %v5928 = vunpack.c.h.b16 %v4377
    %v5929 = vunpack.c.l.b16 %v4378
    %v5930 = vunpack.c.h.b16 %v4378
    %v5931 = vunpack.c.l.b16 %v4379
    %v5932 = vunpack.c.h.b16 %v4379
    %v5933 = vunpack.c.l.b16 %v4380
    %v5934 = vunpack.c.h.b16 %v4380
    %v5935 = vunpack.c.l.b16 %v4381
    %v5936 = vunpack.c.h.b16 %v4381
    %v5937 = vunpack.c.l.b16 %v4382
    %v5938 = vunpack.c.h.b16 %v4382
    %v5939 = vunpack.c.l.b16 %v4383
    %v5940 = vunpack.c.h.b16 %v4383
    %v5941 = vunpack.c.l.b16 %v4384
    %v5942 = vunpack.c.h.b16 %v4384
    %v5943 = vunpack.c.l.b16 %v4385
    %v5944 = vunpack.c.h.b16 %v4385
    %v5945 = vunpack.c.l.b16 %v4386
    %v5946 = vunpack.c.h.b16 %v4386
    %v5947 = vunpack.c.l.b16 %v4387
    %v5948 = vunpack.c.h.b16 %v4387
    %v5949 = vunpack.c.l.b16 %v4388
    %v5950 = vunpack.c.h.b16 %v4388
    %v5951 = vunpack.c.l.b16 %v4389
    %v5952 = vunpack.c.h.b16 %v4389
    %v5953 = vunpack.c.l.b16 %v4390
    %v5954 = vunpack.c.h.b16 %v4390
    %v5955 = vunpack.c.l.b16 %v4391
    %v5956 = vunpack.c.h.b16 %v4391
    %v5957 = vunpack.c.l.b16 %v4392
    %v5958 = vunpack.c.h.b16 %v4392
    %v5959 = vunpack.c.l.b16 %v4393
    %v5960 = vunpack.c.h.b16 %v4393
    %v5961 = vunpack.c.l.b16 %v4394
    %v5962 = vunpack.c.h.b16 %v4394
    %v5963 = vunpack.c.l.b16 %v4395
    %v5964 = vunpack.c.h.b16 %v4395
    %v5965 = vunpack.c.l.b16 %v4396
    %v5966 = vunpack.c.h.b16 %v4396
    %v5967 = vunpack.c.l.b16 %v4397
    %v5968 = vunpack.c.h.b16 %v4397
    %v5969 = vunpack.c.l.b16 %v4398
    %v5970 = vunpack.c.h.b16 %v4398
    %v5971 = vunpack.c.l.b16 %v4399
    %v5972 = vunpack.c.h.b16 %v4399
    %v5973 = vunpack.c.l.b16 %v4400
    %v5974 = vunpack.c.h.b16 %v4400
    %v5975 = vunpack.c.l.b16 %v4401
    %v5976 = vunpack.c.h.b16 %v4401
    %v5977 = vunpack.c.l.b16 %v4402
    %v5978 = vunpack.c.h.b16 %v4402
    %v5979 = vunpack.c.l.b16 %v4403
    %v5980 = vunpack.c.h.b16 %v4403
    %v5981 = vunpack.c.l.b16 %v4404
    %v5982 = vunpack.c.h.b16 %v4404
    %v5983 = vpack.c.b16 %v4967, %v4959
    %v5984 = vpack.c.b16 %v4968, %v4960
    %v5985 = vpack.c.b16 %v4969, %v4961
    %v5986 = vpack.c.b16 %v4970, %v4962
    %v5987 = vpack.c.b16 %v4971, %v4963
    %v5988 = vpack.c.b16 %v4972, %v4964
    %v5989 = vpack.c.b16 %v4973, %v4965
    %v5990 = vpack.c.b16 %v4974, %v4966
    %v5991 = vpack.c.b16 %v4983, %v4975
    %v5992 = vpack.c.b16 %v4984, %v4976
    %v5993 = vpack.c.b16 %v4985, %v4977
    %v5994 = vpack.c.b16 %v4986, %v4978
    %v5995 = vpack.c.b16 %v4987, %v4979
    %v5996 = vpack.c.b16 %v4988, %v4980
    %v5997 = vpack.c.b16 %v4989, %v4981
    %v5998 = vpack.c.b16 %v4990, %v4982
    %v5999 = vpack.c.b16 %v4999, %v4991
    %v6000 = vpack.c.b16 %v5000, %v4992
    %v6001 = vpack.c.b16 %v5001, %v4993
    %v6002 = vpack.c.b16 %v5002, %v4994
    %v6003 = vpack.c.b16 %v5003, %v4995
    %v6004 = vpack.c.b16 %v5004, %v4996
    %v6005 = vpack.c.b16 %v5005, %v4997
    %v6006 = vpack.c.b16 %v5006, %v4998
    %v6007 = vpack.c.b16 %v5015, %v5007
    %v6008 = vpack.c.b16 %v5016, %v5008
    %v6009 = vpack.c.b16 %v5017, %v5009
    %v6010 = vpack.c.b16 %v5018, %v5010
    %v6011 = vpack.c.b16 %v5019, %v5011
    %v6012 = vpack.c.b16 %v5020, %v5012
    %v6013 = vpack.c.b16 %v5021, %v5013
    %v6014 = vpack.c.b16 %v5022, %v5014
    %v6015 = vpack.c.b16 %v5031, %v5023
    %v6016 = vpack.c.b16 %v5032, %v5024
    %v6017 = vpack.c.b16 %v5033, %v5025
    %v6018 = vpack.c.b16 %v5034, %v5026
    %v6019 = vpack.c.b16 %v5035, %v5027
    %v6020 = vpack.c.b16 %v5036, %v5028
    %v6021 = vpack.c.b16 %v5037, %v5029
    %v6022 = vpack.c.b16 %v5038, %v5030
    %v6023 = vpack.c.b16 %v5047, %v5039
    %v6024 = vpack.c.b16 %v5048, %v5040
    %v6025 = vpack.c.b16 %v5049, %v5041
    %v6026 = vpack.c.b16 %v5050, %v5042
    %v6027 = vpack.c.b16 %v5051, %v5043
    %v6028 = vpack.c.b16 %v5052, %v5044
    %v6029 = vpack.c.b16 %v5053, %v5045
    %v6030 = vpack.c.b16 %v5054, %v5046
    %v6031 = vpack.c.b16 %v5063, %v5055
    %v6032 = vpack.c.b16 %v5064, %v5056
    %v6033 = vpack.c.b16 %v5065, %v5057
    %v6034 = vpack.c.b16 %v5066, %v5058
    %v6035 = vpack.c.b16 %v5067, %v5059
    %v6036 = vpack.c.b16 %v5068, %v5060
    %v6037 = vpack.c.b16 %v5069, %v5061
    %v6038 = vpack.c.b16 %v5070, %v5062
    %v6039 = vpack.c.b16 %v5079, %v5071
    %v6040 = vpack.c.b16 %v5080, %v5072
    %v6041 = vpack.c.b16 %v5081, %v5073
    %v6042 = vpack.c.b16 %v5082, %v5074
    %v6043 = vpack.c.b16 %v5083, %v5075
    %v6044 = vpack.c.b16 %v5084, %v5076
    %v6045 = vpack.c.b16 %v5085, %v5077
    %v6046 = vpack.c.b16 %v5086, %v5078
    %v6047 = vpack.c.b16 %v5095, %v5087
    %v6048 = vpack.c.b16 %v5096, %v5088
    %v6049 = vpack.c.b16 %v5097, %v5089
    %v6050 = vpack.c.b16 %v5098, %v5090
    %v6051 = vpack.c.b16 %v5099, %v5091
    %v6052 = vpack.c.b16 %v5100, %v5092
    %v6053 = vpack.c.b16 %v5101, %v5093
    %v6054 = vpack.c.b16 %v5102, %v5094
    %v6055 = vpack.c.b16 %v5111, %v5103
    %v6056 = vpack.c.b16 %v5112, %v5104
    %v6057 = vpack.c.b16 %v5113, %v5105
    %v6058 = vpack.c.b16 %v5114, %v5106
    %v6059 = vpack.c.b16 %v5115, %v5107
    %v6060 = vpack.c.b16 %v5116, %v5108
    %v6061 = vpack.c.b16 %v5117, %v5109
    %v6062 = vpack.c.b16 %v5118, %v5110
    %v6063 = vpack.c.b16 %v5127, %v5119
    %v6064 = vpack.c.b16 %v5128, %v5120
    %v6065 = vpack.c.b16 %v5129, %v5121
    %v6066 = vpack.c.b16 %v5130, %v5122
    %v6067 = vpack.c.b16 %v5131, %v5123
    %v6068 = vpack.c.b16 %v5132, %v5124
    %v6069 = vpack.c.b16 %v5133, %v5125
    %v6070 = vpack.c.b16 %v5134, %v5126
    %v6071 = vpack.c.b16 %v5143, %v5135
    %v6072 = vpack.c.b16 %v5144, %v5136
    %v6073 = vpack.c.b16 %v5145, %v5137
    %v6074 = vpack.c.b16 %v5146, %v5138
    %v6075 = vpack.c.b16 %v5147, %v5139
    %v6076 = vpack.c.b16 %v5148, %v5140
    %v6077 = vpack.c.b16 %v5149, %v5141
    %v6078 = vpack.c.b16 %v5150, %v5142
    %v6079 = vpack.c.b16 %v5159, %v5151
    %v6080 = vpack.c.b16 %v5160, %v5152
    %v6081 = vpack.c.b16 %v5161, %v5153
    %v6082 = vpack.c.b16 %v5162, %v5154
    %v6083 = vpack.c.b16 %v5163, %v5155
    %v6084 = vpack.c.b16 %v5164, %v5156
    %v6085 = vpack.c.b16 %v5165, %v5157
    %v6086 = vpack.c.b16 %v5166, %v5158
    %v6087 = vpack.c.b16 %v5175, %v5167
    %v6088 = vpack.c.b16 %v5176, %v5168
    %v6089 = vpack.c.b16 %v5177, %v5169
    %v6090 = vpack.c.b16 %v5178, %v5170
    %v6091 = vpack.c.b16 %v5179, %v5171
    %v6092 = vpack.c.b16 %v5180, %v5172
    %v6093 = vpack.c.b16 %v5181, %v5173
    %v6094 = vpack.c.b16 %v5182, %v5174
    %v6095 = vpack.c.b16 %v5191, %v5183
    %v6096 = vpack.c.b16 %v5192, %v5184
    %v6097 = vpack.c.b16 %v5193, %v5185
    %v6098 = vpack.c.b16 %v5194, %v5186
    %v6099 = vpack.c.b16 %v5195, %v5187
    %v6100 = vpack.c.b16 %v5196, %v5188
    %v6101 = vpack.c.b16 %v5197, %v5189
    %v6102 = vpack.c.b16 %v5198, %v5190
    %v6103 = vpack.c.b16 %v5207, %v5199
    %v6104 = vpack.c.b16 %v5208, %v5200
    %v6105 = vpack.c.b16 %v5209, %v5201
    %v6106 = vpack.c.b16 %v5210, %v5202
    %v6107 = vpack.c.b16 %v5211, %v5203
    %v6108 = vpack.c.b16 %v5212, %v5204
    %v6109 = vpack.c.b16 %v5213, %v5205
    %v6110 = vpack.c.b16 %v5214, %v5206
    %v6111 = vpack.c.b16 %v5223, %v5215
    %v6112 = vpack.c.b16 %v5224, %v5216
    %v6113 = vpack.c.b16 %v5225, %v5217
    %v6114 = vpack.c.b16 %v5226, %v5218
    %v6115 = vpack.c.b16 %v5227, %v5219
    %v6116 = vpack.c.b16 %v5228, %v5220
    %v6117 = vpack.c.b16 %v5229, %v5221
    %v6118 = vpack.c.b16 %v5230, %v5222
    %v6119 = vpack.c.b16 %v5239, %v5231
    %v6120 = vpack.c.b16 %v5240, %v5232
    %v6121 = vpack.c.b16 %v5241, %v5233
    %v6122 = vpack.c.b16 %v5242, %v5234
    %v6123 = vpack.c.b16 %v5243, %v5235
    %v6124 = vpack.c.b16 %v5244, %v5236
    %v6125 = vpack.c.b16 %v5245, %v5237
    %v6126 = vpack.c.b16 %v5246, %v5238
    %v6127 = vpack.c.b16 %v5255, %v5247
    %v6128 = vpack.c.b16 %v5256, %v5248
    %v6129 = vpack.c.b16 %v5257, %v5249
    %v6130 = vpack.c.b16 %v5258, %v5250
    %v6131 = vpack.c.b16 %v5259, %v5251
    %v6132 = vpack.c.b16 %v5260, %v5252
    %v6133 = vpack.c.b16 %v5261, %v5253
    %v6134 = vpack.c.b16 %v5262, %v5254
    %v6135 = vpack.c.b16 %v5271, %v5263
    %v6136 = vpack.c.b16 %v5272, %v5264
    %v6137 = vpack.c.b16 %v5273, %v5265
    %v6138 = vpack.c.b16 %v5274, %v5266
    %v6139 = vpack.c.b16 %v5275, %v5267
    %v6140 = vpack.c.b16 %v5276, %v5268
    %v6141 = vpack.c.b16 %v5277, %v5269
    %v6142 = vpack.c.b16 %v5278, %v5270
    %v6143 = vpack.c.b16 %v5287, %v5279
    %v6144 = vpack.c.b16 %v5288, %v5280
    %v6145 = vpack.c.b16 %v5289, %v5281
    %v6146 = vpack.c.b16 %v5290, %v5282
    %v6147 = vpack.c.b16 %v5291, %v5283
    %v6148 = vpack.c.b16 %v5292, %v5284
    %v6149 = vpack.c.b16 %v5293, %v5285
    %v6150 = vpack.c.b16 %v5294, %v5286
    %v6151 = vpack.c.b16 %v5303, %v5295
    %v6152 = vpack.c.b16 %v5304, %v5296
    %v6153 = vpack.c.b16 %v5305, %v5297
    %v6154 = vpack.c.b16 %v5306, %v5298
    %v6155 = vpack.c.b16 %v5307, %v5299
    %v6156 = vpack.c.b16 %v5308, %v5300
    %v6157 = vpack.c.b16 %v5309, %v5301
    %v6158 = vpack.c.b16 %v5310, %v5302
    %v6159 = vpack.c.b16 %v5319, %v5311
    %v6160 = vpack.c.b16 %v5320, %v5312
    %v6161 = vpack.c.b16 %v5321, %v5313
    %v6162 = vpack.c.b16 %v5322, %v5314
    %v6163 = vpack.c.b16 %v5323, %v5315
    %v6164 = vpack.c.b16 %v5324, %v5316
    %v6165 = vpack.c.b16 %v5325, %v5317
    %v6166 = vpack.c.b16 %v5326, %v5318
    %v6167 = vpack.c.b16 %v5335, %v5327
    %v6168 = vpack.c.b16 %v5336, %v5328
    %v6169 = vpack.c.b16 %v5337, %v5329
    %v6170 = vpack.c.b16 %v5338, %v5330
    %v6171 = vpack.c.b16 %v5339, %v5331
    %v6172 = vpack.c.b16 %v5340, %v5332
    %v6173 = vpack.c.b16 %v5341, %v5333
    %v6174 = vpack.c.b16 %v5342, %v5334
    %v6175 = vpack.c.b16 %v5351, %v5343
    %v6176 = vpack.c.b16 %v5352, %v5344
    %v6177 = vpack.c.b16 %v5353, %v5345
    %v6178 = vpack.c.b16 %v5354, %v5346
    %v6179 = vpack.c.b16 %v5355, %v5347
    %v6180 = vpack.c.b16 %v5356, %v5348
    %v6181 = vpack.c.b16 %v5357, %v5349
    %v6182 = vpack.c.b16 %v5358, %v5350
    %v6183 = vpack.c.b16 %v5367, %v5359
    %v6184 = vpack.c.b16 %v5368, %v5360
    %v6185 = vpack.c.b16 %v5369, %v5361
    %v6186 = vpack.c.b16 %v5370, %v5362
    %v6187 = vpack.c.b16 %v5371, %v5363
    %v6188 = vpack.c.b16 %v5372, %v5364
    %v6189 = vpack.c.b16 %v5373, %v5365
    %v6190 = vpack.c.b16 %v5374, %v5366
    %v6191 = vpack.c.b16 %v5383, %v5375
    %v6192 = vpack.c.b16 %v5384, %v5376
    %v6193 = vpack.c.b16 %v5385, %v5377
    %v6194 = vpack.c.b16 %v5386, %v5378
    %v6195 = vpack.c.b16 %v5387, %v5379
    %v6196 = vpack.c.b16 %v5388, %v5380
    %v6197 = vpack.c.b16 %v5389, %v5381
    %v6198 = vpack.c.b16 %v5390, %v5382
    %v6199 = vpack.c.b16 %v5399, %v5391
    %v6200 = vpack.c.b16 %v5400, %v5392
    %v6201 = vpack.c.b16 %v5401, %v5393
    %v6202 = vpack.c.b16 %v5402, %v5394
    %v6203 = vpack.c.b16 %v5403, %v5395
    %v6204 = vpack.c.b16 %v5404, %v5396
    %v6205 = vpack.c.b16 %v5405, %v5397
    %v6206 = vpack.c.b16 %v5406, %v5398
    %v6207 = vpack.c.b16 %v5415, %v5407
    %v6208 = vpack.c.b16 %v5416, %v5408
    %v6209 = vpack.c.b16 %v5417, %v5409
    %v6210 = vpack.c.b16 %v5418, %v5410
    %v6211 = vpack.c.b16 %v5419, %v5411
    %v6212 = vpack.c.b16 %v5420, %v5412
    %v6213 = vpack.c.b16 %v5421, %v5413
    %v6214 = vpack.c.b16 %v5422, %v5414
    %v6215 = vpack.c.b16 %v5431, %v5423
    %v6216 = vpack.c.b16 %v5432, %v5424
    %v6217 = vpack.c.b16 %v5433, %v5425
    %v6218 = vpack.c.b16 %v5434, %v5426
    %v6219 = vpack.c.b16 %v5435, %v5427
    %v6220 = vpack.c.b16 %v5436, %v5428
    %v6221 = vpack.c.b16 %v5437, %v5429
    %v6222 = vpack.c.b16 %v5438, %v5430
    %v6223 = vpack.c.b16 %v5447, %v5439
    %v6224 = vpack.c.b16 %v5448, %v5440
    %v6225 = vpack.c.b16 %v5449, %v5441
    %v6226 = vpack.c.b16 %v5450, %v5442
    %v6227 = vpack.c.b16 %v5451, %v5443
    %v6228 = vpack.c.b16 %v5452, %v5444
    %v6229 = vpack.c.b16 %v5453, %v5445
    %v6230 = vpack.c.b16 %v5454, %v5446
    %v6231 = vpack.c.b16 %v5463, %v5455
    %v6232 = vpack.c.b16 %v5464, %v5456
    %v6233 = vpack.c.b16 %v5465, %v5457
    %v6234 = vpack.c.b16 %v5466, %v5458
    %v6235 = vpack.c.b16 %v5467, %v5459
    %v6236 = vpack.c.b16 %v5468, %v5460
    %v6237 = vpack.c.b16 %v5469, %v5461
    %v6238 = vpack.c.b16 %v5470, %v5462
    %v6239 = vpack.c.b16 %v5479, %v5471
    %v6240 = vpack.c.b16 %v5480, %v5472
    %v6241 = vpack.c.b16 %v5481, %v5473
    %v6242 = vpack.c.b16 %v5482, %v5474
    %v6243 = vpack.c.b16 %v5483, %v5475
    %v6244 = vpack.c.b16 %v5484, %v5476
    %v6245 = vpack.c.b16 %v5485, %v5477
    %v6246 = vpack.c.b16 %v5486, %v5478
    %v6247 = vpack.c.b16 %v5495, %v5487
    %v6248 = vpack.c.b16 %v5496, %v5488
    %v6249 = vpack.c.b16 %v5497, %v5489
    %v6250 = vpack.c.b16 %v5498, %v5490
    %v6251 = vpack.c.b16 %v5499, %v5491
    %v6252 = vpack.c.b16 %v5500, %v5492
    %v6253 = vpack.c.b16 %v5501, %v5493
    %v6254 = vpack.c.b16 %v5502, %v5494
    %v6255 = vpack.c.b16 %v5511, %v5503
    %v6256 = vpack.c.b16 %v5512, %v5504
    %v6257 = vpack.c.b16 %v5513, %v5505
    %v6258 = vpack.c.b16 %v5514, %v5506
    %v6259 = vpack.c.b16 %v5515, %v5507
    %v6260 = vpack.c.b16 %v5516, %v5508
    %v6261 = vpack.c.b16 %v5517, %v5509
    %v6262 = vpack.c.b16 %v5518, %v5510
    %v6263 = vpack.c.b16 %v5527, %v5519
    %v6264 = vpack.c.b16 %v5528, %v5520
    %v6265 = vpack.c.b16 %v5529, %v5521
    %v6266 = vpack.c.b16 %v5530, %v5522
    %v6267 = vpack.c.b16 %v5531, %v5523
    %v6268 = vpack.c.b16 %v5532, %v5524
    %v6269 = vpack.c.b16 %v5533, %v5525
    %v6270 = vpack.c.b16 %v5534, %v5526
    %v6271 = vpack.c.b16 %v5543, %v5535
    %v6272 = vpack.c.b16 %v5544, %v5536
    %v6273 = vpack.c.b16 %v5545, %v5537
    %v6274 = vpack.c.b16 %v5546, %v5538
    %v6275 = vpack.c.b16 %v5547, %v5539
    %v6276 = vpack.c.b16 %v5548, %v5540
    %v6277 = vpack.c.b16 %v5549, %v5541
    %v6278 = vpack.c.b16 %v5550, %v5542
    %v6279 = vpack.c.b16 %v5559, %v5551
    %v6280 = vpack.c.b16 %v5560, %v5552
    %v6281 = vpack.c.b16 %v5561, %v5553
    %v6282 = vpack.c.b16 %v5562, %v5554
    %v6283 = vpack.c.b16 %v5563, %v5555
    %v6284 = vpack.c.b16 %v5564, %v5556
    %v6285 = vpack.c.b16 %v5565, %v5557
    %v6286 = vpack.c.b16 %v5566, %v5558
    %v6287 = vpack.c.b16 %v5575, %v5567
    %v6288 = vpack.c.b16 %v5576, %v5568
    %v6289 = vpack.c.b16 %v5577, %v5569
    %v6290 = vpack.c.b16 %v5578, %v5570
    %v6291 = vpack.c.b16 %v5579, %v5571
    %v6292 = vpack.c.b16 %v5580, %v5572
    %v6293 = vpack.c.b16 %v5581, %v5573
    %v6294 = vpack.c.b16 %v5582, %v5574
    %v6295 = vpack.c.b16 %v5591, %v5583
    %v6296 = vpack.c.b16 %v5592, %v5584
    %v6297 = vpack.c.b16 %v5593, %v5585
    %v6298 = vpack.c.b16 %v5594, %v5586
    %v6299 = vpack.c.b16 %v5595, %v5587
    %v6300 = vpack.c.b16 %v5596, %v5588
    %v6301 = vpack.c.b16 %v5597, %v5589
    %v6302 = vpack.c.b16 %v5598, %v5590
    %v6303 = vpack.c.b16 %v5607, %v5599
    %v6304 = vpack.c.b16 %v5608, %v5600
    %v6305 = vpack.c.b16 %v5609, %v5601
    %v6306 = vpack.c.b16 %v5610, %v5602
    %v6307 = vpack.c.b16 %v5611, %v5603
    %v6308 = vpack.c.b16 %v5612, %v5604
    %v6309 = vpack.c.b16 %v5613, %v5605
    %v6310 = vpack.c.b16 %v5614, %v5606
    %v6311 = vpack.c.b16 %v5623, %v5615
    %v6312 = vpack.c.b16 %v5624, %v5616
    %v6313 = vpack.c.b16 %v5625, %v5617
    %v6314 = vpack.c.b16 %v5626, %v5618
    %v6315 = vpack.c.b16 %v5627, %v5619
    %v6316 = vpack.c.b16 %v5628, %v5620
    %v6317 = vpack.c.b16 %v5629, %v5621
    %v6318 = vpack.c.b16 %v5630, %v5622
    %v6319 = vpack.c.b16 %v5639, %v5631
    %v6320 = vpack.c.b16 %v5640, %v5632
    %v6321 = vpack.c.b16 %v5641, %v5633
    %v6322 = vpack.c.b16 %v5642, %v5634
    %v6323 = vpack.c.b16 %v5643, %v5635
    %v6324 = vpack.c.b16 %v5644, %v5636
    %v6325 = vpack.c.b16 %v5645, %v5637
    %v6326 = vpack.c.b16 %v5646, %v5638
    %v6327 = vpack.c.b16 %v5655, %v5647
    %v6328 = vpack.c.b16 %v5656, %v5648
    %v6329 = vpack.c.b16 %v5657, %v5649
    %v6330 = vpack.c.b16 %v5658, %v5650
    %v6331 = vpack.c.b16 %v5659, %v5651
    %v6332 = vpack.c.b16 %v5660, %v5652
    %v6333 = vpack.c.b16 %v5661, %v5653
    %v6334 = vpack.c.b16 %v5662, %v5654
    %v6335 = vpack.c.b16 %v5671, %v5663
    %v6336 = vpack.c.b16 %v5672, %v5664
    %v6337 = vpack.c.b16 %v5673, %v5665
    %v6338 = vpack.c.b16 %v5674, %v5666
    %v6339 = vpack.c.b16 %v5675, %v5667
    %v6340 = vpack.c.b16 %v5676, %v5668
    %v6341 = vpack.c.b16 %v5677, %v5669
    %v6342 = vpack.c.b16 %v5678, %v5670
    %v6343 = vpack.c.b16 %v5687, %v5679
    %v6344 = vpack.c.b16 %v5688, %v5680
    %v6345 = vpack.c.b16 %v5689, %v5681
    %v6346 = vpack.c.b16 %v5690, %v5682
    %v6347 = vpack.c.b16 %v5691, %v5683
    %v6348 = vpack.c.b16 %v5692, %v5684
    %v6349 = vpack.c.b16 %v5693, %v5685
    %v6350 = vpack.c.b16 %v5694, %v5686
    %v6351 = vpack.c.b16 %v5703, %v5695
    %v6352 = vpack.c.b16 %v5704, %v5696
    %v6353 = vpack.c.b16 %v5705, %v5697
    %v6354 = vpack.c.b16 %v5706, %v5698
    %v6355 = vpack.c.b16 %v5707, %v5699
    %v6356 = vpack.c.b16 %v5708, %v5700
    %v6357 = vpack.c.b16 %v5709, %v5701
    %v6358 = vpack.c.b16 %v5710, %v5702
    %v6359 = vpack.c.b16 %v5719, %v5711
    %v6360 = vpack.c.b16 %v5720, %v5712
    %v6361 = vpack.c.b16 %v5721, %v5713
    %v6362 = vpack.c.b16 %v5722, %v5714
    %v6363 = vpack.c.b16 %v5723, %v5715
    %v6364 = vpack.c.b16 %v5724, %v5716
    %v6365 = vpack.c.b16 %v5725, %v5717
    %v6366 = vpack.c.b16 %v5726, %v5718
    %v6367 = vpack.c.b16 %v5735, %v5727
    %v6368 = vpack.c.b16 %v5736, %v5728
    %v6369 = vpack.c.b16 %v5737, %v5729
    %v6370 = vpack.c.b16 %v5738, %v5730
    %v6371 = vpack.c.b16 %v5739, %v5731
    %v6372 = vpack.c.b16 %v5740, %v5732
    %v6373 = vpack.c.b16 %v5741, %v5733
    %v6374 = vpack.c.b16 %v5742, %v5734
    %v6375 = vpack.c.b16 %v5751, %v5743
    %v6376 = vpack.c.b16 %v5752, %v5744
    %v6377 = vpack.c.b16 %v5753, %v5745
    %v6378 = vpack.c.b16 %v5754, %v5746
    %v6379 = vpack.c.b16 %v5755, %v5747
    %v6380 = vpack.c.b16 %v5756, %v5748
    %v6381 = vpack.c.b16 %v5757, %v5749
    %v6382 = vpack.c.b16 %v5758, %v5750
    %v6383 = vpack.c.b16 %v5767, %v5759
    %v6384 = vpack.c.b16 %v5768, %v5760
    %v6385 = vpack.c.b16 %v5769, %v5761
    %v6386 = vpack.c.b16 %v5770, %v5762
    %v6387 = vpack.c.b16 %v5771, %v5763
    %v6388 = vpack.c.b16 %v5772, %v5764
    %v6389 = vpack.c.b16 %v5773, %v5765
    %v6390 = vpack.c.b16 %v5774, %v5766
    %v6391 = vpack.c.b16 %v5783, %v5775
    %v6392 = vpack.c.b16 %v5784, %v5776
    %v6393 = vpack.c.b16 %v5785, %v5777
    %v6394 = vpack.c.b16 %v5786, %v5778
    %v6395 = vpack.c.b16 %v5787, %v5779
    %v6396 = vpack.c.b16 %v5788, %v5780
    %v6397 = vpack.c.b16 %v5789, %v5781
    %v6398 = vpack.c.b16 %v5790, %v5782
    %v6399 = vpack.c.b16 %v5799, %v5791
    %v6400 = vpack.c.b16 %v5800, %v5792
    %v6401 = vpack.c.b16 %v5801, %v5793
    %v6402 = vpack.c.b16 %v5802, %v5794
    %v6403 = vpack.c.b16 %v5803, %v5795
    %v6404 = vpack.c.b16 %v5804, %v5796
    %v6405 = vpack.c.b16 %v5805, %v5797
    %v6406 = vpack.c.b16 %v5806, %v5798
    %v6407 = vpack.c.b16 %v5815, %v5807
    %v6408 = vpack.c.b16 %v5816, %v5808
    %v6409 = vpack.c.b16 %v5817, %v5809
    %v6410 = vpack.c.b16 %v5818, %v5810
    %v6411 = vpack.c.b16 %v5819, %v5811
    %v6412 = vpack.c.b16 %v5820, %v5812
    %v6413 = vpack.c.b16 %v5821, %v5813
    %v6414 = vpack.c.b16 %v5822, %v5814
    %v6415 = vpack.c.b16 %v5831, %v5823
    %v6416 = vpack.c.b16 %v5832, %v5824
    %v6417 = vpack.c.b16 %v5833, %v5825
    %v6418 = vpack.c.b16 %v5834, %v5826
    %v6419 = vpack.c.b16 %v5835, %v5827
    %v6420 = vpack.c.b16 %v5836, %v5828
    %v6421 = vpack.c.b16 %v5837, %v5829
    %v6422 = vpack.c.b16 %v5838, %v5830
    %v6423 = vpack.c.b16 %v5847, %v5839
    %v6424 = vpack.c.b16 %v5848, %v5840
    %v6425 = vpack.c.b16 %v5849, %v5841
    %v6426 = vpack.c.b16 %v5850, %v5842
    %v6427 = vpack.c.b16 %v5851, %v5843
    %v6428 = vpack.c.b16 %v5852, %v5844
    %v6429 = vpack.c.b16 %v5853, %v5845
    %v6430 = vpack.c.b16 %v5854, %v5846
    %v6431 = vpack.c.b16 %v5863, %v5855
    %v6432 = vpack.c.b16 %v5864, %v5856
    %v6433 = vpack.c.b16 %v5865, %v5857
    %v6434 = vpack.c.b16 %v5866, %v5858
    %v6435 = vpack.c.b16 %v5867, %v5859
    %v6436 = vpack.c.b16 %v5868, %v5860
    %v6437 = vpack.c.b16 %v5869, %v5861
    %v6438 = vpack.c.b16 %v5870, %v5862
    %v6439 = vpack.c.b16 %v5879, %v5871
    %v6440 = vpack.c.b16 %v5880, %v5872
    %v6441 = vpack.c.b16 %v5881, %v5873
    %v6442 = vpack.c.b16 %v5882, %v5874
    %v6443 = vpack.c.b16 %v5883, %v5875
    %v6444 = vpack.c.b16 %v5884, %v5876
    %v6445 = vpack.c.b16 %v5885, %v5877
    %v6446 = vpack.c.b16 %v5886, %v5878
    %v6447 = vpack.c.b16 %v5895, %v5887
    %v6448 = vpack.c.b16 %v5896, %v5888
    %v6449 = vpack.c.b16 %v5897, %v5889
    %v6450 = vpack.c.b16 %v5898, %v5890
    %v6451 = vpack.c.b16 %v5899, %v5891
    %v6452 = vpack.c.b16 %v5900, %v5892
    %v6453 = vpack.c.b16 %v5901, %v5893
    %v6454 = vpack.c.b16 %v5902, %v5894
    %v6455 = vpack.c.b16 %v5911, %v5903
    %v6456 = vpack.c.b16 %v5912, %v5904
    %v6457 = vpack.c.b16 %v5913, %v5905
    %v6458 = vpack.c.b16 %v5914, %v5906
    %v6459 = vpack.c.b16 %v5915, %v5907
    %v6460 = vpack.c.b16 %v5916, %v5908
    %v6461 = vpack.c.b16 %v5917, %v5909
    %v6462 = vpack.c.b16 %v5918, %v5910
    %v6463 = vpack.c.b16 %v5927, %v5919
    %v6464 = vpack.c.b16 %v5928, %v5920
    %v6465 = vpack.c.b16 %v5929, %v5921
    %v6466 = vpack.c.b16 %v5930, %v5922
    %v6467 = vpack.c.b16 %v5931, %v5923
    %v6468 = vpack.c.b16 %v5932, %v5924
    %v6469 = vpack.c.b16 %v5933, %v5925
    %v6470 = vpack.c.b16 %v5934, %v5926
    %v6471 = vpack.c.b16 %v5943, %v5935
    %v6472 = vpack.c.b16 %v5944, %v5936
    %v6473 = vpack.c.b16 %v5945, %v5937
    %v6474 = vpack.c.b16 %v5946, %v5938
    %v6475 = vpack.c.b16 %v5947, %v5939
    %v6476 = vpack.c.b16 %v5948, %v5940
    %v6477 = vpack.c.b16 %v5949, %v5941
    %v6478 = vpack.c.b16 %v5950, %v5942
    %v6479 = vpack.c.b16 %v5959, %v5951
    %v6480 = vpack.c.b16 %v5960, %v5952
    %v6481 = vpack.c.b16 %v5961, %v5953
    %v6482 = vpack.c.b16 %v5962, %v5954
    %v6483 = vpack.c.b16 %v5963, %v5955
    %v6484 = vpack.c.b16 %v5964, %v5956
    %v6485 = vpack.c.b16 %v5965, %v5957
    %v6486 = vpack.c.b16 %v5966, %v5958
    %v6487 = vpack.c.b16 %v5975, %v5967
    %v6488 = vpack.c.b16 %v5976, %v5968
    %v6489 = vpack.c.b16 %v5977, %v5969
    %v6490 = vpack.c.b16 %v5978, %v5970
    %v6491 = vpack.c.b16 %v5979, %v5971
    %v6492 = vpack.c.b16 %v5980, %v5972
    %v6493 = vpack.c.b16 %v5981, %v5973
    %v6494 = vpack.c.b16 %v5982, %v5974
    %7007 = vmatprep.subr.bf16.mxu0 %v5984
    %7008 = vmatpush1.bf16.msra.mxu0 %v5983
    %7009 = vmatprep.subr.bf16.mxu0 %v5992
    %7010 = vmatpush1.bf16.msra.mxu0 %v5991
    %7011 = vmatprep.subr.bf16.mxu0 %v6000
    %7012 = vmatpush1.bf16.msra.mxu0 %v5999
    %7013 = vmatprep.subr.bf16.mxu0 %v6008
    %7014 = vmatpush1.bf16.msra.mxu0 %v6007
    %7015 = vmatprep.subr.bf16.mxu0 %v6016
    %7016 = vmatpush1.bf16.msra.mxu0 %v6015
    %7017 = vmatprep.subr.bf16.mxu0 %v6024
    %7018 = vmatpush1.bf16.msra.mxu0 %v6023
    %7019 = vmatprep.subr.bf16.mxu0 %v6032
    %7020 = vmatpush1.bf16.msra.mxu0 %v6031
    %7021 = vmatprep.subr.bf16.mxu0 %v6040
    %7022 = vmatpush1.bf16.msra.mxu0 %v6039
    %7023 = vmatprep.subr.bf16.mxu0 %v6048
    %7024 = vmatpush1.bf16.msra.mxu0 %v6047
    %7025 = vmatprep.subr.bf16.mxu0 %v6056
    %7026 = vmatpush1.bf16.msra.mxu0 %v6055
    %7027 = vmatprep.subr.bf16.mxu0 %v6064
    %7028 = vmatpush1.bf16.msra.mxu0 %v6063
    %7029 = vmatprep.subr.bf16.mxu0 %v6072
    %7030 = vmatpush1.bf16.msra.mxu0 %v6071
    %7031 = vmatprep.subr.bf16.mxu0 %v6080
    %7032 = vmatpush1.bf16.msra.mxu0 %v6079
    %7033 = vmatprep.subr.bf16.mxu0 %v6088
    %7034 = vmatpush1.bf16.msra.mxu0 %v6087
    %7035 = vmatprep.subr.bf16.mxu0 %v6096
    %7036 = vmatpush1.bf16.msra.mxu0 %v6095
    %7037 = vmatprep.subr.bf16.mxu0 %v6104
    %7038 = vmatpush1.bf16.msra.mxu0 %v6103
    %7039 = vmatprep.mubr.bf16.mxu0 %v3886
    %7040 = vmatmul.mubr.bf16.gmra.mrb[0].mxu0 %v3885
    %v7041 = vpop.f32.mrb[0].mxu0
    %v7042 = vadd.f32 %v4410, %v7041
    %v7043 = vpop.f32.mrb[0].mxu0
    %v7044 = vadd.f32 %v4414, %v7043
    %v7045 = vpop.f32.mrb[0].mxu0
    %v7046 = vpop.f32.mrb[0].mxu0
    %7047 = vdwg.mxu0
    %7048 = vmatprep.subr.bf16.mxu0 %v6112
    %7049 = vmatpush1.bf16.msra.mxu0 %v6111
    %7050 = vmatprep.subr.bf16.mxu0 %v6120
    %7051 = vmatpush1.bf16.msra.mxu0 %v6119
    %7052 = vmatprep.subr.bf16.mxu0 %v6128
    %7053 = vmatpush1.bf16.msra.mxu0 %v6127
    %7054 = vmatprep.subr.bf16.mxu0 %v6136
    %7055 = vmatpush1.bf16.msra.mxu0 %v6135
    %7056 = vmatprep.subr.bf16.mxu0 %v6144
    %7057 = vmatpush1.bf16.msra.mxu0 %v6143
    %7058 = vmatprep.subr.bf16.mxu0 %v6152
    %7059 = vmatpush1.bf16.msra.mxu0 %v6151
    %7060 = vmatprep.subr.bf16.mxu0 %v6160
    %7061 = vmatpush1.bf16.msra.mxu0 %v6159
    %7062 = vmatprep.subr.bf16.mxu0 %v6168
    %7063 = vmatpush1.bf16.msra.mxu0 %v6167
    %7064 = vmatprep.subr.bf16.mxu0 %v6176
    %7065 = vmatpush1.bf16.msra.mxu0 %v6175
    %7066 = vmatprep.subr.bf16.mxu0 %v6184
    %7067 = vmatpush1.bf16.msra.mxu0 %v6183
    %7068 = vmatprep.subr.bf16.mxu0 %v6192
    %7069 = vmatpush1.bf16.msra.mxu0 %v6191
    %7070 = vmatprep.subr.bf16.mxu0 %v6200
    %7071 = vmatpush1.bf16.msra.mxu0 %v6199
    %7072 = vmatprep.subr.bf16.mxu0 %v6208
    %7073 = vmatpush1.bf16.msra.mxu0 %v6207
    %7074 = vmatprep.subr.bf16.mxu0 %v6216
    %7075 = vmatpush1.bf16.msra.mxu0 %v6215
    %7076 = vmatprep.subr.bf16.mxu0 %v6224
    %7077 = vmatpush1.bf16.msra.mxu0 %v6223
    %7078 = vmatprep.subr.bf16.mxu0 %v6232
    %7079 = vmatpush1.bf16.msra.mxu0 %v6231
    %7080 = vmatprep.mubr.bf16.mxu0 %v3888
    %7081 = vmatmul.mubr.bf16.gmra.mrb[0].mxu0 %v3887
    %v7082 = vpop.f32.mrb[0].mxu0
    %v7083 = vadd.f32 %v7042, %v7082
    %v7084 = vpop.f32.mrb[0].mxu0
    %v7085 = vadd.f32 %v7044, %v7084
    %v7086 = vpop.f32.mrb[0].mxu0
    %v7087 = vpop.f32.mrb[0].mxu0
    %7088 = vdwg.mxu0
    %7089 = vmatprep.subr.bf16.mxu0 %v6240
    %7090 = vmatpush1.bf16.msra.mxu0 %v6239
    %7091 = vmatprep.subr.bf16.mxu0 %v6248
    %7092 = vmatpush1.bf16.msra.mxu0 %v6247
    %7093 = vmatprep.subr.bf16.mxu0 %v6256
    %7094 = vmatpush1.bf16.msra.mxu0 %v6255
    %7095 = vmatprep.subr.bf16.mxu0 %v6264
    %7096 = vmatpush1.bf16.msra.mxu0 %v6263
    %7097 = vmatprep.subr.bf16.mxu0 %v6272
    %7098 = vmatpush1.bf16.msra.mxu0 %v6271
    %7099 = vmatprep.subr.bf16.mxu0 %v6280
    %7100 = vmatpush1.bf16.msra.mxu0 %v6279
    %7101 = vmatprep.subr.bf16.mxu0 %v6288
    %7102 = vmatpush1.bf16.msra.mxu0 %v6287
    %7103 = vmatprep.subr.bf16.mxu0 %v6296
    %7104 = vmatpush1.bf16.msra.mxu0 %v6295
    %7105 = vmatprep.subr.bf16.mxu0 %v6304
    %7106 = vmatpush1.bf16.msra.mxu0 %v6303
    %7107 = vmatprep.subr.bf16.mxu0 %v6312
    %7108 = vmatpush1.bf16.msra.mxu0 %v6311
    %7109 = vmatprep.subr.bf16.mxu0 %v6320
    %7110 = vmatpush1.bf16.msra.mxu0 %v6319
    %7111 = vmatprep.subr.bf16.mxu0 %v6328
    %7112 = vmatpush1.bf16.msra.mxu0 %v6327
    %7113 = vmatprep.subr.bf16.mxu0 %v6336
    %7114 = vmatpush1.bf16.msra.mxu0 %v6335
    %7115 = vmatprep.subr.bf16.mxu0 %v6344
    %7116 = vmatpush1.bf16.msra.mxu0 %v6343
    %7117 = vmatprep.subr.bf16.mxu0 %v6352
    %7118 = vmatpush1.bf16.msra.mxu0 %v6351
    %7119 = vmatprep.subr.bf16.mxu0 %v6360
    %7120 = vmatpush1.bf16.msra.mxu0 %v6359
    %7121 = vmatprep.mubr.bf16.mxu0 %v3890
    %7122 = vmatmul.mubr.bf16.gmra.mrb[0].mxu0 %v3889
    %v7123 = vpop.f32.mrb[0].mxu0
    %v7124 = vadd.f32 %v7083, %v7123
    %v7125 = vpop.f32.mrb[0].mxu0
    %v7126 = vadd.f32 %v7085, %v7125
    %v7127 = vpop.f32.mrb[0].mxu0
    %v7128 = vpop.f32.mrb[0].mxu0
    %7129 = vdwg.mxu0
    %7130 = vmatprep.subr.bf16.mxu0 %v6368
    %7131 = vmatpush1.bf16.msra.mxu0 %v6367
    %7132 = vmatprep.subr.bf16.mxu0 %v6376
    %7133 = vmatpush1.bf16.msra.mxu0 %v6375
    %7134 = vmatprep.subr.bf16.mxu0 %v6384
    %7135 = vmatpush1.bf16.msra.mxu0 %v6383
    %7136 = vmatprep.subr.bf16.mxu0 %v6392
    %7137 = vmatpush1.bf16.msra.mxu0 %v6391
    %7138 = vmatprep.subr.bf16.mxu0 %v6400
    %7139 = vmatpush1.bf16.msra.mxu0 %v6399
    %7140 = vmatprep.subr.bf16.mxu0 %v6408
    %7141 = vmatpush1.bf16.msra.mxu0 %v6407
    %7142 = vmatprep.subr.bf16.mxu0 %v6416
    %7143 = vmatpush1.bf16.msra.mxu0 %v6415
    %7144 = vmatprep.subr.bf16.mxu0 %v6424
    %7145 = vmatpush1.bf16.msra.mxu0 %v6423
    %7146 = vmatprep.subr.bf16.mxu0 %v6432
    %7147 = vmatpush1.bf16.msra.mxu0 %v6431
    %7148 = vmatprep.subr.bf16.mxu0 %v6440
    %7149 = vmatpush1.bf16.msra.mxu0 %v6439
    %7150 = vmatprep.subr.bf16.mxu0 %v6448
    %7151 = vmatpush1.bf16.msra.mxu0 %v6447
    %7152 = vmatprep.subr.bf16.mxu0 %v6456
    %7153 = vmatpush1.bf16.msra.mxu0 %v6455
    %7154 = vmatprep.subr.bf16.mxu0 %v6464
    %7155 = vmatpush1.bf16.msra.mxu0 %v6463
    %7156 = vmatprep.subr.bf16.mxu0 %v6472
    %7157 = vmatpush1.bf16.msra.mxu0 %v6471
    %7158 = vmatprep.subr.bf16.mxu0 %v6480
    %7159 = vmatpush1.bf16.msra.mxu0 %v6479
    %7160 = vmatprep.subr.bf16.mxu0 %v6488
    %7161 = vmatpush1.bf16.msra.mxu0 %v6487
    %7162 = vmatprep.mubr.bf16.mxu0 %v3892
    %7163 = vmatmul.mubr.bf16.gmra.mrb[0].mxu0 %v3891
    %v7164 = vpop.f32.mrb[0].mxu0
    %v7165 = vadd.f32 %v7124, %v7164
    %v7166 = vpop.f32.mrb[0].mxu0
    %v7167 = vadd.f32 %v7126, %v7166
    %v7168 = vpop.f32.mrb[0].mxu0
    %v7169 = vpop.f32.mrb[0].mxu0
    %7170 = vdwg.mxu0
    %7171 = vmatprep.subr.bf16.mxu0 %v5986
    %7172 = vmatpush1.bf16.msra.mxu0 %v5985
    %7173 = vmatprep.subr.bf16.mxu0 %v5994
    %7174 = vmatpush1.bf16.msra.mxu0 %v5993
    %7175 = vmatprep.subr.bf16.mxu0 %v6002
    %7176 = vmatpush1.bf16.msra.mxu0 %v6001
    %7177 = vmatprep.subr.bf16.mxu0 %v6010
    %7178 = vmatpush1.bf16.msra.mxu0 %v6009
    %7179 = vmatprep.subr.bf16.mxu0 %v6018
    %7180 = vmatpush1.bf16.msra.mxu0 %v6017
    %7181 = vmatprep.subr.bf16.mxu0 %v6026
    %7182 = vmatpush1.bf16.msra.mxu0 %v6025
    %7183 = vmatprep.subr.bf16.mxu0 %v6034
    %7184 = vmatpush1.bf16.msra.mxu0 %v6033
    %7185 = vmatprep.subr.bf16.mxu0 %v6042
    %7186 = vmatpush1.bf16.msra.mxu0 %v6041
    %7187 = vmatprep.subr.bf16.mxu0 %v6050
    %7188 = vmatpush1.bf16.msra.mxu0 %v6049
    %7189 = vmatprep.subr.bf16.mxu0 %v6058
    %7190 = vmatpush1.bf16.msra.mxu0 %v6057
    %7191 = vmatprep.subr.bf16.mxu0 %v6066
    %7192 = vmatpush1.bf16.msra.mxu0 %v6065
    %7193 = vmatprep.subr.bf16.mxu0 %v6074
    %7194 = vmatpush1.bf16.msra.mxu0 %v6073
    %7195 = vmatprep.subr.bf16.mxu0 %v6082
    %7196 = vmatpush1.bf16.msra.mxu0 %v6081
    %7197 = vmatprep.subr.bf16.mxu0 %v6090
    %7198 = vmatpush1.bf16.msra.mxu0 %v6089
    %7199 = vmatprep.subr.bf16.mxu0 %v6098
    %7200 = vmatpush1.bf16.msra.mxu0 %v6097
    %7201 = vmatprep.subr.bf16.mxu0 %v6106
    %7202 = vmatpush1.bf16.msra.mxu0 %v6105
    %7203 = vmatprep.mubr.bf16.mxu0 %v3886
    %7204 = vmatmul.mubr.bf16.gmra.mrb[0].mxu0 %v3885
    %v7205 = vpop.f32.mrb[0].mxu0
    %v7206 = vadd.f32 %v4418, %v7205
    %v7207 = vpop.f32.mrb[0].mxu0
    %v7208 = vadd.f32 %v4422, %v7207
    %v7209 = vpop.f32.mrb[0].mxu0
    %v7210 = vpop.f32.mrb[0].mxu0
    %7211 = vdwg.mxu0
    %7212 = vmatprep.subr.bf16.mxu0 %v6114
    %7213 = vmatpush1.bf16.msra.mxu0 %v6113
    %7214 = vmatprep.subr.bf16.mxu0 %v6122
    %7215 = vmatpush1.bf16.msra.mxu0 %v6121
    %7216 = vmatprep.subr.bf16.mxu0 %v6130
    %7217 = vmatpush1.bf16.msra.mxu0 %v6129
    %7218 = vmatprep.subr.bf16.mxu0 %v6138
    %7219 = vmatpush1.bf16.msra.mxu0 %v6137
    %7220 = vmatprep.subr.bf16.mxu0 %v6146
    %7221 = vmatpush1.bf16.msra.mxu0 %v6145
    %7222 = vmatprep.subr.bf16.mxu0 %v6154
    %7223 = vmatpush1.bf16.msra.mxu0 %v6153
    %7224 = vmatprep.subr.bf16.mxu0 %v6162
    %7225 = vmatpush1.bf16.msra.mxu0 %v6161
    %7226 = vmatprep.subr.bf16.mxu0 %v6170
    %7227 = vmatpush1.bf16.msra.mxu0 %v6169
    %7228 = vmatprep.subr.bf16.mxu0 %v6178
    %7229 = vmatpush1.bf16.msra.mxu0 %v6177
    %7230 = vmatprep.subr.bf16.mxu0 %v6186
    %7231 = vmatpush1.bf16.msra.mxu0 %v6185
    %7232 = vmatprep.subr.bf16.mxu0 %v6194
    %7233 = vmatpush1.bf16.msra.mxu0 %v6193
    %7234 = vmatprep.subr.bf16.mxu0 %v6202
    %7235 = vmatpush1.bf16.msra.mxu0 %v6201
    %7236 = vmatprep.subr.bf16.mxu0 %v6210
    %7237 = vmatpush1.bf16.msra.mxu0 %v6209
    %7238 = vmatprep.subr.bf16.mxu0 %v6218
    %7239 = vmatpush1.bf16.msra.mxu0 %v6217
    %7240 = vmatprep.subr.bf16.mxu0 %v6226
    %7241 = vmatpush1.bf16.msra.mxu0 %v6225
    %7242 = vmatprep.subr.bf16.mxu0 %v6234
    %7243 = vmatpush1.bf16.msra.mxu0 %v6233
    %7244 = vmatprep.mubr.bf16.mxu0 %v3888
    %7245 = vmatmul.mubr.bf16.gmra.mrb[0].mxu0 %v3887
    %v7246 = vpop.f32.mrb[0].mxu0
    %v7247 = vadd.f32 %v7206, %v7246
    %v7248 = vpop.f32.mrb[0].mxu0
    %v7249 = vadd.f32 %v7208, %v7248
    %v7250 = vpop.f32.mrb[0].mxu0
    %v7251 = vpop.f32.mrb[0].mxu0
    %7252 = vdwg.mxu0
    %7253 = vmatprep.subr.bf16.mxu0 %v6242
    %7254 = vmatpush1.bf16.msra.mxu0 %v6241
    %7255 = vmatprep.subr.bf16.mxu0 %v6250
    %7256 = vmatpush1.bf16.msra.mxu0 %v6249
    %7257 = vmatprep.subr.bf16.mxu0 %v6258
    %7258 = vmatpush1.bf16.msra.mxu0 %v6257
    %7259 = vmatprep.subr.bf16.mxu0 %v6266
    %7260 = vmatpush1.bf16.msra.mxu0 %v6265
    %7261 = vmatprep.subr.bf16.mxu0 %v6274
    %7262 = vmatpush1.bf16.msra.mxu0 %v6273
    %7263 = vmatprep.subr.bf16.mxu0 %v6282
    %7264 = vmatpush1.bf16.msra.mxu0 %v6281
    %7265 = vmatprep.subr.bf16.mxu0 %v6290
    %7266 = vmatpush1.bf16.msra.mxu0 %v6289
    %7267 = vmatprep.subr.bf16.mxu0 %v6298
    %7268 = vmatpush1.bf16.msra.mxu0 %v6297
    %7269 = vmatprep.subr.bf16.mxu0 %v6306
    %7270 = vmatpush1.bf16.msra.mxu0 %v6305
    %7271 = vmatprep.subr.bf16.mxu0 %v6314
    %7272 = vmatpush1.bf16.msra.mxu0 %v6313
    %7273 = vmatprep.subr.bf16.mxu0 %v6322
    %7274 = vmatpush1.bf16.msra.mxu0 %v6321
    %7275 = vmatprep.subr.bf16.mxu0 %v6330
    %7276 = vmatpush1.bf16.msra.mxu0 %v6329
    %7277 = vmatprep.subr.bf16.mxu0 %v6338
    %7278 = vmatpush1.bf16.msra.mxu0 %v6337
    %7279 = vmatprep.subr.bf16.mxu0 %v6346
    %7280 = vmatpush1.bf16.msra.mxu0 %v6345
    %7281 = vmatprep.subr.bf16.mxu0 %v6354
    %7282 = vmatpush1.bf16.msra.mxu0 %v6353
    %7283 = vmatprep.subr.bf16.mxu0 %v6362
    %7284 = vmatpush1.bf16.msra.mxu0 %v6361
    %7285 = vmatprep.mubr.bf16.mxu0 %v3890
    %7286 = vmatmul.mubr.bf16.gmra.mrb[0].mxu0 %v3889
    %v7287 = vpop.f32.mrb[0].mxu0
    %v7288 = vadd.f32 %v7247, %v7287
    %v7289 = vpop.f32.mrb[0].mxu0
    %v7290 = vadd.f32 %v7249, %v7289
    %v7291 = vpop.f32.mrb[0].mxu0
    %v7292 = vpop.f32.mrb[0].mxu0
    %7293 = vdwg.mxu0
    %7294 = vmatprep.subr.bf16.mxu0 %v6370
    %7295 = vmatpush1.bf16.msra.mxu0 %v6369
    %7296 = vmatprep.subr.bf16.mxu0 %v6378
    %7297 = vmatpush1.bf16.msra.mxu0 %v6377
    %7298 = vmatprep.subr.bf16.mxu0 %v6386
    %7299 = vmatpush1.bf16.msra.mxu0 %v6385
    %7300 = vmatprep.subr.bf16.mxu0 %v6394
    %7301 = vmatpush1.bf16.msra.mxu0 %v6393
    %7302 = vmatprep.subr.bf16.mxu0 %v6402
    %7303 = vmatpush1.bf16.msra.mxu0 %v6401
    %7304 = vmatprep.subr.bf16.mxu0 %v6410
    %7305 = vmatpush1.bf16.msra.mxu0 %v6409
    %7306 = vmatprep.subr.bf16.mxu0 %v6418
    %7307 = vmatpush1.bf16.msra.mxu0 %v6417
    %7308 = vmatprep.subr.bf16.mxu0 %v6426
    %7309 = vmatpush1.bf16.msra.mxu0 %v6425
    %7310 = vmatprep.subr.bf16.mxu0 %v6434
    %7311 = vmatpush1.bf16.msra.mxu0 %v6433
    %7312 = vmatprep.subr.bf16.mxu0 %v6442
    %7313 = vmatpush1.bf16.msra.mxu0 %v6441
    %7314 = vmatprep.subr.bf16.mxu0 %v6450
    %7315 = vmatpush1.bf16.msra.mxu0 %v6449
    %7316 = vmatprep.subr.bf16.mxu0 %v6458
    %7317 = vmatpush1.bf16.msra.mxu0 %v6457
    %7318 = vmatprep.subr.bf16.mxu0 %v6466
    %7319 = vmatpush1.bf16.msra.mxu0 %v6465
    %7320 = vmatprep.subr.bf16.mxu0 %v6474
    %7321 = vmatpush1.bf16.msra.mxu0 %v6473
    %7322 = vmatprep.subr.bf16.mxu0 %v6482
    %7323 = vmatpush1.bf16.msra.mxu0 %v6481
    %7324 = vmatprep.subr.bf16.mxu0 %v6490
    %7325 = vmatpush1.bf16.msra.mxu0 %v6489
    %7326 = vmatprep.mubr.bf16.mxu0 %v3892
    %7327 = vmatmul.mubr.bf16.gmra.mrb[0].mxu0 %v3891
    %v7328 = vpop.f32.mrb[0].mxu0
    %v7329 = vadd.f32 %v7288, %v7328
    %v7330 = vpop.f32.mrb[0].mxu0
    %v7331 = vadd.f32 %v7290, %v7330
    %v7332 = vpop.f32.mrb[0].mxu0
    %v7333 = vpop.f32.mrb[0].mxu0
    %7334 = vdwg.mxu0
    %7335 = vmatprep.subr.bf16.mxu0 %v5988
    %7336 = vmatpush1.bf16.msra.mxu0 %v5987
    %7337 = vmatprep.subr.bf16.mxu0 %v5996
    %7338 = vmatpush1.bf16.msra.mxu0 %v5995
    %7339 = vmatprep.subr.bf16.mxu0 %v6004
    %7340 = vmatpush1.bf16.msra.mxu0 %v6003
    %7341 = vmatprep.subr.bf16.mxu0 %v6012
    %7342 = vmatpush1.bf16.msra.mxu0 %v6011
    %7343 = vmatprep.subr.bf16.mxu0 %v6020
    %7344 = vmatpush1.bf16.msra.mxu0 %v6019
    %7345 = vmatprep.subr.bf16.mxu0 %v6028
    %7346 = vmatpush1.bf16.msra.mxu0 %v6027
    %7347 = vmatprep.subr.bf16.mxu0 %v6036
    %7348 = vmatpush1.bf16.msra.mxu0 %v6035
    %7349 = vmatprep.subr.bf16.mxu0 %v6044
    %7350 = vmatpush1.bf16.msra.mxu0 %v6043
    %7351 = vmatprep.subr.bf16.mxu0 %v6052
    %7352 = vmatpush1.bf16.msra.mxu0 %v6051
    %7353 = vmatprep.subr.bf16.mxu0 %v6060
    %7354 = vmatpush1.bf16.msra.mxu0 %v6059
    %7355 = vmatprep.subr.bf16.mxu0 %v6068
    %7356 = vmatpush1.bf16.msra.mxu0 %v6067
    %7357 = vmatprep.subr.bf16.mxu0 %v6076
    %7358 = vmatpush1.bf16.msra.mxu0 %v6075
    %7359 = vmatprep.subr.bf16.mxu0 %v6084
    %7360 = vmatpush1.bf16.msra.mxu0 %v6083
    %7361 = vmatprep.subr.bf16.mxu0 %v6092
    %7362 = vmatpush1.bf16.msra.mxu0 %v6091
    %7363 = vmatprep.subr.bf16.mxu0 %v6100
    %7364 = vmatpush1.bf16.msra.mxu0 %v6099
    %7365 = vmatprep.subr.bf16.mxu0 %v6108
    %7366 = vmatpush1.bf16.msra.mxu0 %v6107
    %7367 = vmatprep.mubr.bf16.mxu0 %v3886
    %7368 = vmatmul.mubr.bf16.gmra.mrb[0].mxu0 %v3885
    %v7369 = vpop.f32.mrb[0].mxu0
    %v7370 = vadd.f32 %v4426, %v7369
    %v7371 = vpop.f32.mrb[0].mxu0
    %v7372 = vadd.f32 %v4430, %v7371
    %v7373 = vpop.f32.mrb[0].mxu0
    %v7374 = vpop.f32.mrb[0].mxu0
    %7375 = vdwg.mxu0
    %7376 = vmatprep.subr.bf16.mxu0 %v6116
    %7377 = vmatpush1.bf16.msra.mxu0 %v6115
    %7378 = vmatprep.subr.bf16.mxu0 %v6124
    %7379 = vmatpush1.bf16.msra.mxu0 %v6123
    %7380 = vmatprep.subr.bf16.mxu0 %v6132
    %7381 = vmatpush1.bf16.msra.mxu0 %v6131
    %7382 = vmatprep.subr.bf16.mxu0 %v6140
    %7383 = vmatpush1.bf16.msra.mxu0 %v6139
    %7384 = vmatprep.subr.bf16.mxu0 %v6148
    %7385 = vmatpush1.bf16.msra.mxu0 %v6147
    %7386 = vmatprep.subr.bf16.mxu0 %v6156
    %7387 = vmatpush1.bf16.msra.mxu0 %v6155
    %7388 = vmatprep.subr.bf16.mxu0 %v6164
    %7389 = vmatpush1.bf16.msra.mxu0 %v6163
    %7390 = vmatprep.subr.bf16.mxu0 %v6172
    %7391 = vmatpush1.bf16.msra.mxu0 %v6171
    %7392 = vmatprep.subr.bf16.mxu0 %v6180
    %7393 = vmatpush1.bf16.msra.mxu0 %v6179
    %7394 = vmatprep.subr.bf16.mxu0 %v6188
    %7395 = vmatpush1.bf16.msra.mxu0 %v6187
    %7396 = vmatprep.subr.bf16.mxu0 %v6196
    %7397 = vmatpush1.bf16.msra.mxu0 %v6195
    %7398 = vmatprep.subr.bf16.mxu0 %v6204
    %7399 = vmatpush1.bf16.msra.mxu0 %v6203
    %7400 = vmatprep.subr.bf16.mxu0 %v6212
    %7401 = vmatpush1.bf16.msra.mxu0 %v6211
    %7402 = vmatprep.subr.bf16.mxu0 %v6220
    %7403 = vmatpush1.bf16.msra.mxu0 %v6219
    %7404 = vmatprep.subr.bf16.mxu0 %v6228
    %7405 = vmatpush1.bf16.msra.mxu0 %v6227
    %7406 = vmatprep.subr.bf16.mxu0 %v6236
    %7407 = vmatpush1.bf16.msra.mxu0 %v6235
    %7408 = vmatprep.mubr.bf16.mxu0 %v3888
    %7409 = vmatmul.mubr.bf16.gmra.mrb[0].mxu0 %v3887
    %v7410 = vpop.f32.mrb[0].mxu0
    %v7411 = vadd.f32 %v7370, %v7410
    %v7412 = vpop.f32.mrb[0].mxu0
    %v7413 = vadd.f32 %v7372, %v7412
    %v7414 = vpop.f32.mrb[0].mxu0
    %v7415 = vpop.f32.mrb[0].mxu0
    %7416 = vdwg.mxu0
    %7417 = vmatprep.subr.bf16.mxu0 %v6244
    %7418 = vmatpush1.bf16.msra.mxu0 %v6243
    %7419 = vmatprep.subr.bf16.mxu0 %v6252
    %7420 = vmatpush1.bf16.msra.mxu0 %v6251
    %7421 = vmatprep.subr.bf16.mxu0 %v6260
    %7422 = vmatpush1.bf16.msra.mxu0 %v6259
    %7423 = vmatprep.subr.bf16.mxu0 %v6268
    %7424 = vmatpush1.bf16.msra.mxu0 %v6267
    %7425 = vmatprep.subr.bf16.mxu0 %v6276
    %7426 = vmatpush1.bf16.msra.mxu0 %v6275
    %7427 = vmatprep.subr.bf16.mxu0 %v6284
    %7428 = vmatpush1.bf16.msra.mxu0 %v6283
    %7429 = vmatprep.subr.bf16.mxu0 %v6292
    %7430 = vmatpush1.bf16.msra.mxu0 %v6291
    %7431 = vmatprep.subr.bf16.mxu0 %v6300
    %7432 = vmatpush1.bf16.msra.mxu0 %v6299
    %7433 = vmatprep.subr.bf16.mxu0 %v6308
    %7434 = vmatpush1.bf16.msra.mxu0 %v6307
    %7435 = vmatprep.subr.bf16.mxu0 %v6316
    %7436 = vmatpush1.bf16.msra.mxu0 %v6315
    %7437 = vmatprep.subr.bf16.mxu0 %v6324
    %7438 = vmatpush1.bf16.msra.mxu0 %v6323
    %7439 = vmatprep.subr.bf16.mxu0 %v6332
    %7440 = vmatpush1.bf16.msra.mxu0 %v6331
    %7441 = vmatprep.subr.bf16.mxu0 %v6340
    %7442 = vmatpush1.bf16.msra.mxu0 %v6339
    %7443 = vmatprep.subr.bf16.mxu0 %v6348
    %7444 = vmatpush1.bf16.msra.mxu0 %v6347
    %7445 = vmatprep.subr.bf16.mxu0 %v6356
    %7446 = vmatpush1.bf16.msra.mxu0 %v6355
    %7447 = vmatprep.subr.bf16.mxu0 %v6364
    %7448 = vmatpush1.bf16.msra.mxu0 %v6363
    %7449 = vmatprep.mubr.bf16.mxu0 %v3890
    %7450 = vmatmul.mubr.bf16.gmra.mrb[0].mxu0 %v3889
    %v7451 = vpop.f32.mrb[0].mxu0
    %v7452 = vadd.f32 %v7411, %v7451
    %v7453 = vpop.f32.mrb[0].mxu0
    %v7454 = vadd.f32 %v7413, %v7453
    %v7455 = vpop.f32.mrb[0].mxu0
    %v7456 = vpop.f32.mrb[0].mxu0
    %7457 = vdwg.mxu0
    %7458 = vmatprep.subr.bf16.mxu0 %v6372
    %7459 = vmatpush1.bf16.msra.mxu0 %v6371
    %7460 = vmatprep.subr.bf16.mxu0 %v6380
    %7461 = vmatpush1.bf16.msra.mxu0 %v6379
    %7462 = vmatprep.subr.bf16.mxu0 %v6388
    %7463 = vmatpush1.bf16.msra.mxu0 %v6387
    %7464 = vmatprep.subr.bf16.mxu0 %v6396
    %7465 = vmatpush1.bf16.msra.mxu0 %v6395
    %7466 = vmatprep.subr.bf16.mxu0 %v6404
    %7467 = vmatpush1.bf16.msra.mxu0 %v6403
    %7468 = vmatprep.subr.bf16.mxu0 %v6412
    %7469 = vmatpush1.bf16.msra.mxu0 %v6411
    %7470 = vmatprep.subr.bf16.mxu0 %v6420
    %7471 = vmatpush1.bf16.msra.mxu0 %v6419
    %7472 = vmatprep.subr.bf16.mxu0 %v6428
    %7473 = vmatpush1.bf16.msra.mxu0 %v6427
    %7474 = vmatprep.subr.bf16.mxu0 %v6436
    %7475 = vmatpush1.bf16.msra.mxu0 %v6435
    %7476 = vmatprep.subr.bf16.mxu0 %v6444
    %7477 = vmatpush1.bf16.msra.mxu0 %v6443
    %7478 = vmatprep.subr.bf16.mxu0 %v6452
    %7479 = vmatpush1.bf16.msra.mxu0 %v6451
    %7480 = vmatprep.subr.bf16.mxu0 %v6460
    %7481 = vmatpush1.bf16.msra.mxu0 %v6459
    %7482 = vmatprep.subr.bf16.mxu0 %v6468
    %7483 = vmatpush1.bf16.msra.mxu0 %v6467
    %7484 = vmatprep.subr.bf16.mxu0 %v6476
    %7485 = vmatpush1.bf16.msra.mxu0 %v6475
    %7486 = vmatprep.subr.bf16.mxu0 %v6484
    %7487 = vmatpush1.bf16.msra.mxu0 %v6483
    %7488 = vmatprep.subr.bf16.mxu0 %v6492
    %7489 = vmatpush1.bf16.msra.mxu0 %v6491
    %7490 = vmatprep.mubr.bf16.mxu0 %v3892
    %7491 = vmatmul.mubr.bf16.gmra.mrb[0].mxu0 %v3891
    %v7492 = vpop.f32.mrb[0].mxu0
    %v7493 = vadd.f32 %v7452, %v7492
    %v7494 = vpop.f32.mrb[0].mxu0
    %v7495 = vadd.f32 %v7454, %v7494
    %v7496 = vpop.f32.mrb[0].mxu0
    %v7497 = vpop.f32.mrb[0].mxu0
    %7498 = vdwg.mxu0
    %7499 = vmatprep.subr.bf16.mxu0 %v5990
    %7500 = vmatpush1.bf16.msra.mxu0 %v5989
    %7501 = vmatprep.subr.bf16.mxu0 %v5998
    %7502 = vmatpush1.bf16.msra.mxu0 %v5997
    %7503 = vmatprep.subr.bf16.mxu0 %v6006
    %7504 = vmatpush1.bf16.msra.mxu0 %v6005
    %7505 = vmatprep.subr.bf16.mxu0 %v6014
    %7506 = vmatpush1.bf16.msra.mxu0 %v6013
    %7507 = vmatprep.subr.bf16.mxu0 %v6022
    %7508 = vmatpush1.bf16.msra.mxu0 %v6021
    %7509 = vmatprep.subr.bf16.mxu0 %v6030
    %7510 = vmatpush1.bf16.msra.mxu0 %v6029
    %7511 = vmatprep.subr.bf16.mxu0 %v6038
    %7512 = vmatpush1.bf16.msra.mxu0 %v6037
    %7513 = vmatprep.subr.bf16.mxu0 %v6046
    %7514 = vmatpush1.bf16.msra.mxu0 %v6045
    %7515 = vmatprep.subr.bf16.mxu0 %v6054
    %7516 = vmatpush1.bf16.msra.mxu0 %v6053
    %7517 = vmatprep.subr.bf16.mxu0 %v6062
    %7518 = vmatpush1.bf16.msra.mxu0 %v6061
    %7519 = vmatprep.subr.bf16.mxu0 %v6070
    %7520 = vmatpush1.bf16.msra.mxu0 %v6069
    %7521 = vmatprep.subr.bf16.mxu0 %v6078
    %7522 = vmatpush1.bf16.msra.mxu0 %v6077
    %7523 = vmatprep.subr.bf16.mxu0 %v6086
    %7524 = vmatpush1.bf16.msra.mxu0 %v6085
    %7525 = vmatprep.subr.bf16.mxu0 %v6094
    %7526 = vmatpush1.bf16.msra.mxu0 %v6093
    %7527 = vmatprep.subr.bf16.mxu0 %v6102
    %7528 = vmatpush1.bf16.msra.mxu0 %v6101
    %7529 = vmatprep.subr.bf16.mxu0 %v6110
    %7530 = vmatpush1.bf16.msra.mxu0 %v6109
    %7531 = vmatprep.mubr.bf16.mxu0 %v3886
    %7532 = vmatmul.mubr.bf16.gmra.mrb[0].mxu0 %v3885
    %v7533 = vpop.f32.mrb[0].mxu0
    %v7534 = vadd.f32 %v4434, %v7533
    %v7535 = vpop.f32.mrb[0].mxu0
    %v7536 = vadd.f32 %v4438, %v7535
    %v7537 = vpop.f32.mrb[0].mxu0
    %v7538 = vpop.f32.mrb[0].mxu0
    %7539 = vdwg.mxu0
    %7540 = vmatprep.subr.bf16.mxu0 %v6118
    %7541 = vmatpush1.bf16.msra.mxu0 %v6117
    %7542 = vmatprep.subr.bf16.mxu0 %v6126
    %7543 = vmatpush1.bf16.msra.mxu0 %v6125
    %7544 = vmatprep.subr.bf16.mxu0 %v6134
    %7545 = vmatpush1.bf16.msra.mxu0 %v6133
    %7546 = vmatprep.subr.bf16.mxu0 %v6142
    %7547 = vmatpush1.bf16.msra.mxu0 %v6141
    %7548 = vmatprep.subr.bf16.mxu0 %v6150
    %7549 = vmatpush1.bf16.msra.mxu0 %v6149
    %7550 = vmatprep.subr.bf16.mxu0 %v6158
    %7551 = vmatpush1.bf16.msra.mxu0 %v6157
    %7552 = vmatprep.subr.bf16.mxu0 %v6166
    %7553 = vmatpush1.bf16.msra.mxu0 %v6165
    %7554 = vmatprep.subr.bf16.mxu0 %v6174
    %7555 = vmatpush1.bf16.msra.mxu0 %v6173
    %7556 = vmatprep.subr.bf16.mxu0 %v6182
    %7557 = vmatpush1.bf16.msra.mxu0 %v6181
    %7558 = vmatprep.subr.bf16.mxu0 %v6190
    %7559 = vmatpush1.bf16.msra.mxu0 %v6189
    %7560 = vmatprep.subr.bf16.mxu0 %v6198
    %7561 = vmatpush1.bf16.msra.mxu0 %v6197
    %7562 = vmatprep.subr.bf16.mxu0 %v6206
    %7563 = vmatpush1.bf16.msra.mxu0 %v6205
    %7564 = vmatprep.subr.bf16.mxu0 %v6214
    %7565 = vmatpush1.bf16.msra.mxu0 %v6213
    %7566 = vmatprep.subr.bf16.mxu0 %v6222
    %7567 = vmatpush1.bf16.msra.mxu0 %v6221
    %7568 = vmatprep.subr.bf16.mxu0 %v6230
    %7569 = vmatpush1.bf16.msra.mxu0 %v6229
    %7570 = vmatprep.subr.bf16.mxu0 %v6238
    %7571 = vmatpush1.bf16.msra.mxu0 %v6237
    %7572 = vmatprep.mubr.bf16.mxu0 %v3888
    %7573 = vmatmul.mubr.bf16.gmra.mrb[0].mxu0 %v3887
    %v7574 = vpop.f32.mrb[0].mxu0
    %v7575 = vadd.f32 %v7534, %v7574
    %v7576 = vpop.f32.mrb[0].mxu0
    %v7577 = vadd.f32 %v7536, %v7576
    %v7578 = vpop.f32.mrb[0].mxu0
    %v7579 = vpop.f32.mrb[0].mxu0
    %7580 = vdwg.mxu0
    %7581 = vmatprep.subr.bf16.mxu0 %v6246
    %7582 = vmatpush1.bf16.msra.mxu0 %v6245
    %7583 = vmatprep.subr.bf16.mxu0 %v6254
    %7584 = vmatpush1.bf16.msra.mxu0 %v6253
    %7585 = vmatprep.subr.bf16.mxu0 %v6262
    %7586 = vmatpush1.bf16.msra.mxu0 %v6261
    %7587 = vmatprep.subr.bf16.mxu0 %v6270
    %7588 = vmatpush1.bf16.msra.mxu0 %v6269
    %7589 = vmatprep.subr.bf16.mxu0 %v6278
    %7590 = vmatpush1.bf16.msra.mxu0 %v6277
    %7591 = vmatprep.subr.bf16.mxu0 %v6286
    %7592 = vmatpush1.bf16.msra.mxu0 %v6285
    %7593 = vmatprep.subr.bf16.mxu0 %v6294
    %7594 = vmatpush1.bf16.msra.mxu0 %v6293
    %7595 = vmatprep.subr.bf16.mxu0 %v6302
    %7596 = vmatpush1.bf16.msra.mxu0 %v6301
    %7597 = vmatprep.subr.bf16.mxu0 %v6310
    %7598 = vmatpush1.bf16.msra.mxu0 %v6309
    %7599 = vmatprep.subr.bf16.mxu0 %v6318
    %7600 = vmatpush1.bf16.msra.mxu0 %v6317
    %7601 = vmatprep.subr.bf16.mxu0 %v6326
    %7602 = vmatpush1.bf16.msra.mxu0 %v6325
    %7603 = vmatprep.subr.bf16.mxu0 %v6334
    %7604 = vmatpush1.bf16.msra.mxu0 %v6333
    %7605 = vmatprep.subr.bf16.mxu0 %v6342
    %7606 = vmatpush1.bf16.msra.mxu0 %v6341
    %7607 = vmatprep.subr.bf16.mxu0 %v6350
    %7608 = vmatpush1.bf16.msra.mxu0 %v6349
    %7609 = vmatprep.subr.bf16.mxu0 %v6358
    %7610 = vmatpush1.bf16.msra.mxu0 %v6357
    %7611 = vmatprep.subr.bf16.mxu0 %v6366
    %7612 = vmatpush1.bf16.msra.mxu0 %v6365
    %7613 = vmatprep.mubr.bf16.mxu0 %v3890
    %7614 = vmatmul.mubr.bf16.gmra.mrb[0].mxu0 %v3889
    %v7615 = vpop.f32.mrb[0].mxu0
    %v7616 = vadd.f32 %v7575, %v7615
    %v7617 = vpop.f32.mrb[0].mxu0
    %v7618 = vadd.f32 %v7577, %v7617
    %v7619 = vpop.f32.mrb[0].mxu0
    %v7620 = vpop.f32.mrb[0].mxu0
    %7621 = vdwg.mxu0
    %7622 = vmatprep.subr.bf16.mxu0 %v6374
    %7623 = vmatpush1.bf16.msra.mxu0 %v6373
    %7624 = vmatprep.subr.bf16.mxu0 %v6382
    %7625 = vmatpush1.bf16.msra.mxu0 %v6381
    %7626 = vmatprep.subr.bf16.mxu0 %v6390
    %7627 = vmatpush1.bf16.msra.mxu0 %v6389
    %7628 = vmatprep.subr.bf16.mxu0 %v6398
    %7629 = vmatpush1.bf16.msra.mxu0 %v6397
    %7630 = vmatprep.subr.bf16.mxu0 %v6406
    %7631 = vmatpush1.bf16.msra.mxu0 %v6405
    %7632 = vmatprep.subr.bf16.mxu0 %v6414
    %7633 = vmatpush1.bf16.msra.mxu0 %v6413
    %7634 = vmatprep.subr.bf16.mxu0 %v6422
    %7635 = vmatpush1.bf16.msra.mxu0 %v6421
    %7636 = vmatprep.subr.bf16.mxu0 %v6430
    %7637 = vmatpush1.bf16.msra.mxu0 %v6429
    %7638 = vmatprep.subr.bf16.mxu0 %v6438
    %7639 = vmatpush1.bf16.msra.mxu0 %v6437
    %7640 = vmatprep.subr.bf16.mxu0 %v6446
    %7641 = vmatpush1.bf16.msra.mxu0 %v6445
    %7642 = vmatprep.subr.bf16.mxu0 %v6454
    %7643 = vmatpush1.bf16.msra.mxu0 %v6453
    %7644 = vmatprep.subr.bf16.mxu0 %v6462
    %7645 = vmatpush1.bf16.msra.mxu0 %v6461
    %7646 = vmatprep.subr.bf16.mxu0 %v6470
    %7647 = vmatpush1.bf16.msra.mxu0 %v6469
    %7648 = vmatprep.subr.bf16.mxu0 %v6478
    %7649 = vmatpush1.bf16.msra.mxu0 %v6477
    %7650 = vmatprep.subr.bf16.mxu0 %v6486
    %7651 = vmatpush1.bf16.msra.mxu0 %v6485
    %7652 = vmatprep.subr.bf16.mxu0 %v6494
    %7653 = vmatpush1.bf16.msra.mxu0 %v6493
    %7654 = vmatprep.mubr.bf16.mxu0 %v3892
    %7655 = vmatmul.mubr.bf16.gmra.mrb[0].mxu0 %v3891
    %v7656 = vpop.f32.mrb[0].mxu0
    %v7657 = vadd.f32 %v7616, %v7656
    %v7658 = vpop.f32.mrb[0].mxu0
    %v7659 = vadd.f32 %v7618, %v7658
    %v7660 = vpop.f32.mrb[0].mxu0
    %v7661 = vpop.f32.mrb[0].mxu0
    %7662 = vdwg.mxu0
    %v7663 = vmax.f32 %v7165, 0.0
    %v7664 = vmax.f32 %v7167, 0.0
    %v7665 = vmax.f32 %v7329, 0.0
    %v7666 = vmax.f32 %v7331, 0.0
    %v7667 = vmax.f32 %v7493, 0.0
    %v7668 = vmax.f32 %v7495, 0.0
    %v7669 = vmax.f32 %v7657, 0.0
    %v7670 = vmax.f32 %v7659, 0.0
    %v7671 = vmul.f32 %v7663, %v7663
    %v7672 = vmul.f32 %v7664, %v7664
    %v7673 = vmul.f32 %v7665, %v7665
    %v7674 = vmul.f32 %v7666, %v7666
    %v7675 = vmul.f32 %v7667, %v7667
    %v7676 = vmul.f32 %v7668, %v7668
    %v7677 = vmul.f32 %v7669, %v7669
    %v7678 = vmul.f32 %v7670, %v7670
    %7679 = vst [vmem:[#allocation11] sm:$0xff] %v7671
    %7680 = vst [vmem:[#allocation11 + $0x8] sm:$0xff] %v7672
    %7681 = vst [vmem:[#allocation11 + $0x10] sm:$0xff] %v7673
    %7682 = vst [vmem:[#allocation11 + $0x18] sm:$0xff] %v7674
    %7683 = vst [vmem:[#allocation11 + $0x20] sm:$0xff] %v7675
    %7684 = vst [vmem:[#allocation11 + $0x28] sm:$0xff] %v7676
    %7685 = vst [vmem:[#allocation11 + $0x30] sm:$0xff] %v7677
    %7686 = vst [vmem:[#allocation11 + $0x38] sm:$0xff] %v7678
    // Predicated region
    $region42: #{tpu_custom_call.1} parent=1 // pred_check
      _
    $region43: #{tpu_custom_call.1} parent=1 // pred_check_branch
      %7688 = sbr.rel (0) target = $region45
    $region44: #{tpu_custom_call.1} parent=1 // pred_region
      %s7690 = ssub.s32 1024, 1024
      %7691 = vsyncadd [#allocation4], %s7690
      %s7693 = sshll.u32 [#allocation11], 4
      %s7694 = int_to_ptr.vmem [resolvable:$true] %s7693
      %7696 = dma.vmem_to_hbm [thread:$0]  %s7694, 1024, %s5, [#allocation4]
    $region45: #{tpu_custom_call.1} parent=1 // pred_fallthru
      _
    // Predicated region
    $region46: #{tpu_custom_call.1} parent=1 // pred_check
      _
    $region47: #{tpu_custom_call.1} parent=1 // pred_check_branch
      %7698 = sbr.rel (0) target = $region49
    $region48: #{tpu_custom_call.1} parent=1 // pred_region
      %7699 = dma.done [#allocation4], 1024
    $region49: #{tpu_custom_call.1} parent=1 // pred_fallthru
      _
    %7700 = vsyncpa [#allocation3], 1
    %7701 = vsyncpa [#allocation6], 1
    %7702 = vsyncpa [#allocation9], 1
    %7703 = vsyncpa [#allocation4], 1

</llo_original>
